<compile_context>
chip_gen: v5e
topology: v5e:2x2
jax: 0.10.0
libtpu: 0.0.40
codegen_flags: <defaults>
</compile_context>

<pallas_src>
import jax
import jax.numpy as jnp
import numpy as np
from jax.experimental import pallas as pl
from jax.experimental.pallas import tpu as pltpu


def _round_up(x, m):
    return (x + m - 1) // m * m


def _make_decoder_kernel(num_layers, steps_per_block, total_steps,
                         batch_pad, vocab_pad, vocab_real):
    NL, T, L, B, Vp, Vr = (num_layers, steps_per_block, total_steps,
                           batch_pad, vocab_pad, vocab_real)

    def kernel(tf_ref, tok_ref, e_ref, et_ref, wih_ref, whh_ref, b_ref, h0_ref,
               out_ref, h_scr, feed_scr):
        i = pl.program_id(0)

        @pl.when(i == 0)
        def _():
            h_scr[...] = h0_ref[...]
            feed_scr[...] = jnp.zeros_like(feed_scr)

        col = jax.lax.broadcasted_iota(jnp.int32, (B, Vp), 1)
        vocab_valid = col < Vr          # mask out padded vocab columns for argmax

        for t in range(T):              # T decode steps per grid iteration
            g = i * T + t               # global decode step

            # teacher-forced (or step-0) input: gather embedding rows by token id
            use_tf = tf_ref[g] == 1

            @pl.when(use_tf)
            def _():
                base = g * B
                for b in range(B):
                    tok = tok_ref[base + b]
                    feed_scr[pl.ds(b, 1), :] = e_ref[pl.ds(tok, 1), :]

            # feed_scr now holds the embedded input for this step: either the
            # gathered teacher-forced rows (above) or the argmax-feedback
            # embedding produced at the end of the previous step.
            x_emb = feed_scr[...]                              # (B, H) f32

            # multi-layer vanilla RNN cell: h = tanh(x W_ih^T + h W_hh^T + b)
            inp = x_emb
            for l in range(NL):
                inp_b = inp.astype(jnp.bfloat16)
                h_b = h_scr[l].astype(jnp.bfloat16)
                pre = (jnp.dot(inp_b, wih_ref[l],
                               preferred_element_type=jnp.float32)
                       + jnp.dot(h_b, whh_ref[l],
                                 preferred_element_type=jnp.float32)
                       + b_ref[l])
                h_new = jnp.tanh(pre)                          # f32 activations
                h_scr[l] = h_new
                inp = h_new

            # tied-embedding logits: h_top @ E^T (E^T pre-transposed, bf16)
            logits = jnp.dot(inp.astype(jnp.bfloat16), et_ref[...],
                             preferred_element_type=jnp.float32)   # (B, Vp)
            out_ref[:, pl.ds(t, 1), :] = logits[:, None, :]

            # If (and only if) the NEXT step runs on model feedback, compute
            # its embedded input now while the logits are still live:
            # first-max argmax (PyTorch tie-break) + one-hot @ E row select.
            nxt = jnp.minimum(g + 1, L - 1)
            need_fb = jnp.logical_and(g + 1 < L, tf_ref[nxt] == 0)

            @pl.when(need_fb)
            def _():
                masked = jnp.where(vocab_valid, logits, -1e30)
                m = jnp.max(masked, axis=-1, keepdims=True)
                first = jnp.min(jnp.where(masked == m, col, Vp),
                                axis=-1, keepdims=True)
                onehot = (col == first).astype(jnp.float32)
                feed_scr[...] = jnp.dot(onehot, e_ref[...],
                                        preferred_element_type=jnp.float32)

    return kernel


def decoder_rnn_forward(x_tok, h0, target, tf_flags,
                        emb_w, w_ih, w_hh, b_ih, b_hh, *, steps_per_block=8):
    """x_tok:(B,1) int32, h0:(NL,B,H) f32, target:(B,L) int32, tf_flags:(L,) int32,
    emb_w:(V,H), w_ih/w_hh:(NL,H,H), b_ih/b_hh:(NL,H).  Returns (B,L,V) f32."""
    NL, B, H = h0.shape
    V = emb_w.shape[0]
    L = target.shape[1]

    T = min(steps_per_block, L)
    assert L % T == 0 and (T == L or T % 8 == 0), \
        "steps_per_block must tile L and be sublane-aligned (multiple of 8)"

    Bp = _round_up(max(B, 8), 8)        # sublane-pad the batch
    Vp = _round_up(V, 128)              # lane-pad the vocab

    # token consumed at each step when not running on model feedback
    # (step 0 always uses x; steps i>=1 use target[:, i])
    toks = jnp.concatenate([x_tok[:, 0:1], target[:, 1:]], axis=1)      # (B, L)
    toks = jnp.transpose(toks, (1, 0))                                  # (L, B)
    toks = jnp.pad(toks, ((0, 0), (0, Bp - B))).astype(jnp.int32)
    toks = toks.reshape(L * Bp)                                         # SMEM, 1-D

    tf = tf_flags.astype(jnp.int32).at[0].set(1)    # step 0 always consumes x

    e_f32 = jnp.pad(emb_w, ((0, Vp - V), (0, 0))).astype(jnp.float32)   # (Vp,H) gather table
    e_t = jnp.transpose(e_f32).astype(jnp.bfloat16)                     # (H,Vp) logits weights
    wih_t = jnp.transpose(w_ih, (0, 2, 1)).astype(jnp.bfloat16)         # (NL,H,H)
    whh_t = jnp.transpose(w_hh, (0, 2, 1)).astype(jnp.bfloat16)
    bias = (b_ih + b_hh).reshape(NL, 1, H).astype(jnp.float32)          # combined bias
    h0p = jnp.pad(h0, ((0, 0), (0, Bp - B), (0, 0))).astype(jnp.float32)

    c2 = lambda i, tf_r, tok_r: (0, 0)
    c3 = lambda i, tf_r, tok_r: (0, 0, 0)

    # NOTE: all in_specs below are grid-invariant.  At realistic V/H they should
    # be single-buffered (pipeline_mode=pl.Buffered(1)) to halve their VMEM
    # footprint, and on v7x (64 MiB VMEM) a large embedding table should stay
    # in pl.ANY with the logits projection tiled over V.  On v7x one can also
    # add a "parallel" batch grid axis to use the second TensorCore.
    grid_spec = pltpu.PrefetchScalarGridSpec(
        num_scalar_prefetch=2,          # tf flags + token ids live in SMEM
        grid=(L // T,),
        in_specs=[
            pl.BlockSpec((Vp, H), c2),      # E   (f32: row gather + feedback one-hot)
            pl.BlockSpec((H, Vp), c2),      # E^T (bf16: logits projection)
            pl.BlockSpec((NL, H, H), c3),   # W_ih^T (bf16)
            pl.BlockSpec((NL, H, H), c3),   # W_hh^T (bf16)
            pl.BlockSpec((NL, 1, H), c3),   # b_ih + b_hh (f32)
            pl.BlockSpec((NL, Bp, H), c3),  # h0 (f32)
        ],
        out_specs=pl.BlockSpec((Bp, T, Vp), lambda i, tf_r, tok_r: (0, i, 0)),
        scratch_shapes=[pltpu.VMEM((NL, Bp, H), jnp.float32),   # carried hidden state
                        pltpu.VMEM((Bp, H), jnp.float32)],      # carried feedback embedding
    )

    out = pl.pallas_call(
        _make_decoder_kernel(NL, T, L, Bp, Vp, V),
        out_shape=jax.ShapeDtypeStruct((Bp, L, Vp), jnp.float32),   # batch-first
        grid_spec=grid_spec,
        compiler_params=pltpu.CompilerParams(
            dimension_semantics=("arbitrary",)),                    # sequential recurrence
    )(tf, toks, e_f32, e_t, wih_t, whh_t, bias, h0p)

    return out[:B, :, :V]               # strip batch / vocab padding


def decoder_rnn_reference(x_tok, h0, target, tf_flags,
                          emb_w, w_ih, w_hh, b_ih, b_hh):
    """Pure-JAX reference mirroring the PyTorch forward (dropout = identity).

    Matmul inputs are rounded to bf16 with f32 accumulation to match the
    kernel's bf16-weight / bf16-MXU-input, f32-accumulate precision."""
    def bdot(a, b):
        a = a.astype(jnp.bfloat16).astype(jnp.float32)
        b = b.astype(jnp.bfloat16).astype(jnp.float32)
        return jnp.dot(a, b, precision=jax.lax.Precision.HIGHEST)

    NL, B, H = h0.shape
    L = target.shape[1]
    h = [h0[l] for l in range(NL)]
    prev_logits = None
    logits_list = []
    for i in range(L):
        if i == 0:
            tok = x_tok[:, 0]
        elif int(tf_flags[i]) == 1:
            tok = target[:, i]
        else:
            tok = jnp.argmax(prev_logits, axis=-1)
        inp = emb_w[tok]                                   # (B, H)
        for l in range(NL):
            pre = bdot(inp, w_ih[l].T) + b_ih[l] + bdot(h[l], w_hh[l].T) + b_hh[l]
            h[l] = jnp.tanh(pre)
            inp = h[l]
        logits = bdot(inp, emb_w.T)                        # (B, V)
        prev_logits = logits
        logits_list.append(logits)
    return jnp.stack(logits_list, axis=1)                  # (B, L, V)


if __name__ == "__main__":
    B, H, V, L, NL = 2, 32, 64, 16, 2
    tf_ratio = 0.6

    key = jax.random.PRNGKey(0)
    (k_emb, k_wih, k_whh, k_bih, k_bhh,
     k_x, k_h, k_tgt, k_tf) = jax.random.split(key, 9)

    bound = 1.0 / (H ** 0.5)

    def q(x):
        # pre-round matmul weights to bf16 so the kernel (bf16 on-chip storage)
        # and the f32 reference see identical effective weight values
        return x.astype(jnp.bfloat16).astype(jnp.float32)

    emb_w = q(jax.random.normal(k_emb, (V, H), jnp.float32) * 0.1)
    w_ih = q(jax.random.uniform(k_wih, (NL, H, H), jnp.float32, -bound, bound))
    w_hh = q(jax.random.uniform(k_whh, (NL, H, H), jnp.float32, -bound, bound))
    b_ih = jax.random.uniform(k_bih, (NL, H), jnp.float32, -bound, bound)
    b_hh = jax.random.uniform(k_bhh, (NL, H), jnp.float32, -bound, bound)

    x_tok = jax.random.randint(k_x, (B, 1), 0, V, jnp.int32)
    h0 = jax.random.normal(k_h, (NL, B, H), jnp.float32) * 0.1
    target = jax.random.randint(k_tgt, (B, L), 0, V, jnp.int32)
    # deterministic teacher-forcing coin flips (stand-in for python random())
    tf_flags = (jax.random.uniform(k_tf, (L,)) < tf_ratio).astype(jnp.int32)

    out = decoder_rnn_forward(x_tok, h0, target, tf_flags,
                              emb_w, w_ih, w_hh, b_ih, b_hh, steps_per_block=8)
    out = jax.block_until_ready(out)

    ref = decoder_rnn_reference(x_tok, h0, target, tf_flags,
                                emb_w, w_ih, w_hh, b_ih, b_hh)
    np.testing.assert_allclose(np.asarray(out), np.asarray(ref),
                               atol=2e-3, rtol=2e-3)

    print("KERNEL_OK")
</pallas_src>

<mosaic_0001>
module attributes {stable_mosaic.version = 11 : i64} {
  func.func @kernel(%arg0: i32, %arg1: memref<16xi32, #tpu.memory_space<smem>>, %arg2: memref<128xi32, #tpu.memory_space<smem>>, %arg3: memref<128x32xf32, #tpu.memory_space<vmem>>, %arg4: memref<32x128xbf16, #tpu.memory_space<vmem>>, %arg5: memref<2x32x32xbf16, #tpu.memory_space<vmem>>, %arg6: memref<2x32x32xbf16, #tpu.memory_space<vmem>>, %arg7: memref<2x1x32xf32, #tpu.memory_space<vmem>>, %arg8: memref<2x8x32xf32, #tpu.memory_space<vmem>>, %arg9: memref<8x8x128xf32, #tpu.memory_space<vmem>>, %arg10: memref<2x8x32xf32, #tpu.memory_space<vmem>>, %arg11: memref<8x32xf32, #tpu.memory_space<vmem>>) attributes {dimension_semantics = [#tpu.dimension_semantics<arbitrary>], iteration_bounds = array<i64: 2>, scalar_prefetch = 2 : i64, scratch_operands = 2 : i64, tpu.core_type = #tpu.core_type<tc>, window_params = [{pipeline_mode = #tpu.pipeline_mode<synchronous>, transform_indices = @transform_0, window_bounds = array<i64: 128, 32>}, {pipeline_mode = #tpu.pipeline_mode<synchronous>, transform_indices = @transform_1, window_bounds = array<i64: 32, 128>}, {pipeline_mode = #tpu.pipeline_mode<synchronous>, transform_indices = @transform_2, window_bounds = array<i64: 2, 32, 32>}, {pipeline_mode = #tpu.pipeline_mode<synchronous>, transform_indices = @transform_3, window_bounds = array<i64: 2, 32, 32>}, {pipeline_mode = #tpu.pipeline_mode<synchronous>, transform_indices = @transform_4, window_bounds = array<i64: 2, 1, 32>}, {pipeline_mode = #tpu.pipeline_mode<synchronous>, transform_indices = @transform_5, window_bounds = array<i64: 2, 8, 32>}, {transform_indices = @transform_6, window_bounds = array<i64: 8, 8, 128>}]} {
    %c0_i32 = arith.constant 0 : i32
    %0 = arith.cmpi eq, %arg0, %c0_i32 : i32
    %1 = arith.extui %0 : i1 to i32
    %c0_i32_0 = arith.constant 0 : i32
    %2 = arith.cmpi ne, %1, %c0_i32_0 : i32
    scf.if %2 {
      %c0_398 = arith.constant 0 : index
      %c0_399 = arith.constant 0 : index
      %c0_400 = arith.constant 0 : index
      %494 = vector.load %arg8[%c0_398, %c0_399, %c0_400] : memref<2x8x32xf32, #tpu.memory_space<vmem>>, vector<2x8x32xf32>
      %c0_401 = arith.constant 0 : index
      %c0_402 = arith.constant 0 : index
      %c0_403 = arith.constant 0 : index
      %495 = vector.load %arg10[%c0_401, %c0_402, %c0_403] : memref<2x8x32xf32, #tpu.memory_space<vmem>>, vector<2x8x32xf32>
      tpu.vector_store %arg10[%c0_401, %c0_402, %c0_403], %494 {strides = array<i32>} : memref<2x8x32xf32, #tpu.memory_space<vmem>>, vector<2x8x32xf32>,
      %cst_404 = arith.constant 0.000000e+00 : f32
      %496 = vector.broadcast %cst_404 : f32 to vector<8x32xf32>
      %c0_405 = arith.constant 0 : index
      %c0_406 = arith.constant 0 : index
      %497 = vector.load %arg11[%c0_405, %c0_406] : memref<8x32xf32, #tpu.memory_space<vmem>>, vector<8x32xf32>
      tpu.vector_store %arg11[%c0_405, %c0_406], %496 {strides = array<i32>} : memref<8x32xf32, #tpu.memory_space<vmem>>, vector<8x32xf32>,
    } else {
    }
    %3 = tpu.iota {dimensions = array<i32: 1>} : vector<8x128xi32>
    %c64_i32 = arith.constant 64 : i32
    %4 = vector.broadcast %c64_i32 : i32 to vector<8x128xi32>
    %5 = arith.cmpi slt, %3, %4 : vector<8x128xi32>
    %c8_i32 = arith.constant 8 : i32
    %6 = arith.muli %arg0, %c8_i32 : i32
    %c0_i32_1 = arith.constant 0 : i32
    %7 = arith.addi %6, %c0_i32_1 : i32
    %8 = arith.index_cast %7 : i32 to index
    %9 = memref.load %arg1[%8] : memref<16xi32, #tpu.memory_space<smem>>
    %c1_i32 = arith.constant 1 : i32
    %10 = arith.cmpi eq, %9, %c1_i32 : i32
    %11 = arith.extui %10 : i1 to i32
    %c0_i32_2 = arith.constant 0 : i32
    %12 = arith.cmpi ne, %11, %c0_i32_2 : i32
    scf.if %12 {
      %c8_i32_398 = arith.constant 8 : i32
      %494 = arith.muli %7, %c8_i32_398 : i32
      %c0_i32_399 = arith.constant 0 : i32
      %495 = arith.addi %494, %c0_i32_399 : i32
      %496 = arith.index_cast %495 : i32 to index
      %497 = memref.load %arg2[%496] : memref<128xi32, #tpu.memory_space<smem>>
      %498 = arith.index_cast %497 : i32 to index
      %c0_400 = arith.constant 0 : index
      %499 = vector.load %arg3[%498, %c0_400] : memref<128x32xf32, #tpu.memory_space<vmem>>, vector<1x32xf32>
      %c0_401 = arith.constant 0 : index
      %c0_402 = arith.constant 0 : index
      %500 = vector.load %arg11[%c0_401, %c0_402] : memref<8x32xf32, #tpu.memory_space<vmem>>, vector<1x32xf32>
      tpu.vector_store %arg11[%c0_401, %c0_402], %499 {strides = array<i32>} : memref<8x32xf32, #tpu.memory_space<vmem>>, vector<1x32xf32>,
      %c1_i32_403 = arith.constant 1 : i32
      %501 = arith.addi %494, %c1_i32_403 : i32
      %502 = arith.index_cast %501 : i32 to index
      %503 = memref.load %arg2[%502] : memref<128xi32, #tpu.memory_space<smem>>
      %504 = arith.index_cast %503 : i32 to index
      %c0_404 = arith.constant 0 : index
      %505 = vector.load %arg3[%504, %c0_404] : memref<128x32xf32, #tpu.memory_space<vmem>>, vector<1x32xf32>
      %c1_405 = arith.constant 1 : index
      %c0_406 = arith.constant 0 : index
      %506 = vector.load %arg11[%c1_405, %c0_406] : memref<8x32xf32, #tpu.memory_space<vmem>>, vector<1x32xf32>
      tpu.vector_store %arg11[%c1_405, %c0_406], %505 {strides = array<i32>} : memref<8x32xf32, #tpu.memory_space<vmem>>, vector<1x32xf32>,
      %c2_i32_407 = arith.constant 2 : i32
      %507 = arith.addi %494, %c2_i32_407 : i32
      %508 = arith.index_cast %507 : i32 to index
      %509 = memref.load %arg2[%508] : memref<128xi32, #tpu.memory_space<smem>>
      %510 = arith.index_cast %509 : i32 to index
      %c0_408 = arith.constant 0 : index
      %511 = vector.load %arg3[%510, %c0_408] : memref<128x32xf32, #tpu.memory_space<vmem>>, vector<1x32xf32>
      %c2_409 = arith.constant 2 : index
      %c0_410 = arith.constant 0 : index
      %512 = vector.load %arg11[%c2_409, %c0_410] : memref<8x32xf32, #tpu.memory_space<vmem>>, vector<1x32xf32>
      tpu.vector_store %arg11[%c2_409, %c0_410], %511 {strides = array<i32>} : memref<8x32xf32, #tpu.memory_space<vmem>>, vector<1x32xf32>,
      %c3_i32_411 = arith.constant 3 : i32
      %513 = arith.addi %494, %c3_i32_411 : i32
      %514 = arith.index_cast %513 : i32 to index
      %515 = memref.load %arg2[%514] : memref<128xi32, #tpu.memory_space<smem>>
      %516 = arith.index_cast %515 : i32 to index
      %c0_412 = arith.constant 0 : index
      %517 = vector.load %arg3[%516, %c0_412] : memref<128x32xf32, #tpu.memory_space<vmem>>, vector<1x32xf32>
      %c3_413 = arith.constant 3 : index
      %c0_414 = arith.constant 0 : index
      %518 = vector.load %arg11[%c3_413, %c0_414] : memref<8x32xf32, #tpu.memory_space<vmem>>, vector<1x32xf32>
      tpu.vector_store %arg11[%c3_413, %c0_414], %517 {strides = array<i32>} : memref<8x32xf32, #tpu.memory_space<vmem>>, vector<1x32xf32>,
      %c4_i32_415 = arith.constant 4 : i32
      %519 = arith.addi %494, %c4_i32_415 : i32
      %520 = arith.index_cast %519 : i32 to index
      %521 = memref.load %arg2[%520] : memref<128xi32, #tpu.memory_space<smem>>
      %522 = arith.index_cast %521 : i32 to index
      %c0_416 = arith.constant 0 : index
      %523 = vector.load %arg3[%522, %c0_416] : memref<128x32xf32, #tpu.memory_space<vmem>>, vector<1x32xf32>
      %c4_417 = arith.constant 4 : index
      %c0_418 = arith.constant 0 : index
      %524 = vector.load %arg11[%c4_417, %c0_418] : memref<8x32xf32, #tpu.memory_space<vmem>>, vector<1x32xf32>
      tpu.vector_store %arg11[%c4_417, %c0_418], %523 {strides = array<i32>} : memref<8x32xf32, #tpu.memory_space<vmem>>, vector<1x32xf32>,
      %c5_i32_419 = arith.constant 5 : i32
      %525 = arith.addi %494, %c5_i32_419 : i32
      %526 = arith.index_cast %525 : i32 to index
      %527 = memref.load %arg2[%526] : memref<128xi32, #tpu.memory_space<smem>>
      %528 = arith.index_cast %527 : i32 to index
      %c0_420 = arith.constant 0 : index
      %529 = vector.load %arg3[%528, %c0_420] : memref<128x32xf32, #tpu.memory_space<vmem>>, vector<1x32xf32>
      %c5_421 = arith.constant 5 : index
      %c0_422 = arith.constant 0 : index
      %530 = vector.load %arg11[%c5_421, %c0_422] : memref<8x32xf32, #tpu.memory_space<vmem>>, vector<1x32xf32>
      tpu.vector_store %arg11[%c5_421, %c0_422], %529 {strides = array<i32>} : memref<8x32xf32, #tpu.memory_space<vmem>>, vector<1x32xf32>,
      %c6_i32_423 = arith.constant 6 : i32
      %531 = arith.addi %494, %c6_i32_423 : i32
      %532 = arith.index_cast %531 : i32 to index
      %533 = memref.load %arg2[%532] : memref<128xi32, #tpu.memory_space<smem>>
      %534 = arith.index_cast %533 : i32 to index
      %c0_424 = arith.constant 0 : index
      %535 = vector.load %arg3[%534, %c0_424] : memref<128x32xf32, #tpu.memory_space<vmem>>, vector<1x32xf32>
      %c6_425 = arith.constant 6 : index
      %c0_426 = arith.constant 0 : index
      %536 = vector.load %arg11[%c6_425, %c0_426] : memref<8x32xf32, #tpu.memory_space<vmem>>, vector<1x32xf32>
      tpu.vector_store %arg11[%c6_425, %c0_426], %535 {strides = array<i32>} : memref<8x32xf32, #tpu.memory_space<vmem>>, vector<1x32xf32>,
      %c7_i32_427 = arith.constant 7 : i32
      %537 = arith.addi %494, %c7_i32_427 : i32
      %538 = arith.index_cast %537 : i32 to index
      %539 = memref.load %arg2[%538] : memref<128xi32, #tpu.memory_space<smem>>
      %540 = arith.index_cast %539 : i32 to index
      %c0_428 = arith.constant 0 : index
      %541 = vector.load %arg3[%540, %c0_428] : memref<128x32xf32, #tpu.memory_space<vmem>>, vector<1x32xf32>
      %c7_429 = arith.constant 7 : index
      %c0_430 = arith.constant 0 : index
      %542 = vector.load %arg11[%c7_429, %c0_430] : memref<8x32xf32, #tpu.memory_space<vmem>>, vector<1x32xf32>
      tpu.vector_store %arg11[%c7_429, %c0_430], %541 {strides = array<i32>} : memref<8x32xf32, #tpu.memory_space<vmem>>, vector<1x32xf32>,
    } else {
    }
    %c0 = arith.constant 0 : index
    %c0_3 = arith.constant 0 : index
    %13 = vector.load %arg11[%c0, %c0_3] : memref<8x32xf32, #tpu.memory_space<vmem>>, vector<8x32xf32>
    %14 = arith.truncf %13 : vector<8x32xf32> to vector<8x32xbf16>
    %c0_4 = arith.constant 0 : index
    %c0_5 = arith.constant 0 : index
    %c0_6 = arith.constant 0 : index
    %15 = vector.load %arg10[%c0_4, %c0_5, %c0_6] : memref<2x8x32xf32, #tpu.memory_space<vmem>>, vector<1x8x32xf32>
    %16 = vector.shape_cast %15 : vector<1x8x32xf32> to vector<8x32xf32>
    %17 = arith.truncf %16 : vector<8x32xf32> to vector<8x32xbf16>
    %c0_7 = arith.constant 0 : index
    %c0_8 = arith.constant 0 : index
    %c0_9 = arith.constant 0 : index
    %18 = vector.load %arg5[%c0_7, %c0_8, %c0_9] : memref<2x32x32xbf16, #tpu.memory_space<vmem>>, vector<1x32x32xbf16>
    %19 = vector.shape_cast %18 : vector<1x32x32xbf16> to vector<32x32xbf16>
    %cst = arith.constant dense<0.000000e+00> : vector<8x32xf32>
    %20 = tpu.matmul %14, %19, %cst {dimension_numbers = #tpu.dot_dimension_numbers<[1], [0], [0], [1], [0, 0, 1, 1], [], []>} : vector<8x32xbf16>, vector<32x32xbf16>, vector<8x32xf32> -> vector<8x32xf32>
    %c0_10 = arith.constant 0 : index
    %c0_11 = arith.constant 0 : index
    %c0_12 = arith.constant 0 : index
    %21 = vector.load %arg6[%c0_10, %c0_11, %c0_12] : memref<2x32x32xbf16, #tpu.memory_space<vmem>>, vector<1x32x32xbf16>
    %22 = vector.shape_cast %21 : vector<1x32x32xbf16> to vector<32x32xbf16>
    %cst_13 = arith.constant dense<0.000000e+00> : vector<8x32xf32>
    %23 = tpu.matmul %17, %22, %cst_13 {dimension_numbers = #tpu.dot_dimension_numbers<[1], [0], [0], [1], [0, 0, 1, 1], [], []>} : vector<8x32xbf16>, vector<32x32xbf16>, vector<8x32xf32> -> vector<8x32xf32>
    %24 = arith.addf %20, %23 : vector<8x32xf32>
    %c0_14 = arith.constant 0 : index
    %c0_15 = arith.constant 0 : index
    %c0_16 = arith.constant 0 : index
    %25 = vector.load %arg7[%c0_14, %c0_15, %c0_16] : memref<2x1x32xf32, #tpu.memory_space<vmem>>, vector<1x1x32xf32>
    %26 = vector.shape_cast %25 : vector<1x1x32xf32> to vector<1x32xf32>
    %27 = vector.broadcast %26 : vector<1x32xf32> to vector<8x32xf32>
    %28 = arith.addf %24, %27 : vector<8x32xf32>
    %29 = math.tanh %28 : vector<8x32xf32>
    %c0_17 = arith.constant 0 : index
    %c0_18 = arith.constant 0 : index
    %c0_19 = arith.constant 0 : index
    %30 = vector.load %arg10[%c0_17, %c0_18, %c0_19] : memref<2x8x32xf32, #tpu.memory_space<vmem>>, vector<1x8x32xf32>
    %31 = vector.shape_cast %30 : vector<1x8x32xf32> to vector<8x32xf32>
    %32 = vector.shape_cast %29 : vector<8x32xf32> to vector<1x8x32xf32>
    tpu.vector_store %arg10[%c0_17, %c0_18, %c0_19], %32 {strides = array<i32>} : memref<2x8x32xf32, #tpu.memory_space<vmem>>, vector<1x8x32xf32>,
    %33 = arith.truncf %29 : vector<8x32xf32> to vector<8x32xbf16>
    %c1 = arith.constant 1 : index
    %c0_20 = arith.constant 0 : index
    %c0_21 = arith.constant 0 : index
    %34 = vector.load %arg10[%c1, %c0_20, %c0_21] : memref<2x8x32xf32, #tpu.memory_space<vmem>>, vector<1x8x32xf32>
    %35 = vector.shape_cast %34 : vector<1x8x32xf32> to vector<8x32xf32>
    %36 = arith.truncf %35 : vector<8x32xf32> to vector<8x32xbf16>
    %c1_22 = arith.constant 1 : index
    %c0_23 = arith.constant 0 : index
    %c0_24 = arith.constant 0 : index
    %37 = vector.load %arg5[%c1_22, %c0_23, %c0_24] : memref<2x32x32xbf16, #tpu.memory_space<vmem>>, vector<1x32x32xbf16>
    %38 = vector.shape_cast %37 : vector<1x32x32xbf16> to vector<32x32xbf16>
    %cst_25 = arith.constant dense<0.000000e+00> : vector<8x32xf32>
    %39 = tpu.matmul %33, %38, %cst_25 {dimension_numbers = #tpu.dot_dimension_numbers<[1], [0], [0], [1], [0, 0, 1, 1], [], []>} : vector<8x32xbf16>, vector<32x32xbf16>, vector<8x32xf32> -> vector<8x32xf32>
    %c1_26 = arith.constant 1 : index
    %c0_27 = arith.constant 0 : index
    %c0_28 = arith.constant 0 : index
    %40 = vector.load %arg6[%c1_26, %c0_27, %c0_28] : memref<2x32x32xbf16, #tpu.memory_space<vmem>>, vector<1x32x32xbf16>
    %41 = vector.shape_cast %40 : vector<1x32x32xbf16> to vector<32x32xbf16>
    %cst_29 = arith.constant dense<0.000000e+00> : vector<8x32xf32>
    %42 = tpu.matmul %36, %41, %cst_29 {dimension_numbers = #tpu.dot_dimension_numbers<[1], [0], [0], [1], [0, 0, 1, 1], [], []>} : vector<8x32xbf16>, vector<32x32xbf16>, vector<8x32xf32> -> vector<8x32xf32>
    %43 = arith.addf %39, %42 : vector<8x32xf32>
    %c1_30 = arith.constant 1 : index
    %c0_31 = arith.constant 0 : index
    %c0_32 = arith.constant 0 : index
    %44 = vector.load %arg7[%c1_30, %c0_31, %c0_32] : memref<2x1x32xf32, #tpu.memory_space<vmem>>, vector<1x1x32xf32>
    %45 = vector.shape_cast %44 : vector<1x1x32xf32> to vector<1x32xf32>
    %46 = vector.broadcast %45 : vector<1x32xf32> to vector<8x32xf32>
    %47 = arith.addf %43, %46 : vector<8x32xf32>
    %48 = math.tanh %47 : vector<8x32xf32>
    %c1_33 = arith.constant 1 : index
    %c0_34 = arith.constant 0 : index
    %c0_35 = arith.constant 0 : index
    %49 = vector.load %arg10[%c1_33, %c0_34, %c0_35] : memref<2x8x32xf32, #tpu.memory_space<vmem>>, vector<1x8x32xf32>
    %50 = vector.shape_cast %49 : vector<1x8x32xf32> to vector<8x32xf32>
    %51 = vector.shape_cast %48 : vector<8x32xf32> to vector<1x8x32xf32>
    tpu.vector_store %arg10[%c1_33, %c0_34, %c0_35], %51 {strides = array<i32>} : memref<2x8x32xf32, #tpu.memory_space<vmem>>, vector<1x8x32xf32>,
    %52 = arith.truncf %48 : vector<8x32xf32> to vector<8x32xbf16>
    %c0_36 = arith.constant 0 : index
    %c0_37 = arith.constant 0 : index
    %53 = vector.load %arg4[%c0_36, %c0_37] : memref<32x128xbf16, #tpu.memory_space<vmem>>, vector<32x128xbf16>
    %cst_38 = arith.constant dense<0.000000e+00> : vector<8x128xf32>
    %54 = tpu.matmul %52, %53, %cst_38 {dimension_numbers = #tpu.dot_dimension_numbers<[1], [0], [0], [1], [0, 0, 1, 1], [], []>} : vector<8x32xbf16>, vector<32x128xbf16>, vector<8x128xf32> -> vector<8x128xf32>
    %55 = vector.shape_cast %54 : vector<8x128xf32> to vector<8x1x128xf32>
    %c0_39 = arith.constant 0 : index
    %c0_40 = arith.constant 0 : index
    %c0_41 = arith.constant 0 : index
    %56 = vector.load %arg9[%c0_39, %c0_40, %c0_41] : memref<8x8x128xf32, #tpu.memory_space<vmem>>, vector<8x1x128xf32>
    tpu.vector_store %arg9[%c0_39, %c0_40, %c0_41], %55 {strides = array<i32>} : memref<8x8x128xf32, #tpu.memory_space<vmem>>, vector<8x1x128xf32>,
    %c1_i32_42 = arith.constant 1 : i32
    %57 = arith.addi %7, %c1_i32_42 : i32
    %c15_i32 = arith.constant 15 : i32
    %58 = arith.minsi %57, %c15_i32 : i32
    %c1_i32_43 = arith.constant 1 : i32
    %59 = arith.addi %7, %c1_i32_43 : i32
    %c16_i32 = arith.constant 16 : i32
    %60 = arith.cmpi slt, %59, %c16_i32 : i32
    %61 = arith.index_cast %58 : i32 to index
    %62 = memref.load %arg1[%61] : memref<16xi32, #tpu.memory_space<smem>>
    %c0_i32_44 = arith.constant 0 : i32
    %63 = arith.cmpi eq, %62, %c0_i32_44 : i32
    %64 = arith.andi %60, %63 : i1
    %65 = arith.extui %64 : i1 to i32
    %c0_i32_45 = arith.constant 0 : i32
    %66 = arith.cmpi ne, %65, %c0_i32_45 : i32
    scf.if %66 {
      %cst_398 = arith.constant -1.000000e+30 : f32
      %494 = vector.broadcast %cst_398 : f32 to vector<8x128xf32>
      %495 = arith.select %5, %54, %494 : vector<8x128xi1>, vector<8x128xf32>
      %cst_399 = arith.constant dense<0xFF800000> : vector<8xf32>
      %496 = vector.multi_reduction <maximumf>, %495, %cst_399 [1] : vector<8x128xf32> to vector<8xf32>
      %497 = vector.shape_cast %496 : vector<8xf32> to vector<8x1xf32>
      %498 = vector.broadcast %497 : vector<8x1xf32> to vector<8x128xf32>
      %499 = arith.cmpf oeq, %495, %498 : vector<8x128xf32>
      %c128_i32 = arith.constant 128 : i32
      %500 = vector.broadcast %c128_i32 : i32 to vector<8x128xi32>
      %501 = arith.select %499, %3, %500 : vector<8x128xi1>, vector<8x128xi32>
      %cst_400 = arith.constant dense<2147483647> : vector<8xi32>
      %502 = vector.multi_reduction <minsi>, %501, %cst_400 [1] : vector<8x128xi32> to vector<8xi32>
      %503 = vector.shape_cast %502 : vector<8xi32> to vector<8x1xi32>
      %504 = vector.broadcast %503 : vector<8x1xi32> to vector<8x128xi32>
      %505 = arith.cmpi eq, %3, %504 : vector<8x128xi32>
      %506 = arith.extui %505 : vector<8x128xi1> to vector<8x128xi32>
      %507 = arith.sitofp %506 : vector<8x128xi32> to vector<8x128xf32>
      %c0_401 = arith.constant 0 : index
      %c0_402 = arith.constant 0 : index
      %508 = vector.load %arg3[%c0_401, %c0_402] : memref<128x32xf32, #tpu.memory_space<vmem>>, vector<128x32xf32>
      %cst_403 = arith.constant dense<0.000000e+00> : vector<8x32xf32>
      %509 = tpu.matmul %507, %508, %cst_403 {dimension_numbers = #tpu.dot_dimension_numbers<[1], [0], [0], [1], [0, 0, 1, 1], [], []>} : vector<8x128xf32>, vector<128x32xf32>, vector<8x32xf32> -> vector<8x32xf32>
      %c0_404 = arith.constant 0 : index
      %c0_405 = arith.constant 0 : index
      %510 = vector.load %arg11[%c0_404, %c0_405] : memref<8x32xf32, #tpu.memory_space<vmem>>, vector<8x32xf32>
      tpu.vector_store %arg11[%c0_404, %c0_405], %509 {strides = array<i32>} : memref<8x32xf32, #tpu.memory_space<vmem>>, vector<8x32xf32>,
    } else {
    }
    %c8_i32_46 = arith.constant 8 : i32
    %67 = arith.muli %arg0, %c8_i32_46 : i32
    %c1_i32_47 = arith.constant 1 : i32
    %68 = arith.addi %67, %c1_i32_47 : i32
    %69 = arith.index_cast %68 : i32 to index
    %70 = memref.load %arg1[%69] : memref<16xi32, #tpu.memory_space<smem>>
    %c1_i32_48 = arith.constant 1 : i32
    %71 = arith.cmpi eq, %70, %c1_i32_48 : i32
    %72 = arith.extui %71 : i1 to i32
    %c0_i32_49 = arith.constant 0 : i32
    %73 = arith.cmpi ne, %72, %c0_i32_49 : i32
    scf.if %73 {
      %c8_i32_398 = arith.constant 8 : i32
      %494 = arith.muli %68, %c8_i32_398 : i32
      %c0_i32_399 = arith.constant 0 : i32
      %495 = arith.addi %494, %c0_i32_399 : i32
      %496 = arith.index_cast %495 : i32 to index
      %497 = memref.load %arg2[%496] : memref<128xi32, #tpu.memory_space<smem>>
      %498 = arith.index_cast %497 : i32 to index
      %c0_400 = arith.constant 0 : index
      %499 = vector.load %arg3[%498, %c0_400] : memref<128x32xf32, #tpu.memory_space<vmem>>, vector<1x32xf32>
      %c0_401 = arith.constant 0 : index
      %c0_402 = arith.constant 0 : index
      %500 = vector.load %arg11[%c0_401, %c0_402] : memref<8x32xf32, #tpu.memory_space<vmem>>, vector<1x32xf32>
      tpu.vector_store %arg11[%c0_401, %c0_402], %499 {strides = array<i32>} : memref<8x32xf32, #tpu.memory_space<vmem>>, vector<1x32xf32>,
      %c1_i32_403 = arith.constant 1 : i32
      %501 = arith.addi %494, %c1_i32_403 : i32
      %502 = arith.index_cast %501 : i32 to index
      %503 = memref.load %arg2[%502] : memref<128xi32, #tpu.memory_space<smem>>
      %504 = arith.index_cast %503 : i32 to index
      %c0_404 = arith.constant 0 : index
      %505 = vector.load %arg3[%504, %c0_404] : memref<128x32xf32, #tpu.memory_space<vmem>>, vector<1x32xf32>
      %c1_405 = arith.constant 1 : index
      %c0_406 = arith.constant 0 : index
      %506 = vector.load %arg11[%c1_405, %c0_406] : memref<8x32xf32, #tpu.memory_space<vmem>>, vector<1x32xf32>
      tpu.vector_store %arg11[%c1_405, %c0_406], %505 {strides = array<i32>} : memref<8x32xf32, #tpu.memory_space<vmem>>, vector<1x32xf32>,
      %c2_i32_407 = arith.constant 2 : i32
      %507 = arith.addi %494, %c2_i32_407 : i32
      %508 = arith.index_cast %507 : i32 to index
      %509 = memref.load %arg2[%508] : memref<128xi32, #tpu.memory_space<smem>>
      %510 = arith.index_cast %509 : i32 to index
      %c0_408 = arith.constant 0 : index
      %511 = vector.load %arg3[%510, %c0_408] : memref<128x32xf32, #tpu.memory_space<vmem>>, vector<1x32xf32>
      %c2_409 = arith.constant 2 : index
      %c0_410 = arith.constant 0 : index
      %512 = vector.load %arg11[%c2_409, %c0_410] : memref<8x32xf32, #tpu.memory_space<vmem>>, vector<1x32xf32>
      tpu.vector_store %arg11[%c2_409, %c0_410], %511 {strides = array<i32>} : memref<8x32xf32, #tpu.memory_space<vmem>>, vector<1x32xf32>,
      %c3_i32_411 = arith.constant 3 : i32
      %513 = arith.addi %494, %c3_i32_411 : i32
      %514 = arith.index_cast %513 : i32 to index
      %515 = memref.load %arg2[%514] : memref<128xi32, #tpu.memory_space<smem>>
      %516 = arith.index_cast %515 : i32 to index
      %c0_412 = arith.constant 0 : index
      %517 = vector.load %arg3[%516, %c0_412] : memref<128x32xf32, #tpu.memory_space<vmem>>, vector<1x32xf32>
      %c3_413 = arith.constant 3 : index
      %c0_414 = arith.constant 0 : index
      %518 = vector.load %arg11[%c3_413, %c0_414] : memref<8x32xf32, #tpu.memory_space<vmem>>, vector<1x32xf32>
      tpu.vector_store %arg11[%c3_413, %c0_414], %517 {strides = array<i32>} : memref<8x32xf32, #tpu.memory_space<vmem>>, vector<1x32xf32>,
      %c4_i32_415 = arith.constant 4 : i32
      %519 = arith.addi %494, %c4_i32_415 : i32
      %520 = arith.index_cast %519 : i32 to index
      %521 = memref.load %arg2[%520] : memref<128xi32, #tpu.memory_space<smem>>
      %522 = arith.index_cast %521 : i32 to index
      %c0_416 = arith.constant 0 : index
      %523 = vector.load %arg3[%522, %c0_416] : memref<128x32xf32, #tpu.memory_space<vmem>>, vector<1x32xf32>
      %c4_417 = arith.constant 4 : index
      %c0_418 = arith.constant 0 : index
      %524 = vector.load %arg11[%c4_417, %c0_418] : memref<8x32xf32, #tpu.memory_space<vmem>>, vector<1x32xf32>
      tpu.vector_store %arg11[%c4_417, %c0_418], %523 {strides = array<i32>} : memref<8x32xf32, #tpu.memory_space<vmem>>, vector<1x32xf32>,
      %c5_i32_419 = arith.constant 5 : i32
      %525 = arith.addi %494, %c5_i32_419 : i32
      %526 = arith.index_cast %525 : i32 to index
      %527 = memref.load %arg2[%526] : memref<128xi32, #tpu.memory_space<smem>>
      %528 = arith.index_cast %527 : i32 to index
      %c0_420 = arith.constant 0 : index
      %529 = vector.load %arg3[%528, %c0_420] : memref<128x32xf32, #tpu.memory_space<vmem>>, vector<1x32xf32>
      %c5_421 = arith.constant 5 : index
      %c0_422 = arith.constant 0 : index
      %530 = vector.load %arg11[%c5_421, %c0_422] : memref<8x32xf32, #tpu.memory_space<vmem>>, vector<1x32xf32>
      tpu.vector_store %arg11[%c5_421, %c0_422], %529 {strides = array<i32>} : memref<8x32xf32, #tpu.memory_space<vmem>>, vector<1x32xf32>,
      %c6_i32_423 = arith.constant 6 : i32
      %531 = arith.addi %494, %c6_i32_423 : i32
      %532 = arith.index_cast %531 : i32 to index
      %533 = memref.load %arg2[%532] : memref<128xi32, #tpu.memory_space<smem>>
      %534 = arith.index_cast %533 : i32 to index
      %c0_424 = arith.constant 0 : index
      %535 = vector.load %arg3[%534, %c0_424] : memref<128x32xf32, #tpu.memory_space<vmem>>, vector<1x32xf32>
      %c6_425 = arith.constant 6 : index
      %c0_426 = arith.constant 0 : index
      %536 = vector.load %arg11[%c6_425, %c0_426] : memref<8x32xf32, #tpu.memory_space<vmem>>, vector<1x32xf32>
      tpu.vector_store %arg11[%c6_425, %c0_426], %535 {strides = array<i32>} : memref<8x32xf32, #tpu.memory_space<vmem>>, vector<1x32xf32>,
      %c7_i32_427 = arith.constant 7 : i32
      %537 = arith.addi %494, %c7_i32_427 : i32
      %538 = arith.index_cast %537 : i32 to index
      %539 = memref.load %arg2[%538] : memref<128xi32, #tpu.memory_space<smem>>
      %540 = arith.index_cast %539 : i32 to index
      %c0_428 = arith.constant 0 : index
      %541 = vector.load %arg3[%540, %c0_428] : memref<128x32xf32, #tpu.memory_space<vmem>>, vector<1x32xf32>
      %c7_429 = arith.constant 7 : index
      %c0_430 = arith.constant 0 : index
      %542 = vector.load %arg11[%c7_429, %c0_430] : memref<8x32xf32, #tpu.memory_space<vmem>>, vector<1x32xf32>
      tpu.vector_store %arg11[%c7_429, %c0_430], %541 {strides = array<i32>} : memref<8x32xf32, #tpu.memory_space<vmem>>, vector<1x32xf32>,
    } else {
    }
    %c0_50 = arith.constant 0 : index
    %c0_51 = arith.constant 0 : index
    %74 = vector.load %arg11[%c0_50, %c0_51] : memref<8x32xf32, #tpu.memory_space<vmem>>, vector<8x32xf32>
    %75 = arith.truncf %74 : vector<8x32xf32> to vector<8x32xbf16>
    %c0_52 = arith.constant 0 : index
    %c0_53 = arith.constant 0 : index
    %c0_54 = arith.constant 0 : index
    %76 = vector.load %arg10[%c0_52, %c0_53, %c0_54] : memref<2x8x32xf32, #tpu.memory_space<vmem>>, vector<1x8x32xf32>
    %77 = vector.shape_cast %76 : vector<1x8x32xf32> to vector<8x32xf32>
    %78 = arith.truncf %77 : vector<8x32xf32> to vector<8x32xbf16>
    %c0_55 = arith.constant 0 : index
    %c0_56 = arith.constant 0 : index
    %c0_57 = arith.constant 0 : index
    %79 = vector.load %arg5[%c0_55, %c0_56, %c0_57] : memref<2x32x32xbf16, #tpu.memory_space<vmem>>, vector<1x32x32xbf16>
    %80 = vector.shape_cast %79 : vector<1x32x32xbf16> to vector<32x32xbf16>
    %cst_58 = arith.constant dense<0.000000e+00> : vector<8x32xf32>
    %81 = tpu.matmul %75, %80, %cst_58 {dimension_numbers = #tpu.dot_dimension_numbers<[1], [0], [0], [1], [0, 0, 1, 1], [], []>} : vector<8x32xbf16>, vector<32x32xbf16>, vector<8x32xf32> -> vector<8x32xf32>
    %c0_59 = arith.constant 0 : index
    %c0_60 = arith.constant 0 : index
    %c0_61 = arith.constant 0 : index
    %82 = vector.load %arg6[%c0_59, %c0_60, %c0_61] : memref<2x32x32xbf16, #tpu.memory_space<vmem>>, vector<1x32x32xbf16>
    %83 = vector.shape_cast %82 : vector<1x32x32xbf16> to vector<32x32xbf16>
    %cst_62 = arith.constant dense<0.000000e+00> : vector<8x32xf32>
    %84 = tpu.matmul %78, %83, %cst_62 {dimension_numbers = #tpu.dot_dimension_numbers<[1], [0], [0], [1], [0, 0, 1, 1], [], []>} : vector<8x32xbf16>, vector<32x32xbf16>, vector<8x32xf32> -> vector<8x32xf32>
    %85 = arith.addf %81, %84 : vector<8x32xf32>
    %c0_63 = arith.constant 0 : index
    %c0_64 = arith.constant 0 : index
    %c0_65 = arith.constant 0 : index
    %86 = vector.load %arg7[%c0_63, %c0_64, %c0_65] : memref<2x1x32xf32, #tpu.memory_space<vmem>>, vector<1x1x32xf32>
    %87 = vector.shape_cast %86 : vector<1x1x32xf32> to vector<1x32xf32>
    %88 = vector.broadcast %87 : vector<1x32xf32> to vector<8x32xf32>
    %89 = arith.addf %85, %88 : vector<8x32xf32>
    %90 = math.tanh %89 : vector<8x32xf32>
    %c0_66 = arith.constant 0 : index
    %c0_67 = arith.constant 0 : index
    %c0_68 = arith.constant 0 : index
    %91 = vector.load %arg10[%c0_66, %c0_67, %c0_68] : memref<2x8x32xf32, #tpu.memory_space<vmem>>, vector<1x8x32xf32>
    %92 = vector.shape_cast %91 : vector<1x8x32xf32> to vector<8x32xf32>
    %93 = vector.shape_cast %90 : vector<8x32xf32> to vector<1x8x32xf32>
    tpu.vector_store %arg10[%c0_66, %c0_67, %c0_68], %93 {strides = array<i32>} : memref<2x8x32xf32, #tpu.memory_space<vmem>>, vector<1x8x32xf32>,
    %94 = arith.truncf %90 : vector<8x32xf32> to vector<8x32xbf16>
    %c1_69 = arith.constant 1 : index
    %c0_70 = arith.constant 0 : index
    %c0_71 = arith.constant 0 : index
    %95 = vector.load %arg10[%c1_69, %c0_70, %c0_71] : memref<2x8x32xf32, #tpu.memory_space<vmem>>, vector<1x8x32xf32>
    %96 = vector.shape_cast %95 : vector<1x8x32xf32> to vector<8x32xf32>
    %97 = arith.truncf %96 : vector<8x32xf32> to vector<8x32xbf16>
    %c1_72 = arith.constant 1 : index
    %c0_73 = arith.constant 0 : index
    %c0_74 = arith.constant 0 : index
    %98 = vector.load %arg5[%c1_72, %c0_73, %c0_74] : memref<2x32x32xbf16, #tpu.memory_space<vmem>>, vector<1x32x32xbf16>
    %99 = vector.shape_cast %98 : vector<1x32x32xbf16> to vector<32x32xbf16>
    %cst_75 = arith.constant dense<0.000000e+00> : vector<8x32xf32>
    %100 = tpu.matmul %94, %99, %cst_75 {dimension_numbers = #tpu.dot_dimension_numbers<[1], [0], [0], [1], [0, 0, 1, 1], [], []>} : vector<8x32xbf16>, vector<32x32xbf16>, vector<8x32xf32> -> vector<8x32xf32>
    %c1_76 = arith.constant 1 : index
    %c0_77 = arith.constant 0 : index
    %c0_78 = arith.constant 0 : index
    %101 = vector.load %arg6[%c1_76, %c0_77, %c0_78] : memref<2x32x32xbf16, #tpu.memory_space<vmem>>, vector<1x32x32xbf16>
    %102 = vector.shape_cast %101 : vector<1x32x32xbf16> to vector<32x32xbf16>
    %cst_79 = arith.constant dense<0.000000e+00> : vector<8x32xf32>
    %103 = tpu.matmul %97, %102, %cst_79 {dimension_numbers = #tpu.dot_dimension_numbers<[1], [0], [0], [1], [0, 0, 1, 1], [], []>} : vector<8x32xbf16>, vector<32x32xbf16>, vector<8x32xf32> -> vector<8x32xf32>
    %104 = arith.addf %100, %103 : vector<8x32xf32>
    %c1_80 = arith.constant 1 : index
    %c0_81 = arith.constant 0 : index
    %c0_82 = arith.constant 0 : index
    %105 = vector.load %arg7[%c1_80, %c0_81, %c0_82] : memref<2x1x32xf32, #tpu.memory_space<vmem>>, vector<1x1x32xf32>
    %106 = vector.shape_cast %105 : vector<1x1x32xf32> to vector<1x32xf32>
    %107 = vector.broadcast %106 : vector<1x32xf32> to vector<8x32xf32>
    %108 = arith.addf %104, %107 : vector<8x32xf32>
    %109 = math.tanh %108 : vector<8x32xf32>
    %c1_83 = arith.constant 1 : index
    %c0_84 = arith.constant 0 : index
    %c0_85 = arith.constant 0 : index
    %110 = vector.load %arg10[%c1_83, %c0_84, %c0_85] : memref<2x8x32xf32, #tpu.memory_space<vmem>>, vector<1x8x32xf32>
    %111 = vector.shape_cast %110 : vector<1x8x32xf32> to vector<8x32xf32>
    %112 = vector.shape_cast %109 : vector<8x32xf32> to vector<1x8x32xf32>
    tpu.vector_store %arg10[%c1_83, %c0_84, %c0_85], %112 {strides = array<i32>} : memref<2x8x32xf32, #tpu.memory_space<vmem>>, vector<1x8x32xf32>,
    %113 = arith.truncf %109 : vector<8x32xf32> to vector<8x32xbf16>
    %c0_86 = arith.constant 0 : index
    %c0_87 = arith.constant 0 : index
    %114 = vector.load %arg4[%c0_86, %c0_87] : memref<32x128xbf16, #tpu.memory_space<vmem>>, vector<32x128xbf16>
    %cst_88 = arith.constant dense<0.000000e+00> : vector<8x128xf32>
    %115 = tpu.matmul %113, %114, %cst_88 {dimension_numbers = #tpu.dot_dimension_numbers<[1], [0], [0], [1], [0, 0, 1, 1], [], []>} : vector<8x32xbf16>, vector<32x128xbf16>, vector<8x128xf32> -> vector<8x128xf32>
    %116 = vector.shape_cast %115 : vector<8x128xf32> to vector<8x1x128xf32>
    %c0_89 = arith.constant 0 : index
    %c1_90 = arith.constant 1 : index
    %c0_91 = arith.constant 0 : index
    %117 = vector.load %arg9[%c0_89, %c1_90, %c0_91] : memref<8x8x128xf32, #tpu.memory_space<vmem>>, vector<8x1x128xf32>
    tpu.vector_store %arg9[%c0_89, %c1_90, %c0_91], %116 {strides = array<i32>} : memref<8x8x128xf32, #tpu.memory_space<vmem>>, vector<8x1x128xf32>,
    %c1_i32_92 = arith.constant 1 : i32
    %118 = arith.addi %68, %c1_i32_92 : i32
    %c15_i32_93 = arith.constant 15 : i32
    %119 = arith.minsi %118, %c15_i32_93 : i32
    %c1_i32_94 = arith.constant 1 : i32
    %120 = arith.addi %68, %c1_i32_94 : i32
    %c16_i32_95 = arith.constant 16 : i32
    %121 = arith.cmpi slt, %120, %c16_i32_95 : i32
    %122 = arith.index_cast %119 : i32 to index
    %123 = memref.load %arg1[%122] : memref<16xi32, #tpu.memory_space<smem>>
    %c0_i32_96 = arith.constant 0 : i32
    %124 = arith.cmpi eq, %123, %c0_i32_96 : i32
    %125 = arith.andi %121, %124 : i1
    %126 = arith.extui %125 : i1 to i32
    %c0_i32_97 = arith.constant 0 : i32
    %127 = arith.cmpi ne, %126, %c0_i32_97 : i32
    scf.if %127 {
      %cst_398 = arith.constant -1.000000e+30 : f32
      %494 = vector.broadcast %cst_398 : f32 to vector<8x128xf32>
      %495 = arith.select %5, %115, %494 : vector<8x128xi1>, vector<8x128xf32>
      %cst_399 = arith.constant dense<0xFF800000> : vector<8xf32>
      %496 = vector.multi_reduction <maximumf>, %495, %cst_399 [1] : vector<8x128xf32> to vector<8xf32>
      %497 = vector.shape_cast %496 : vector<8xf32> to vector<8x1xf32>
      %498 = vector.broadcast %497 : vector<8x1xf32> to vector<8x128xf32>
      %499 = arith.cmpf oeq, %495, %498 : vector<8x128xf32>
      %c128_i32 = arith.constant 128 : i32
      %500 = vector.broadcast %c128_i32 : i32 to vector<8x128xi32>
      %501 = arith.select %499, %3, %500 : vector<8x128xi1>, vector<8x128xi32>
      %cst_400 = arith.constant dense<2147483647> : vector<8xi32>
      %502 = vector.multi_reduction <minsi>, %501, %cst_400 [1] : vector<8x128xi32> to vector<8xi32>
      %503 = vector.shape_cast %502 : vector<8xi32> to vector<8x1xi32>
      %504 = vector.broadcast %503 : vector<8x1xi32> to vector<8x128xi32>
      %505 = arith.cmpi eq, %3, %504 : vector<8x128xi32>
      %506 = arith.extui %505 : vector<8x128xi1> to vector<8x128xi32>
      %507 = arith.sitofp %506 : vector<8x128xi32> to vector<8x128xf32>
      %c0_401 = arith.constant 0 : index
      %c0_402 = arith.constant 0 : index
      %508 = vector.load %arg3[%c0_401, %c0_402] : memref<128x32xf32, #tpu.memory_space<vmem>>, vector<128x32xf32>
      %cst_403 = arith.constant dense<0.000000e+00> : vector<8x32xf32>
      %509 = tpu.matmul %507, %508, %cst_403 {dimension_numbers = #tpu.dot_dimension_numbers<[1], [0], [0], [1], [0, 0, 1, 1], [], []>} : vector<8x128xf32>, vector<128x32xf32>, vector<8x32xf32> -> vector<8x32xf32>
      %c0_404 = arith.constant 0 : index
      %c0_405 = arith.constant 0 : index
      %510 = vector.load %arg11[%c0_404, %c0_405] : memref<8x32xf32, #tpu.memory_space<vmem>>, vector<8x32xf32>
      tpu.vector_store %arg11[%c0_404, %c0_405], %509 {strides = array<i32>} : memref<8x32xf32, #tpu.memory_space<vmem>>, vector<8x32xf32>,
    } else {
    }
    %c8_i32_98 = arith.constant 8 : i32
    %128 = arith.muli %arg0, %c8_i32_98 : i32
    %c2_i32 = arith.constant 2 : i32
    %129 = arith.addi %128, %c2_i32 : i32
    %130 = arith.index_cast %129 : i32 to index
    %131 = memref.load %arg1[%130] : memref<16xi32, #tpu.memory_space<smem>>
    %c1_i32_99 = arith.constant 1 : i32
    %132 = arith.cmpi eq, %131, %c1_i32_99 : i32
    %133 = arith.extui %132 : i1 to i32
    %c0_i32_100 = arith.constant 0 : i32
    %134 = arith.cmpi ne, %133, %c0_i32_100 : i32
    scf.if %134 {
      %c8_i32_398 = arith.constant 8 : i32
      %494 = arith.muli %129, %c8_i32_398 : i32
      %c0_i32_399 = arith.constant 0 : i32
      %495 = arith.addi %494, %c0_i32_399 : i32
      %496 = arith.index_cast %495 : i32 to index
      %497 = memref.load %arg2[%496] : memref<128xi32, #tpu.memory_space<smem>>
      %498 = arith.index_cast %497 : i32 to index
      %c0_400 = arith.constant 0 : index
      %499 = vector.load %arg3[%498, %c0_400] : memref<128x32xf32, #tpu.memory_space<vmem>>, vector<1x32xf32>
      %c0_401 = arith.constant 0 : index
      %c0_402 = arith.constant 0 : index
      %500 = vector.load %arg11[%c0_401, %c0_402] : memref<8x32xf32, #tpu.memory_space<vmem>>, vector<1x32xf32>
      tpu.vector_store %arg11[%c0_401, %c0_402], %499 {strides = array<i32>} : memref<8x32xf32, #tpu.memory_space<vmem>>, vector<1x32xf32>,
      %c1_i32_403 = arith.constant 1 : i32
      %501 = arith.addi %494, %c1_i32_403 : i32
      %502 = arith.index_cast %501 : i32 to index
      %503 = memref.load %arg2[%502] : memref<128xi32, #tpu.memory_space<smem>>
      %504 = arith.index_cast %503 : i32 to index
      %c0_404 = arith.constant 0 : index
      %505 = vector.load %arg3[%504, %c0_404] : memref<128x32xf32, #tpu.memory_space<vmem>>, vector<1x32xf32>
      %c1_405 = arith.constant 1 : index
      %c0_406 = arith.constant 0 : index
      %506 = vector.load %arg11[%c1_405, %c0_406] : memref<8x32xf32, #tpu.memory_space<vmem>>, vector<1x32xf32>
      tpu.vector_store %arg11[%c1_405, %c0_406], %505 {strides = array<i32>} : memref<8x32xf32, #tpu.memory_space<vmem>>, vector<1x32xf32>,
      %c2_i32_407 = arith.constant 2 : i32
      %507 = arith.addi %494, %c2_i32_407 : i32
      %508 = arith.index_cast %507 : i32 to index
      %509 = memref.load %arg2[%508] : memref<128xi32, #tpu.memory_space<smem>>
      %510 = arith.index_cast %509 : i32 to index
      %c0_408 = arith.constant 0 : index
      %511 = vector.load %arg3[%510, %c0_408] : memref<128x32xf32, #tpu.memory_space<vmem>>, vector<1x32xf32>
      %c2_409 = arith.constant 2 : index
      %c0_410 = arith.constant 0 : index
      %512 = vector.load %arg11[%c2_409, %c0_410] : memref<8x32xf32, #tpu.memory_space<vmem>>, vector<1x32xf32>
      tpu.vector_store %arg11[%c2_409, %c0_410], %511 {strides = array<i32>} : memref<8x32xf32, #tpu.memory_space<vmem>>, vector<1x32xf32>,
      %c3_i32_411 = arith.constant 3 : i32
      %513 = arith.addi %494, %c3_i32_411 : i32
      %514 = arith.index_cast %513 : i32 to index
      %515 = memref.load %arg2[%514] : memref<128xi32, #tpu.memory_space<smem>>
      %516 = arith.index_cast %515 : i32 to index
      %c0_412 = arith.constant 0 : index
      %517 = vector.load %arg3[%516, %c0_412] : memref<128x32xf32, #tpu.memory_space<vmem>>, vector<1x32xf32>
      %c3_413 = arith.constant 3 : index
      %c0_414 = arith.constant 0 : index
      %518 = vector.load %arg11[%c3_413, %c0_414] : memref<8x32xf32, #tpu.memory_space<vmem>>, vector<1x32xf32>
      tpu.vector_store %arg11[%c3_413, %c0_414], %517 {strides = array<i32>} : memref<8x32xf32, #tpu.memory_space<vmem>>, vector<1x32xf32>,
      %c4_i32_415 = arith.constant 4 : i32
      %519 = arith.addi %494, %c4_i32_415 : i32
      %520 = arith.index_cast %519 : i32 to index
      %521 = memref.load %arg2[%520] : memref<128xi32, #tpu.memory_space<smem>>
      %522 = arith.index_cast %521 : i32 to index
      %c0_416 = arith.constant 0 : index
      %523 = vector.load %arg3[%522, %c0_416] : memref<128x32xf32, #tpu.memory_space<vmem>>, vector<1x32xf32>
      %c4_417 = arith.constant 4 : index
      %c0_418 = arith.constant 0 : index
      %524 = vector.load %arg11[%c4_417, %c0_418] : memref<8x32xf32, #tpu.memory_space<vmem>>, vector<1x32xf32>
      tpu.vector_store %arg11[%c4_417, %c0_418], %523 {strides = array<i32>} : memref<8x32xf32, #tpu.memory_space<vmem>>, vector<1x32xf32>,
      %c5_i32_419 = arith.constant 5 : i32
      %525 = arith.addi %494, %c5_i32_419 : i32
      %526 = arith.index_cast %525 : i32 to index
      %527 = memref.load %arg2[%526] : memref<128xi32, #tpu.memory_space<smem>>
      %528 = arith.index_cast %527 : i32 to index
      %c0_420 = arith.constant 0 : index
      %529 = vector.load %arg3[%528, %c0_420] : memref<128x32xf32, #tpu.memory_space<vmem>>, vector<1x32xf32>
      %c5_421 = arith.constant 5 : index
      %c0_422 = arith.constant 0 : index
      %530 = vector.load %arg11[%c5_421, %c0_422] : memref<8x32xf32, #tpu.memory_space<vmem>>, vector<1x32xf32>
      tpu.vector_store %arg11[%c5_421, %c0_422], %529 {strides = array<i32>} : memref<8x32xf32, #tpu.memory_space<vmem>>, vector<1x32xf32>,
      %c6_i32_423 = arith.constant 6 : i32
      %531 = arith.addi %494, %c6_i32_423 : i32
      %532 = arith.index_cast %531 : i32 to index
      %533 = memref.load %arg2[%532] : memref<128xi32, #tpu.memory_space<smem>>
      %534 = arith.index_cast %533 : i32 to index
      %c0_424 = arith.constant 0 : index
      %535 = vector.load %arg3[%534, %c0_424] : memref<128x32xf32, #tpu.memory_space<vmem>>, vector<1x32xf32>
      %c6_425 = arith.constant 6 : index
      %c0_426 = arith.constant 0 : index
      %536 = vector.load %arg11[%c6_425, %c0_426] : memref<8x32xf32, #tpu.memory_space<vmem>>, vector<1x32xf32>
      tpu.vector_store %arg11[%c6_425, %c0_426], %535 {strides = array<i32>} : memref<8x32xf32, #tpu.memory_space<vmem>>, vector<1x32xf32>,
      %c7_i32_427 = arith.constant 7 : i32
      %537 = arith.addi %494, %c7_i32_427 : i32
      %538 = arith.index_cast %537 : i32 to index
      %539 = memref.load %arg2[%538] : memref<128xi32, #tpu.memory_space<smem>>
      %540 = arith.index_cast %539 : i32 to index
      %c0_428 = arith.constant 0 : index
      %541 = vector.load %arg3[%540, %c0_428] : memref<128x32xf32, #tpu.memory_space<vmem>>, vector<1x32xf32>
      %c7_429 = arith.constant 7 : index
      %c0_430 = arith.constant 0 : index
      %542 = vector.load %arg11[%c7_429, %c0_430] : memref<8x32xf32, #tpu.memory_space<vmem>>, vector<1x32xf32>
      tpu.vector_store %arg11[%c7_429, %c0_430], %541 {strides = array<i32>} : memref<8x32xf32, #tpu.memory_space<vmem>>, vector<1x32xf32>,
    } else {
    }
    %c0_101 = arith.constant 0 : index
    %c0_102 = arith.constant 0 : index
    %135 = vector.load %arg11[%c0_101, %c0_102] : memref<8x32xf32, #tpu.memory_space<vmem>>, vector<8x32xf32>
    %136 = arith.truncf %135 : vector<8x32xf32> to vector<8x32xbf16>
    %c0_103 = arith.constant 0 : index
    %c0_104 = arith.constant 0 : index
    %c0_105 = arith.constant 0 : index
    %137 = vector.load %arg10[%c0_103, %c0_104, %c0_105] : memref<2x8x32xf32, #tpu.memory_space<vmem>>, vector<1x8x32xf32>
    %138 = vector.shape_cast %137 : vector<1x8x32xf32> to vector<8x32xf32>
    %139 = arith.truncf %138 : vector<8x32xf32> to vector<8x32xbf16>
    %c0_106 = arith.constant 0 : index
    %c0_107 = arith.constant 0 : index
    %c0_108 = arith.constant 0 : index
    %140 = vector.load %arg5[%c0_106, %c0_107, %c0_108] : memref<2x32x32xbf16, #tpu.memory_space<vmem>>, vector<1x32x32xbf16>
    %141 = vector.shape_cast %140 : vector<1x32x32xbf16> to vector<32x32xbf16>
    %cst_109 = arith.constant dense<0.000000e+00> : vector<8x32xf32>
    %142 = tpu.matmul %136, %141, %cst_109 {dimension_numbers = #tpu.dot_dimension_numbers<[1], [0], [0], [1], [0, 0, 1, 1], [], []>} : vector<8x32xbf16>, vector<32x32xbf16>, vector<8x32xf32> -> vector<8x32xf32>
    %c0_110 = arith.constant 0 : index
    %c0_111 = arith.constant 0 : index
    %c0_112 = arith.constant 0 : index
    %143 = vector.load %arg6[%c0_110, %c0_111, %c0_112] : memref<2x32x32xbf16, #tpu.memory_space<vmem>>, vector<1x32x32xbf16>
    %144 = vector.shape_cast %143 : vector<1x32x32xbf16> to vector<32x32xbf16>
    %cst_113 = arith.constant dense<0.000000e+00> : vector<8x32xf32>
    %145 = tpu.matmul %139, %144, %cst_113 {dimension_numbers = #tpu.dot_dimension_numbers<[1], [0], [0], [1], [0, 0, 1, 1], [], []>} : vector<8x32xbf16>, vector<32x32xbf16>, vector<8x32xf32> -> vector<8x32xf32>
    %146 = arith.addf %142, %145 : vector<8x32xf32>
    %c0_114 = arith.constant 0 : index
    %c0_115 = arith.constant 0 : index
    %c0_116 = arith.constant 0 : index
    %147 = vector.load %arg7[%c0_114, %c0_115, %c0_116] : memref<2x1x32xf32, #tpu.memory_space<vmem>>, vector<1x1x32xf32>
    %148 = vector.shape_cast %147 : vector<1x1x32xf32> to vector<1x32xf32>
    %149 = vector.broadcast %148 : vector<1x32xf32> to vector<8x32xf32>
    %150 = arith.addf %146, %149 : vector<8x32xf32>
    %151 = math.tanh %150 : vector<8x32xf32>
    %c0_117 = arith.constant 0 : index
    %c0_118 = arith.constant 0 : index
    %c0_119 = arith.constant 0 : index
    %152 = vector.load %arg10[%c0_117, %c0_118, %c0_119] : memref<2x8x32xf32, #tpu.memory_space<vmem>>, vector<1x8x32xf32>
    %153 = vector.shape_cast %152 : vector<1x8x32xf32> to vector<8x32xf32>
    %154 = vector.shape_cast %151 : vector<8x32xf32> to vector<1x8x32xf32>
    tpu.vector_store %arg10[%c0_117, %c0_118, %c0_119], %154 {strides = array<i32>} : memref<2x8x32xf32, #tpu.memory_space<vmem>>, vector<1x8x32xf32>,
    %155 = arith.truncf %151 : vector<8x32xf32> to vector<8x32xbf16>
    %c1_120 = arith.constant 1 : index
    %c0_121 = arith.constant 0 : index
    %c0_122 = arith.constant 0 : index
    %156 = vector.load %arg10[%c1_120, %c0_121, %c0_122] : memref<2x8x32xf32, #tpu.memory_space<vmem>>, vector<1x8x32xf32>
    %157 = vector.shape_cast %156 : vector<1x8x32xf32> to vector<8x32xf32>
    %158 = arith.truncf %157 : vector<8x32xf32> to vector<8x32xbf16>
    %c1_123 = arith.constant 1 : index
    %c0_124 = arith.constant 0 : index
    %c0_125 = arith.constant 0 : index
    %159 = vector.load %arg5[%c1_123, %c0_124, %c0_125] : memref<2x32x32xbf16, #tpu.memory_space<vmem>>, vector<1x32x32xbf16>
    %160 = vector.shape_cast %159 : vector<1x32x32xbf16> to vector<32x32xbf16>
    %cst_126 = arith.constant dense<0.000000e+00> : vector<8x32xf32>
    %161 = tpu.matmul %155, %160, %cst_126 {dimension_numbers = #tpu.dot_dimension_numbers<[1], [0], [0], [1], [0, 0, 1, 1], [], []>} : vector<8x32xbf16>, vector<32x32xbf16>, vector<8x32xf32> -> vector<8x32xf32>
    %c1_127 = arith.constant 1 : index
    %c0_128 = arith.constant 0 : index
    %c0_129 = arith.constant 0 : index
    %162 = vector.load %arg6[%c1_127, %c0_128, %c0_129] : memref<2x32x32xbf16, #tpu.memory_space<vmem>>, vector<1x32x32xbf16>
    %163 = vector.shape_cast %162 : vector<1x32x32xbf16> to vector<32x32xbf16>
    %cst_130 = arith.constant dense<0.000000e+00> : vector<8x32xf32>
    %164 = tpu.matmul %158, %163, %cst_130 {dimension_numbers = #tpu.dot_dimension_numbers<[1], [0], [0], [1], [0, 0, 1, 1], [], []>} : vector<8x32xbf16>, vector<32x32xbf16>, vector<8x32xf32> -> vector<8x32xf32>
    %165 = arith.addf %161, %164 : vector<8x32xf32>
    %c1_131 = arith.constant 1 : index
    %c0_132 = arith.constant 0 : index
    %c0_133 = arith.constant 0 : index
    %166 = vector.load %arg7[%c1_131, %c0_132, %c0_133] : memref<2x1x32xf32, #tpu.memory_space<vmem>>, vector<1x1x32xf32>
    %167 = vector.shape_cast %166 : vector<1x1x32xf32> to vector<1x32xf32>
    %168 = vector.broadcast %167 : vector<1x32xf32> to vector<8x32xf32>
    %169 = arith.addf %165, %168 : vector<8x32xf32>
    %170 = math.tanh %169 : vector<8x32xf32>
    %c1_134 = arith.constant 1 : index
    %c0_135 = arith.constant 0 : index
    %c0_136 = arith.constant 0 : index
    %171 = vector.load %arg10[%c1_134, %c0_135, %c0_136] : memref<2x8x32xf32, #tpu.memory_space<vmem>>, vector<1x8x32xf32>
    %172 = vector.shape_cast %171 : vector<1x8x32xf32> to vector<8x32xf32>
    %173 = vector.shape_cast %170 : vector<8x32xf32> to vector<1x8x32xf32>
    tpu.vector_store %arg10[%c1_134, %c0_135, %c0_136], %173 {strides = array<i32>} : memref<2x8x32xf32, #tpu.memory_space<vmem>>, vector<1x8x32xf32>,
    %174 = arith.truncf %170 : vector<8x32xf32> to vector<8x32xbf16>
    %c0_137 = arith.constant 0 : index
    %c0_138 = arith.constant 0 : index
    %175 = vector.load %arg4[%c0_137, %c0_138] : memref<32x128xbf16, #tpu.memory_space<vmem>>, vector<32x128xbf16>
    %cst_139 = arith.constant dense<0.000000e+00> : vector<8x128xf32>
    %176 = tpu.matmul %174, %175, %cst_139 {dimension_numbers = #tpu.dot_dimension_numbers<[1], [0], [0], [1], [0, 0, 1, 1], [], []>} : vector<8x32xbf16>, vector<32x128xbf16>, vector<8x128xf32> -> vector<8x128xf32>
    %177 = vector.shape_cast %176 : vector<8x128xf32> to vector<8x1x128xf32>
    %c0_140 = arith.constant 0 : index
    %c2 = arith.constant 2 : index
    %c0_141 = arith.constant 0 : index
    %178 = vector.load %arg9[%c0_140, %c2, %c0_141] : memref<8x8x128xf32, #tpu.memory_space<vmem>>, vector<8x1x128xf32>
    tpu.vector_store %arg9[%c0_140, %c2, %c0_141], %177 {strides = array<i32>} : memref<8x8x128xf32, #tpu.memory_space<vmem>>, vector<8x1x128xf32>,
    %c1_i32_142 = arith.constant 1 : i32
    %179 = arith.addi %129, %c1_i32_142 : i32
    %c15_i32_143 = arith.constant 15 : i32
    %180 = arith.minsi %179, %c15_i32_143 : i32
    %c1_i32_144 = arith.constant 1 : i32
    %181 = arith.addi %129, %c1_i32_144 : i32
    %c16_i32_145 = arith.constant 16 : i32
    %182 = arith.cmpi slt, %181, %c16_i32_145 : i32
    %183 = arith.index_cast %180 : i32 to index
    %184 = memref.load %arg1[%183] : memref<16xi32, #tpu.memory_space<smem>>
    %c0_i32_146 = arith.constant 0 : i32
    %185 = arith.cmpi eq, %184, %c0_i32_146 : i32
    %186 = arith.andi %182, %185 : i1
    %187 = arith.extui %186 : i1 to i32
    %c0_i32_147 = arith.constant 0 : i32
    %188 = arith.cmpi ne, %187, %c0_i32_147 : i32
    scf.if %188 {
      %cst_398 = arith.constant -1.000000e+30 : f32
      %494 = vector.broadcast %cst_398 : f32 to vector<8x128xf32>
      %495 = arith.select %5, %176, %494 : vector<8x128xi1>, vector<8x128xf32>
      %cst_399 = arith.constant dense<0xFF800000> : vector<8xf32>
      %496 = vector.multi_reduction <maximumf>, %495, %cst_399 [1] : vector<8x128xf32> to vector<8xf32>
      %497 = vector.shape_cast %496 : vector<8xf32> to vector<8x1xf32>
      %498 = vector.broadcast %497 : vector<8x1xf32> to vector<8x128xf32>
      %499 = arith.cmpf oeq, %495, %498 : vector<8x128xf32>
      %c128_i32 = arith.constant 128 : i32
      %500 = vector.broadcast %c128_i32 : i32 to vector<8x128xi32>
      %501 = arith.select %499, %3, %500 : vector<8x128xi1>, vector<8x128xi32>
      %cst_400 = arith.constant dense<2147483647> : vector<8xi32>
      %502 = vector.multi_reduction <minsi>, %501, %cst_400 [1] : vector<8x128xi32> to vector<8xi32>
      %503 = vector.shape_cast %502 : vector<8xi32> to vector<8x1xi32>
      %504 = vector.broadcast %503 : vector<8x1xi32> to vector<8x128xi32>
      %505 = arith.cmpi eq, %3, %504 : vector<8x128xi32>
      %506 = arith.extui %505 : vector<8x128xi1> to vector<8x128xi32>
      %507 = arith.sitofp %506 : vector<8x128xi32> to vector<8x128xf32>
      %c0_401 = arith.constant 0 : index
      %c0_402 = arith.constant 0 : index
      %508 = vector.load %arg3[%c0_401, %c0_402] : memref<128x32xf32, #tpu.memory_space<vmem>>, vector<128x32xf32>
      %cst_403 = arith.constant dense<0.000000e+00> : vector<8x32xf32>
      %509 = tpu.matmul %507, %508, %cst_403 {dimension_numbers = #tpu.dot_dimension_numbers<[1], [0], [0], [1], [0, 0, 1, 1], [], []>} : vector<8x128xf32>, vector<128x32xf32>, vector<8x32xf32> -> vector<8x32xf32>
      %c0_404 = arith.constant 0 : index
      %c0_405 = arith.constant 0 : index
      %510 = vector.load %arg11[%c0_404, %c0_405] : memref<8x32xf32, #tpu.memory_space<vmem>>, vector<8x32xf32>
      tpu.vector_store %arg11[%c0_404, %c0_405], %509 {strides = array<i32>} : memref<8x32xf32, #tpu.memory_space<vmem>>, vector<8x32xf32>,
    } else {
    }
    %c8_i32_148 = arith.constant 8 : i32
    %189 = arith.muli %arg0, %c8_i32_148 : i32
    %c3_i32 = arith.constant 3 : i32
    %190 = arith.addi %189, %c3_i32 : i32
    %191 = arith.index_cast %190 : i32 to index
    %192 = memref.load %arg1[%191] : memref<16xi32, #tpu.memory_space<smem>>
    %c1_i32_149 = arith.constant 1 : i32
    %193 = arith.cmpi eq, %192, %c1_i32_149 : i32
    %194 = arith.extui %193 : i1 to i32
    %c0_i32_150 = arith.constant 0 : i32
    %195 = arith.cmpi ne, %194, %c0_i32_150 : i32
    scf.if %195 {
      %c8_i32_398 = arith.constant 8 : i32
      %494 = arith.muli %190, %c8_i32_398 : i32
      %c0_i32_399 = arith.constant 0 : i32
      %495 = arith.addi %494, %c0_i32_399 : i32
      %496 = arith.index_cast %495 : i32 to index
      %497 = memref.load %arg2[%496] : memref<128xi32, #tpu.memory_space<smem>>
      %498 = arith.index_cast %497 : i32 to index
      %c0_400 = arith.constant 0 : index
      %499 = vector.load %arg3[%498, %c0_400] : memref<128x32xf32, #tpu.memory_space<vmem>>, vector<1x32xf32>
      %c0_401 = arith.constant 0 : index
      %c0_402 = arith.constant 0 : index
      %500 = vector.load %arg11[%c0_401, %c0_402] : memref<8x32xf32, #tpu.memory_space<vmem>>, vector<1x32xf32>
      tpu.vector_store %arg11[%c0_401, %c0_402], %499 {strides = array<i32>} : memref<8x32xf32, #tpu.memory_space<vmem>>, vector<1x32xf32>,
      %c1_i32_403 = arith.constant 1 : i32
      %501 = arith.addi %494, %c1_i32_403 : i32
      %502 = arith.index_cast %501 : i32 to index
      %503 = memref.load %arg2[%502] : memref<128xi32, #tpu.memory_space<smem>>
      %504 = arith.index_cast %503 : i32 to index
      %c0_404 = arith.constant 0 : index
      %505 = vector.load %arg3[%504, %c0_404] : memref<128x32xf32, #tpu.memory_space<vmem>>, vector<1x32xf32>
      %c1_405 = arith.constant 1 : index
      %c0_406 = arith.constant 0 : index
      %506 = vector.load %arg11[%c1_405, %c0_406] : memref<8x32xf32, #tpu.memory_space<vmem>>, vector<1x32xf32>
      tpu.vector_store %arg11[%c1_405, %c0_406], %505 {strides = array<i32>} : memref<8x32xf32, #tpu.memory_space<vmem>>, vector<1x32xf32>,
      %c2_i32_407 = arith.constant 2 : i32
      %507 = arith.addi %494, %c2_i32_407 : i32
      %508 = arith.index_cast %507 : i32 to index
      %509 = memref.load %arg2[%508] : memref<128xi32, #tpu.memory_space<smem>>
      %510 = arith.index_cast %509 : i32 to index
      %c0_408 = arith.constant 0 : index
      %511 = vector.load %arg3[%510, %c0_408] : memref<128x32xf32, #tpu.memory_space<vmem>>, vector<1x32xf32>
      %c2_409 = arith.constant 2 : index
      %c0_410 = arith.constant 0 : index
      %512 = vector.load %arg11[%c2_409, %c0_410] : memref<8x32xf32, #tpu.memory_space<vmem>>, vector<1x32xf32>
      tpu.vector_store %arg11[%c2_409, %c0_410], %511 {strides = array<i32>} : memref<8x32xf32, #tpu.memory_space<vmem>>, vector<1x32xf32>,
      %c3_i32_411 = arith.constant 3 : i32
      %513 = arith.addi %494, %c3_i32_411 : i32
      %514 = arith.index_cast %513 : i32 to index
      %515 = memref.load %arg2[%514] : memref<128xi32, #tpu.memory_space<smem>>
      %516 = arith.index_cast %515 : i32 to index
      %c0_412 = arith.constant 0 : index
      %517 = vector.load %arg3[%516, %c0_412] : memref<128x32xf32, #tpu.memory_space<vmem>>, vector<1x32xf32>
      %c3_413 = arith.constant 3 : index
      %c0_414 = arith.constant 0 : index
      %518 = vector.load %arg11[%c3_413, %c0_414] : memref<8x32xf32, #tpu.memory_space<vmem>>, vector<1x32xf32>
      tpu.vector_store %arg11[%c3_413, %c0_414], %517 {strides = array<i32>} : memref<8x32xf32, #tpu.memory_space<vmem>>, vector<1x32xf32>,
      %c4_i32_415 = arith.constant 4 : i32
      %519 = arith.addi %494, %c4_i32_415 : i32
      %520 = arith.index_cast %519 : i32 to index
      %521 = memref.load %arg2[%520] : memref<128xi32, #tpu.memory_space<smem>>
      %522 = arith.index_cast %521 : i32 to index
      %c0_416 = arith.constant 0 : index
      %523 = vector.load %arg3[%522, %c0_416] : memref<128x32xf32, #tpu.memory_space<vmem>>, vector<1x32xf32>
      %c4_417 = arith.constant 4 : index
      %c0_418 = arith.constant 0 : index
      %524 = vector.load %arg11[%c4_417, %c0_418] : memref<8x32xf32, #tpu.memory_space<vmem>>, vector<1x32xf32>
      tpu.vector_store %arg11[%c4_417, %c0_418], %523 {strides = array<i32>} : memref<8x32xf32, #tpu.memory_space<vmem>>, vector<1x32xf32>,
      %c5_i32_419 = arith.constant 5 : i32
      %525 = arith.addi %494, %c5_i32_419 : i32
      %526 = arith.index_cast %525 : i32 to index
      %527 = memref.load %arg2[%526] : memref<128xi32, #tpu.memory_space<smem>>
      %528 = arith.index_cast %527 : i32 to index
      %c0_420 = arith.constant 0 : index
      %529 = vector.load %arg3[%528, %c0_420] : memref<128x32xf32, #tpu.memory_space<vmem>>, vector<1x32xf32>
      %c5_421 = arith.constant 5 : index
      %c0_422 = arith.constant 0 : index
      %530 = vector.load %arg11[%c5_421, %c0_422] : memref<8x32xf32, #tpu.memory_space<vmem>>, vector<1x32xf32>
      tpu.vector_store %arg11[%c5_421, %c0_422], %529 {strides = array<i32>} : memref<8x32xf32, #tpu.memory_space<vmem>>, vector<1x32xf32>,
      %c6_i32_423 = arith.constant 6 : i32
      %531 = arith.addi %494, %c6_i32_423 : i32
      %532 = arith.index_cast %531 : i32 to index
      %533 = memref.load %arg2[%532] : memref<128xi32, #tpu.memory_space<smem>>
      %534 = arith.index_cast %533 : i32 to index
      %c0_424 = arith.constant 0 : index
      %535 = vector.load %arg3[%534, %c0_424] : memref<128x32xf32, #tpu.memory_space<vmem>>, vector<1x32xf32>
      %c6_425 = arith.constant 6 : index
      %c0_426 = arith.constant 0 : index
      %536 = vector.load %arg11[%c6_425, %c0_426] : memref<8x32xf32, #tpu.memory_space<vmem>>, vector<1x32xf32>
      tpu.vector_store %arg11[%c6_425, %c0_426], %535 {strides = array<i32>} : memref<8x32xf32, #tpu.memory_space<vmem>>, vector<1x32xf32>,
      %c7_i32_427 = arith.constant 7 : i32
      %537 = arith.addi %494, %c7_i32_427 : i32
      %538 = arith.index_cast %537 : i32 to index
      %539 = memref.load %arg2[%538] : memref<128xi32, #tpu.memory_space<smem>>
      %540 = arith.index_cast %539 : i32 to index
      %c0_428 = arith.constant 0 : index
      %541 = vector.load %arg3[%540, %c0_428] : memref<128x32xf32, #tpu.memory_space<vmem>>, vector<1x32xf32>
      %c7_429 = arith.constant 7 : index
      %c0_430 = arith.constant 0 : index
      %542 = vector.load %arg11[%c7_429, %c0_430] : memref<8x32xf32, #tpu.memory_space<vmem>>, vector<1x32xf32>
      tpu.vector_store %arg11[%c7_429, %c0_430], %541 {strides = array<i32>} : memref<8x32xf32, #tpu.memory_space<vmem>>, vector<1x32xf32>,
    } else {
    }
    %c0_151 = arith.constant 0 : index
    %c0_152 = arith.constant 0 : index
    %196 = vector.load %arg11[%c0_151, %c0_152] : memref<8x32xf32, #tpu.memory_space<vmem>>, vector<8x32xf32>
    %197 = arith.truncf %196 : vector<8x32xf32> to vector<8x32xbf16>
    %c0_153 = arith.constant 0 : index
    %c0_154 = arith.constant 0 : index
    %c0_155 = arith.constant 0 : index
    %198 = vector.load %arg10[%c0_153, %c0_154, %c0_155] : memref<2x8x32xf32, #tpu.memory_space<vmem>>, vector<1x8x32xf32>
    %199 = vector.shape_cast %198 : vector<1x8x32xf32> to vector<8x32xf32>
    %200 = arith.truncf %199 : vector<8x32xf32> to vector<8x32xbf16>
    %c0_156 = arith.constant 0 : index
    %c0_157 = arith.constant 0 : index
    %c0_158 = arith.constant 0 : index
    %201 = vector.load %arg5[%c0_156, %c0_157, %c0_158] : memref<2x32x32xbf16, #tpu.memory_space<vmem>>, vector<1x32x32xbf16>
    %202 = vector.shape_cast %201 : vector<1x32x32xbf16> to vector<32x32xbf16>
    %cst_159 = arith.constant dense<0.000000e+00> : vector<8x32xf32>
    %203 = tpu.matmul %197, %202, %cst_159 {dimension_numbers = #tpu.dot_dimension_numbers<[1], [0], [0], [1], [0, 0, 1, 1], [], []>} : vector<8x32xbf16>, vector<32x32xbf16>, vector<8x32xf32> -> vector<8x32xf32>
    %c0_160 = arith.constant 0 : index
    %c0_161 = arith.constant 0 : index
    %c0_162 = arith.constant 0 : index
    %204 = vector.load %arg6[%c0_160, %c0_161, %c0_162] : memref<2x32x32xbf16, #tpu.memory_space<vmem>>, vector<1x32x32xbf16>
    %205 = vector.shape_cast %204 : vector<1x32x32xbf16> to vector<32x32xbf16>
    %cst_163 = arith.constant dense<0.000000e+00> : vector<8x32xf32>
    %206 = tpu.matmul %200, %205, %cst_163 {dimension_numbers = #tpu.dot_dimension_numbers<[1], [0], [0], [1], [0, 0, 1, 1], [], []>} : vector<8x32xbf16>, vector<32x32xbf16>, vector<8x32xf32> -> vector<8x32xf32>
    %207 = arith.addf %203, %206 : vector<8x32xf32>
    %c0_164 = arith.constant 0 : index
    %c0_165 = arith.constant 0 : index
    %c0_166 = arith.constant 0 : index
    %208 = vector.load %arg7[%c0_164, %c0_165, %c0_166] : memref<2x1x32xf32, #tpu.memory_space<vmem>>, vector<1x1x32xf32>
    %209 = vector.shape_cast %208 : vector<1x1x32xf32> to vector<1x32xf32>
    %210 = vector.broadcast %209 : vector<1x32xf32> to vector<8x32xf32>
    %211 = arith.addf %207, %210 : vector<8x32xf32>
    %212 = math.tanh %211 : vector<8x32xf32>
    %c0_167 = arith.constant 0 : index
    %c0_168 = arith.constant 0 : index
    %c0_169 = arith.constant 0 : index
    %213 = vector.load %arg10[%c0_167, %c0_168, %c0_169] : memref<2x8x32xf32, #tpu.memory_space<vmem>>, vector<1x8x32xf32>
    %214 = vector.shape_cast %213 : vector<1x8x32xf32> to vector<8x32xf32>
    %215 = vector.shape_cast %212 : vector<8x32xf32> to vector<1x8x32xf32>
    tpu.vector_store %arg10[%c0_167, %c0_168, %c0_169], %215 {strides = array<i32>} : memref<2x8x32xf32, #tpu.memory_space<vmem>>, vector<1x8x32xf32>,
    %216 = arith.truncf %212 : vector<8x32xf32> to vector<8x32xbf16>
    %c1_170 = arith.constant 1 : index
    %c0_171 = arith.constant 0 : index
    %c0_172 = arith.constant 0 : index
    %217 = vector.load %arg10[%c1_170, %c0_171, %c0_172] : memref<2x8x32xf32, #tpu.memory_space<vmem>>, vector<1x8x32xf32>
    %218 = vector.shape_cast %217 : vector<1x8x32xf32> to vector<8x32xf32>
    %219 = arith.truncf %218 : vector<8x32xf32> to vector<8x32xbf16>
    %c1_173 = arith.constant 1 : index
    %c0_174 = arith.constant 0 : index
    %c0_175 = arith.constant 0 : index
    %220 = vector.load %arg5[%c1_173, %c0_174, %c0_175] : memref<2x32x32xbf16, #tpu.memory_space<vmem>>, vector<1x32x32xbf16>
    %221 = vector.shape_cast %220 : vector<1x32x32xbf16> to vector<32x32xbf16>
    %cst_176 = arith.constant dense<0.000000e+00> : vector<8x32xf32>
    %222 = tpu.matmul %216, %221, %cst_176 {dimension_numbers = #tpu.dot_dimension_numbers<[1], [0], [0], [1], [0, 0, 1, 1], [], []>} : vector<8x32xbf16>, vector<32x32xbf16>, vector<8x32xf32> -> vector<8x32xf32>
    %c1_177 = arith.constant 1 : index
    %c0_178 = arith.constant 0 : index
    %c0_179 = arith.constant 0 : index
    %223 = vector.load %arg6[%c1_177, %c0_178, %c0_179] : memref<2x32x32xbf16, #tpu.memory_space<vmem>>, vector<1x32x32xbf16>
    %224 = vector.shape_cast %223 : vector<1x32x32xbf16> to vector<32x32xbf16>
    %cst_180 = arith.constant dense<0.000000e+00> : vector<8x32xf32>
    %225 = tpu.matmul %219, %224, %cst_180 {dimension_numbers = #tpu.dot_dimension_numbers<[1], [0], [0], [1], [0, 0, 1, 1], [], []>} : vector<8x32xbf16>, vector<32x32xbf16>, vector<8x32xf32> -> vector<8x32xf32>
    %226 = arith.addf %222, %225 : vector<8x32xf32>
    %c1_181 = arith.constant 1 : index
    %c0_182 = arith.constant 0 : index
    %c0_183 = arith.constant 0 : index
    %227 = vector.load %arg7[%c1_181, %c0_182, %c0_183] : memref<2x1x32xf32, #tpu.memory_space<vmem>>, vector<1x1x32xf32>
    %228 = vector.shape_cast %227 : vector<1x1x32xf32> to vector<1x32xf32>
    %229 = vector.broadcast %228 : vector<1x32xf32> to vector<8x32xf32>
    %230 = arith.addf %226, %229 : vector<8x32xf32>
    %231 = math.tanh %230 : vector<8x32xf32>
    %c1_184 = arith.constant 1 : index
    %c0_185 = arith.constant 0 : index
    %c0_186 = arith.constant 0 : index
    %232 = vector.load %arg10[%c1_184, %c0_185, %c0_186] : memref<2x8x32xf32, #tpu.memory_space<vmem>>, vector<1x8x32xf32>
    %233 = vector.shape_cast %232 : vector<1x8x32xf32> to vector<8x32xf32>
    %234 = vector.shape_cast %231 : vector<8x32xf32> to vector<1x8x32xf32>
    tpu.vector_store %arg10[%c1_184, %c0_185, %c0_186], %234 {strides = array<i32>} : memref<2x8x32xf32, #tpu.memory_space<vmem>>, vector<1x8x32xf32>,
    %235 = arith.truncf %231 : vector<8x32xf32> to vector<8x32xbf16>
    %c0_187 = arith.constant 0 : index
    %c0_188 = arith.constant 0 : index
    %236 = vector.load %arg4[%c0_187, %c0_188] : memref<32x128xbf16, #tpu.memory_space<vmem>>, vector<32x128xbf16>
    %cst_189 = arith.constant dense<0.000000e+00> : vector<8x128xf32>
    %237 = tpu.matmul %235, %236, %cst_189 {dimension_numbers = #tpu.dot_dimension_numbers<[1], [0], [0], [1], [0, 0, 1, 1], [], []>} : vector<8x32xbf16>, vector<32x128xbf16>, vector<8x128xf32> -> vector<8x128xf32>
    %238 = vector.shape_cast %237 : vector<8x128xf32> to vector<8x1x128xf32>
    %c0_190 = arith.constant 0 : index
    %c3 = arith.constant 3 : index
    %c0_191 = arith.constant 0 : index
    %239 = vector.load %arg9[%c0_190, %c3, %c0_191] : memref<8x8x128xf32, #tpu.memory_space<vmem>>, vector<8x1x128xf32>
    tpu.vector_store %arg9[%c0_190, %c3, %c0_191], %238 {strides = array<i32>} : memref<8x8x128xf32, #tpu.memory_space<vmem>>, vector<8x1x128xf32>,
    %c1_i32_192 = arith.constant 1 : i32
    %240 = arith.addi %190, %c1_i32_192 : i32
    %c15_i32_193 = arith.constant 15 : i32
    %241 = arith.minsi %240, %c15_i32_193 : i32
    %c1_i32_194 = arith.constant 1 : i32
    %242 = arith.addi %190, %c1_i32_194 : i32
    %c16_i32_195 = arith.constant 16 : i32
    %243 = arith.cmpi slt, %242, %c16_i32_195 : i32
    %244 = arith.index_cast %241 : i32 to index
    %245 = memref.load %arg1[%244] : memref<16xi32, #tpu.memory_space<smem>>
    %c0_i32_196 = arith.constant 0 : i32
    %246 = arith.cmpi eq, %245, %c0_i32_196 : i32
    %247 = arith.andi %243, %246 : i1
    %248 = arith.extui %247 : i1 to i32
    %c0_i32_197 = arith.constant 0 : i32
    %249 = arith.cmpi ne, %248, %c0_i32_197 : i32
    scf.if %249 {
      %cst_398 = arith.constant -1.000000e+30 : f32
      %494 = vector.broadcast %cst_398 : f32 to vector<8x128xf32>
      %495 = arith.select %5, %237, %494 : vector<8x128xi1>, vector<8x128xf32>
      %cst_399 = arith.constant dense<0xFF800000> : vector<8xf32>
      %496 = vector.multi_reduction <maximumf>, %495, %cst_399 [1] : vector<8x128xf32> to vector<8xf32>
      %497 = vector.shape_cast %496 : vector<8xf32> to vector<8x1xf32>
      %498 = vector.broadcast %497 : vector<8x1xf32> to vector<8x128xf32>
      %499 = arith.cmpf oeq, %495, %498 : vector<8x128xf32>
      %c128_i32 = arith.constant 128 : i32
      %500 = vector.broadcast %c128_i32 : i32 to vector<8x128xi32>
      %501 = arith.select %499, %3, %500 : vector<8x128xi1>, vector<8x128xi32>
      %cst_400 = arith.constant dense<2147483647> : vector<8xi32>
      %502 = vector.multi_reduction <minsi>, %501, %cst_400 [1] : vector<8x128xi32> to vector<8xi32>
      %503 = vector.shape_cast %502 : vector<8xi32> to vector<8x1xi32>
      %504 = vector.broadcast %503 : vector<8x1xi32> to vector<8x128xi32>
      %505 = arith.cmpi eq, %3, %504 : vector<8x128xi32>
      %506 = arith.extui %505 : vector<8x128xi1> to vector<8x128xi32>
      %507 = arith.sitofp %506 : vector<8x128xi32> to vector<8x128xf32>
      %c0_401 = arith.constant 0 : index
      %c0_402 = arith.constant 0 : index
      %508 = vector.load %arg3[%c0_401, %c0_402] : memref<128x32xf32, #tpu.memory_space<vmem>>, vector<128x32xf32>
      %cst_403 = arith.constant dense<0.000000e+00> : vector<8x32xf32>
      %509 = tpu.matmul %507, %508, %cst_403 {dimension_numbers = #tpu.dot_dimension_numbers<[1], [0], [0], [1], [0, 0, 1, 1], [], []>} : vector<8x128xf32>, vector<128x32xf32>, vector<8x32xf32> -> vector<8x32xf32>
      %c0_404 = arith.constant 0 : index
      %c0_405 = arith.constant 0 : index
      %510 = vector.load %arg11[%c0_404, %c0_405] : memref<8x32xf32, #tpu.memory_space<vmem>>, vector<8x32xf32>
      tpu.vector_store %arg11[%c0_404, %c0_405], %509 {strides = array<i32>} : memref<8x32xf32, #tpu.memory_space<vmem>>, vector<8x32xf32>,
    } else {
    }
    %c8_i32_198 = arith.constant 8 : i32
    %250 = arith.muli %arg0, %c8_i32_198 : i32
    %c4_i32 = arith.constant 4 : i32
    %251 = arith.addi %250, %c4_i32 : i32
    %252 = arith.index_cast %251 : i32 to index
    %253 = memref.load %arg1[%252] : memref<16xi32, #tpu.memory_space<smem>>
    %c1_i32_199 = arith.constant 1 : i32
    %254 = arith.cmpi eq, %253, %c1_i32_199 : i32
    %255 = arith.extui %254 : i1 to i32
    %c0_i32_200 = arith.constant 0 : i32
    %256 = arith.cmpi ne, %255, %c0_i32_200 : i32
    scf.if %256 {
      %c8_i32_398 = arith.constant 8 : i32
      %494 = arith.muli %251, %c8_i32_398 : i32
      %c0_i32_399 = arith.constant 0 : i32
      %495 = arith.addi %494, %c0_i32_399 : i32
      %496 = arith.index_cast %495 : i32 to index
      %497 = memref.load %arg2[%496] : memref<128xi32, #tpu.memory_space<smem>>
      %498 = arith.index_cast %497 : i32 to index
      %c0_400 = arith.constant 0 : index
      %499 = vector.load %arg3[%498, %c0_400] : memref<128x32xf32, #tpu.memory_space<vmem>>, vector<1x32xf32>
      %c0_401 = arith.constant 0 : index
      %c0_402 = arith.constant 0 : index
      %500 = vector.load %arg11[%c0_401, %c0_402] : memref<8x32xf32, #tpu.memory_space<vmem>>, vector<1x32xf32>
      tpu.vector_store %arg11[%c0_401, %c0_402], %499 {strides = array<i32>} : memref<8x32xf32, #tpu.memory_space<vmem>>, vector<1x32xf32>,
      %c1_i32_403 = arith.constant 1 : i32
      %501 = arith.addi %494, %c1_i32_403 : i32
      %502 = arith.index_cast %501 : i32 to index
      %503 = memref.load %arg2[%502] : memref<128xi32, #tpu.memory_space<smem>>
      %504 = arith.index_cast %503 : i32 to index
      %c0_404 = arith.constant 0 : index
      %505 = vector.load %arg3[%504, %c0_404] : memref<128x32xf32, #tpu.memory_space<vmem>>, vector<1x32xf32>
      %c1_405 = arith.constant 1 : index
      %c0_406 = arith.constant 0 : index
      %506 = vector.load %arg11[%c1_405, %c0_406] : memref<8x32xf32, #tpu.memory_space<vmem>>, vector<1x32xf32>
      tpu.vector_store %arg11[%c1_405, %c0_406], %505 {strides = array<i32>} : memref<8x32xf32, #tpu.memory_space<vmem>>, vector<1x32xf32>,
      %c2_i32_407 = arith.constant 2 : i32
      %507 = arith.addi %494, %c2_i32_407 : i32
      %508 = arith.index_cast %507 : i32 to index
      %509 = memref.load %arg2[%508] : memref<128xi32, #tpu.memory_space<smem>>
      %510 = arith.index_cast %509 : i32 to index
      %c0_408 = arith.constant 0 : index
      %511 = vector.load %arg3[%510, %c0_408] : memref<128x32xf32, #tpu.memory_space<vmem>>, vector<1x32xf32>
      %c2_409 = arith.constant 2 : index
      %c0_410 = arith.constant 0 : index
      %512 = vector.load %arg11[%c2_409, %c0_410] : memref<8x32xf32, #tpu.memory_space<vmem>>, vector<1x32xf32>
      tpu.vector_store %arg11[%c2_409, %c0_410], %511 {strides = array<i32>} : memref<8x32xf32, #tpu.memory_space<vmem>>, vector<1x32xf32>,
      %c3_i32_411 = arith.constant 3 : i32
      %513 = arith.addi %494, %c3_i32_411 : i32
      %514 = arith.index_cast %513 : i32 to index
      %515 = memref.load %arg2[%514] : memref<128xi32, #tpu.memory_space<smem>>
      %516 = arith.index_cast %515 : i32 to index
      %c0_412 = arith.constant 0 : index
      %517 = vector.load %arg3[%516, %c0_412] : memref<128x32xf32, #tpu.memory_space<vmem>>, vector<1x32xf32>
      %c3_413 = arith.constant 3 : index
      %c0_414 = arith.constant 0 : index
      %518 = vector.load %arg11[%c3_413, %c0_414] : memref<8x32xf32, #tpu.memory_space<vmem>>, vector<1x32xf32>
      tpu.vector_store %arg11[%c3_413, %c0_414], %517 {strides = array<i32>} : memref<8x32xf32, #tpu.memory_space<vmem>>, vector<1x32xf32>,
      %c4_i32_415 = arith.constant 4 : i32
      %519 = arith.addi %494, %c4_i32_415 : i32
      %520 = arith.index_cast %519 : i32 to index
      %521 = memref.load %arg2[%520] : memref<128xi32, #tpu.memory_space<smem>>
      %522 = arith.index_cast %521 : i32 to index
      %c0_416 = arith.constant 0 : index
      %523 = vector.load %arg3[%522, %c0_416] : memref<128x32xf32, #tpu.memory_space<vmem>>, vector<1x32xf32>
      %c4_417 = arith.constant 4 : index
      %c0_418 = arith.constant 0 : index
      %524 = vector.load %arg11[%c4_417, %c0_418] : memref<8x32xf32, #tpu.memory_space<vmem>>, vector<1x32xf32>
      tpu.vector_store %arg11[%c4_417, %c0_418], %523 {strides = array<i32>} : memref<8x32xf32, #tpu.memory_space<vmem>>, vector<1x32xf32>,
      %c5_i32_419 = arith.constant 5 : i32
      %525 = arith.addi %494, %c5_i32_419 : i32
      %526 = arith.index_cast %525 : i32 to index
      %527 = memref.load %arg2[%526] : memref<128xi32, #tpu.memory_space<smem>>
      %528 = arith.index_cast %527 : i32 to index
      %c0_420 = arith.constant 0 : index
      %529 = vector.load %arg3[%528, %c0_420] : memref<128x32xf32, #tpu.memory_space<vmem>>, vector<1x32xf32>
      %c5_421 = arith.constant 5 : index
      %c0_422 = arith.constant 0 : index
      %530 = vector.load %arg11[%c5_421, %c0_422] : memref<8x32xf32, #tpu.memory_space<vmem>>, vector<1x32xf32>
      tpu.vector_store %arg11[%c5_421, %c0_422], %529 {strides = array<i32>} : memref<8x32xf32, #tpu.memory_space<vmem>>, vector<1x32xf32>,
      %c6_i32_423 = arith.constant 6 : i32
      %531 = arith.addi %494, %c6_i32_423 : i32
      %532 = arith.index_cast %531 : i32 to index
      %533 = memref.load %arg2[%532] : memref<128xi32, #tpu.memory_space<smem>>
      %534 = arith.index_cast %533 : i32 to index
      %c0_424 = arith.constant 0 : index
      %535 = vector.load %arg3[%534, %c0_424] : memref<128x32xf32, #tpu.memory_space<vmem>>, vector<1x32xf32>
      %c6_425 = arith.constant 6 : index
      %c0_426 = arith.constant 0 : index
      %536 = vector.load %arg11[%c6_425, %c0_426] : memref<8x32xf32, #tpu.memory_space<vmem>>, vector<1x32xf32>
      tpu.vector_store %arg11[%c6_425, %c0_426], %535 {strides = array<i32>} : memref<8x32xf32, #tpu.memory_space<vmem>>, vector<1x32xf32>,
      %c7_i32_427 = arith.constant 7 : i32
      %537 = arith.addi %494, %c7_i32_427 : i32
      %538 = arith.index_cast %537 : i32 to index
      %539 = memref.load %arg2[%538] : memref<128xi32, #tpu.memory_space<smem>>
      %540 = arith.index_cast %539 : i32 to index
      %c0_428 = arith.constant 0 : index
      %541 = vector.load %arg3[%540, %c0_428] : memref<128x32xf32, #tpu.memory_space<vmem>>, vector<1x32xf32>
      %c7_429 = arith.constant 7 : index
      %c0_430 = arith.constant 0 : index
      %542 = vector.load %arg11[%c7_429, %c0_430] : memref<8x32xf32, #tpu.memory_space<vmem>>, vector<1x32xf32>
      tpu.vector_store %arg11[%c7_429, %c0_430], %541 {strides = array<i32>} : memref<8x32xf32, #tpu.memory_space<vmem>>, vector<1x32xf32>,
    } else {
    }
    %c0_201 = arith.constant 0 : index
    %c0_202 = arith.constant 0 : index
    %257 = vector.load %arg11[%c0_201, %c0_202] : memref<8x32xf32, #tpu.memory_space<vmem>>, vector<8x32xf32>
    %258 = arith.truncf %257 : vector<8x32xf32> to vector<8x32xbf16>
    %c0_203 = arith.constant 0 : index
    %c0_204 = arith.constant 0 : index
    %c0_205 = arith.constant 0 : index
    %259 = vector.load %arg10[%c0_203, %c0_204, %c0_205] : memref<2x8x32xf32, #tpu.memory_space<vmem>>, vector<1x8x32xf32>
    %260 = vector.shape_cast %259 : vector<1x8x32xf32> to vector<8x32xf32>
    %261 = arith.truncf %260 : vector<8x32xf32> to vector<8x32xbf16>
    %c0_206 = arith.constant 0 : index
    %c0_207 = arith.constant 0 : index
    %c0_208 = arith.constant 0 : index
    %262 = vector.load %arg5[%c0_206, %c0_207, %c0_208] : memref<2x32x32xbf16, #tpu.memory_space<vmem>>, vector<1x32x32xbf16>
    %263 = vector.shape_cast %262 : vector<1x32x32xbf16> to vector<32x32xbf16>
    %cst_209 = arith.constant dense<0.000000e+00> : vector<8x32xf32>
    %264 = tpu.matmul %258, %263, %cst_209 {dimension_numbers = #tpu.dot_dimension_numbers<[1], [0], [0], [1], [0, 0, 1, 1], [], []>} : vector<8x32xbf16>, vector<32x32xbf16>, vector<8x32xf32> -> vector<8x32xf32>
    %c0_210 = arith.constant 0 : index
    %c0_211 = arith.constant 0 : index
    %c0_212 = arith.constant 0 : index
    %265 = vector.load %arg6[%c0_210, %c0_211, %c0_212] : memref<2x32x32xbf16, #tpu.memory_space<vmem>>, vector<1x32x32xbf16>
    %266 = vector.shape_cast %265 : vector<1x32x32xbf16> to vector<32x32xbf16>
    %cst_213 = arith.constant dense<0.000000e+00> : vector<8x32xf32>
    %267 = tpu.matmul %261, %266, %cst_213 {dimension_numbers = #tpu.dot_dimension_numbers<[1], [0], [0], [1], [0, 0, 1, 1], [], []>} : vector<8x32xbf16>, vector<32x32xbf16>, vector<8x32xf32> -> vector<8x32xf32>
    %268 = arith.addf %264, %267 : vector<8x32xf32>
    %c0_214 = arith.constant 0 : index
    %c0_215 = arith.constant 0 : index
    %c0_216 = arith.constant 0 : index
    %269 = vector.load %arg7[%c0_214, %c0_215, %c0_216] : memref<2x1x32xf32, #tpu.memory_space<vmem>>, vector<1x1x32xf32>
    %270 = vector.shape_cast %269 : vector<1x1x32xf32> to vector<1x32xf32>
    %271 = vector.broadcast %270 : vector<1x32xf32> to vector<8x32xf32>
    %272 = arith.addf %268, %271 : vector<8x32xf32>
    %273 = math.tanh %272 : vector<8x32xf32>
    %c0_217 = arith.constant 0 : index
    %c0_218 = arith.constant 0 : index
    %c0_219 = arith.constant 0 : index
    %274 = vector.load %arg10[%c0_217, %c0_218, %c0_219] : memref<2x8x32xf32, #tpu.memory_space<vmem>>, vector<1x8x32xf32>
    %275 = vector.shape_cast %274 : vector<1x8x32xf32> to vector<8x32xf32>
    %276 = vector.shape_cast %273 : vector<8x32xf32> to vector<1x8x32xf32>
    tpu.vector_store %arg10[%c0_217, %c0_218, %c0_219], %276 {strides = array<i32>} : memref<2x8x32xf32, #tpu.memory_space<vmem>>, vector<1x8x32xf32>,
    %277 = arith.truncf %273 : vector<8x32xf32> to vector<8x32xbf16>
    %c1_220 = arith.constant 1 : index
    %c0_221 = arith.constant 0 : index
    %c0_222 = arith.constant 0 : index
    %278 = vector.load %arg10[%c1_220, %c0_221, %c0_222] : memref<2x8x32xf32, #tpu.memory_space<vmem>>, vector<1x8x32xf32>
    %279 = vector.shape_cast %278 : vector<1x8x32xf32> to vector<8x32xf32>
    %280 = arith.truncf %279 : vector<8x32xf32> to vector<8x32xbf16>
    %c1_223 = arith.constant 1 : index
    %c0_224 = arith.constant 0 : index
    %c0_225 = arith.constant 0 : index
    %281 = vector.load %arg5[%c1_223, %c0_224, %c0_225] : memref<2x32x32xbf16, #tpu.memory_space<vmem>>, vector<1x32x32xbf16>
    %282 = vector.shape_cast %281 : vector<1x32x32xbf16> to vector<32x32xbf16>
    %cst_226 = arith.constant dense<0.000000e+00> : vector<8x32xf32>
    %283 = tpu.matmul %277, %282, %cst_226 {dimension_numbers = #tpu.dot_dimension_numbers<[1], [0], [0], [1], [0, 0, 1, 1], [], []>} : vector<8x32xbf16>, vector<32x32xbf16>, vector<8x32xf32> -> vector<8x32xf32>
    %c1_227 = arith.constant 1 : index
    %c0_228 = arith.constant 0 : index
    %c0_229 = arith.constant 0 : index
    %284 = vector.load %arg6[%c1_227, %c0_228, %c0_229] : memref<2x32x32xbf16, #tpu.memory_space<vmem>>, vector<1x32x32xbf16>
    %285 = vector.shape_cast %284 : vector<1x32x32xbf16> to vector<32x32xbf16>
    %cst_230 = arith.constant dense<0.000000e+00> : vector<8x32xf32>
    %286 = tpu.matmul %280, %285, %cst_230 {dimension_numbers = #tpu.dot_dimension_numbers<[1], [0], [0], [1], [0, 0, 1, 1], [], []>} : vector<8x32xbf16>, vector<32x32xbf16>, vector<8x32xf32> -> vector<8x32xf32>
    %287 = arith.addf %283, %286 : vector<8x32xf32>
    %c1_231 = arith.constant 1 : index
    %c0_232 = arith.constant 0 : index
    %c0_233 = arith.constant 0 : index
    %288 = vector.load %arg7[%c1_231, %c0_232, %c0_233] : memref<2x1x32xf32, #tpu.memory_space<vmem>>, vector<1x1x32xf32>
    %289 = vector.shape_cast %288 : vector<1x1x32xf32> to vector<1x32xf32>
    %290 = vector.broadcast %289 : vector<1x32xf32> to vector<8x32xf32>
    %291 = arith.addf %287, %290 : vector<8x32xf32>
    %292 = math.tanh %291 : vector<8x32xf32>
    %c1_234 = arith.constant 1 : index
    %c0_235 = arith.constant 0 : index
    %c0_236 = arith.constant 0 : index
    %293 = vector.load %arg10[%c1_234, %c0_235, %c0_236] : memref<2x8x32xf32, #tpu.memory_space<vmem>>, vector<1x8x32xf32>
    %294 = vector.shape_cast %293 : vector<1x8x32xf32> to vector<8x32xf32>
    %295 = vector.shape_cast %292 : vector<8x32xf32> to vector<1x8x32xf32>
    tpu.vector_store %arg10[%c1_234, %c0_235, %c0_236], %295 {strides = array<i32>} : memref<2x8x32xf32, #tpu.memory_space<vmem>>, vector<1x8x32xf32>,
    %296 = arith.truncf %292 : vector<8x32xf32> to vector<8x32xbf16>
    %c0_237 = arith.constant 0 : index
    %c0_238 = arith.constant 0 : index
    %297 = vector.load %arg4[%c0_237, %c0_238] : memref<32x128xbf16, #tpu.memory_space<vmem>>, vector<32x128xbf16>
    %cst_239 = arith.constant dense<0.000000e+00> : vector<8x128xf32>
    %298 = tpu.matmul %296, %297, %cst_239 {dimension_numbers = #tpu.dot_dimension_numbers<[1], [0], [0], [1], [0, 0, 1, 1], [], []>} : vector<8x32xbf16>, vector<32x128xbf16>, vector<8x128xf32> -> vector<8x128xf32>
    %299 = vector.shape_cast %298 : vector<8x128xf32> to vector<8x1x128xf32>
    %c0_240 = arith.constant 0 : index
    %c4 = arith.constant 4 : index
    %c0_241 = arith.constant 0 : index
    %300 = vector.load %arg9[%c0_240, %c4, %c0_241] : memref<8x8x128xf32, #tpu.memory_space<vmem>>, vector<8x1x128xf32>
    tpu.vector_store %arg9[%c0_240, %c4, %c0_241], %299 {strides = array<i32>} : memref<8x8x128xf32, #tpu.memory_space<vmem>>, vector<8x1x128xf32>,
    %c1_i32_242 = arith.constant 1 : i32
    %301 = arith.addi %251, %c1_i32_242 : i32
    %c15_i32_243 = arith.constant 15 : i32
    %302 = arith.minsi %301, %c15_i32_243 : i32
    %c1_i32_244 = arith.constant 1 : i32
    %303 = arith.addi %251, %c1_i32_244 : i32
    %c16_i32_245 = arith.constant 16 : i32
    %304 = arith.cmpi slt, %303, %c16_i32_245 : i32
    %305 = arith.index_cast %302 : i32 to index
    %306 = memref.load %arg1[%305] : memref<16xi32, #tpu.memory_space<smem>>
    %c0_i32_246 = arith.constant 0 : i32
    %307 = arith.cmpi eq, %306, %c0_i32_246 : i32
    %308 = arith.andi %304, %307 : i1
    %309 = arith.extui %308 : i1 to i32
    %c0_i32_247 = arith.constant 0 : i32
    %310 = arith.cmpi ne, %309, %c0_i32_247 : i32
    scf.if %310 {
      %cst_398 = arith.constant -1.000000e+30 : f32
      %494 = vector.broadcast %cst_398 : f32 to vector<8x128xf32>
      %495 = arith.select %5, %298, %494 : vector<8x128xi1>, vector<8x128xf32>
      %cst_399 = arith.constant dense<0xFF800000> : vector<8xf32>
      %496 = vector.multi_reduction <maximumf>, %495, %cst_399 [1] : vector<8x128xf32> to vector<8xf32>
      %497 = vector.shape_cast %496 : vector<8xf32> to vector<8x1xf32>
      %498 = vector.broadcast %497 : vector<8x1xf32> to vector<8x128xf32>
      %499 = arith.cmpf oeq, %495, %498 : vector<8x128xf32>
      %c128_i32 = arith.constant 128 : i32
      %500 = vector.broadcast %c128_i32 : i32 to vector<8x128xi32>
      %501 = arith.select %499, %3, %500 : vector<8x128xi1>, vector<8x128xi32>
      %cst_400 = arith.constant dense<2147483647> : vector<8xi32>
      %502 = vector.multi_reduction <minsi>, %501, %cst_400 [1] : vector<8x128xi32> to vector<8xi32>
      %503 = vector.shape_cast %502 : vector<8xi32> to vector<8x1xi32>
      %504 = vector.broadcast %503 : vector<8x1xi32> to vector<8x128xi32>
      %505 = arith.cmpi eq, %3, %504 : vector<8x128xi32>
      %506 = arith.extui %505 : vector<8x128xi1> to vector<8x128xi32>
      %507 = arith.sitofp %506 : vector<8x128xi32> to vector<8x128xf32>
      %c0_401 = arith.constant 0 : index
      %c0_402 = arith.constant 0 : index
      %508 = vector.load %arg3[%c0_401, %c0_402] : memref<128x32xf32, #tpu.memory_space<vmem>>, vector<128x32xf32>
      %cst_403 = arith.constant dense<0.000000e+00> : vector<8x32xf32>
      %509 = tpu.matmul %507, %508, %cst_403 {dimension_numbers = #tpu.dot_dimension_numbers<[1], [0], [0], [1], [0, 0, 1, 1], [], []>} : vector<8x128xf32>, vector<128x32xf32>, vector<8x32xf32> -> vector<8x32xf32>
      %c0_404 = arith.constant 0 : index
      %c0_405 = arith.constant 0 : index
      %510 = vector.load %arg11[%c0_404, %c0_405] : memref<8x32xf32, #tpu.memory_space<vmem>>, vector<8x32xf32>
      tpu.vector_store %arg11[%c0_404, %c0_405], %509 {strides = array<i32>} : memref<8x32xf32, #tpu.memory_space<vmem>>, vector<8x32xf32>,
    } else {
    }
    %c8_i32_248 = arith.constant 8 : i32
    %311 = arith.muli %arg0, %c8_i32_248 : i32
    %c5_i32 = arith.constant 5 : i32
    %312 = arith.addi %311, %c5_i32 : i32
    %313 = arith.index_cast %312 : i32 to index
    %314 = memref.load %arg1[%313] : memref<16xi32, #tpu.memory_space<smem>>
    %c1_i32_249 = arith.constant 1 : i32
    %315 = arith.cmpi eq, %314, %c1_i32_249 : i32
    %316 = arith.extui %315 : i1 to i32
    %c0_i32_250 = arith.constant 0 : i32
    %317 = arith.cmpi ne, %316, %c0_i32_250 : i32
    scf.if %317 {
      %c8_i32_398 = arith.constant 8 : i32
      %494 = arith.muli %312, %c8_i32_398 : i32
      %c0_i32_399 = arith.constant 0 : i32
      %495 = arith.addi %494, %c0_i32_399 : i32
      %496 = arith.index_cast %495 : i32 to index
      %497 = memref.load %arg2[%496] : memref<128xi32, #tpu.memory_space<smem>>
      %498 = arith.index_cast %497 : i32 to index
      %c0_400 = arith.constant 0 : index
      %499 = vector.load %arg3[%498, %c0_400] : memref<128x32xf32, #tpu.memory_space<vmem>>, vector<1x32xf32>
      %c0_401 = arith.constant 0 : index
      %c0_402 = arith.constant 0 : index
      %500 = vector.load %arg11[%c0_401, %c0_402] : memref<8x32xf32, #tpu.memory_space<vmem>>, vector<1x32xf32>
      tpu.vector_store %arg11[%c0_401, %c0_402], %499 {strides = array<i32>} : memref<8x32xf32, #tpu.memory_space<vmem>>, vector<1x32xf32>,
      %c1_i32_403 = arith.constant 1 : i32
      %501 = arith.addi %494, %c1_i32_403 : i32
      %502 = arith.index_cast %501 : i32 to index
      %503 = memref.load %arg2[%502] : memref<128xi32, #tpu.memory_space<smem>>
      %504 = arith.index_cast %503 : i32 to index
      %c0_404 = arith.constant 0 : index
      %505 = vector.load %arg3[%504, %c0_404] : memref<128x32xf32, #tpu.memory_space<vmem>>, vector<1x32xf32>
      %c1_405 = arith.constant 1 : index
      %c0_406 = arith.constant 0 : index
      %506 = vector.load %arg11[%c1_405, %c0_406] : memref<8x32xf32, #tpu.memory_space<vmem>>, vector<1x32xf32>
      tpu.vector_store %arg11[%c1_405, %c0_406], %505 {strides = array<i32>} : memref<8x32xf32, #tpu.memory_space<vmem>>, vector<1x32xf32>,
      %c2_i32_407 = arith.constant 2 : i32
      %507 = arith.addi %494, %c2_i32_407 : i32
      %508 = arith.index_cast %507 : i32 to index
      %509 = memref.load %arg2[%508] : memref<128xi32, #tpu.memory_space<smem>>
      %510 = arith.index_cast %509 : i32 to index
      %c0_408 = arith.constant 0 : index
      %511 = vector.load %arg3[%510, %c0_408] : memref<128x32xf32, #tpu.memory_space<vmem>>, vector<1x32xf32>
      %c2_409 = arith.constant 2 : index
      %c0_410 = arith.constant 0 : index
      %512 = vector.load %arg11[%c2_409, %c0_410] : memref<8x32xf32, #tpu.memory_space<vmem>>, vector<1x32xf32>
      tpu.vector_store %arg11[%c2_409, %c0_410], %511 {strides = array<i32>} : memref<8x32xf32, #tpu.memory_space<vmem>>, vector<1x32xf32>,
      %c3_i32_411 = arith.constant 3 : i32
      %513 = arith.addi %494, %c3_i32_411 : i32
      %514 = arith.index_cast %513 : i32 to index
      %515 = memref.load %arg2[%514] : memref<128xi32, #tpu.memory_space<smem>>
      %516 = arith.index_cast %515 : i32 to index
      %c0_412 = arith.constant 0 : index
      %517 = vector.load %arg3[%516, %c0_412] : memref<128x32xf32, #tpu.memory_space<vmem>>, vector<1x32xf32>
      %c3_413 = arith.constant 3 : index
      %c0_414 = arith.constant 0 : index
      %518 = vector.load %arg11[%c3_413, %c0_414] : memref<8x32xf32, #tpu.memory_space<vmem>>, vector<1x32xf32>
      tpu.vector_store %arg11[%c3_413, %c0_414], %517 {strides = array<i32>} : memref<8x32xf32, #tpu.memory_space<vmem>>, vector<1x32xf32>,
      %c4_i32_415 = arith.constant 4 : i32
      %519 = arith.addi %494, %c4_i32_415 : i32
      %520 = arith.index_cast %519 : i32 to index
      %521 = memref.load %arg2[%520] : memref<128xi32, #tpu.memory_space<smem>>
      %522 = arith.index_cast %521 : i32 to index
      %c0_416 = arith.constant 0 : index
      %523 = vector.load %arg3[%522, %c0_416] : memref<128x32xf32, #tpu.memory_space<vmem>>, vector<1x32xf32>
      %c4_417 = arith.constant 4 : index
      %c0_418 = arith.constant 0 : index
      %524 = vector.load %arg11[%c4_417, %c0_418] : memref<8x32xf32, #tpu.memory_space<vmem>>, vector<1x32xf32>
      tpu.vector_store %arg11[%c4_417, %c0_418], %523 {strides = array<i32>} : memref<8x32xf32, #tpu.memory_space<vmem>>, vector<1x32xf32>,
      %c5_i32_419 = arith.constant 5 : i32
      %525 = arith.addi %494, %c5_i32_419 : i32
      %526 = arith.index_cast %525 : i32 to index
      %527 = memref.load %arg2[%526] : memref<128xi32, #tpu.memory_space<smem>>
      %528 = arith.index_cast %527 : i32 to index
      %c0_420 = arith.constant 0 : index
      %529 = vector.load %arg3[%528, %c0_420] : memref<128x32xf32, #tpu.memory_space<vmem>>, vector<1x32xf32>
      %c5_421 = arith.constant 5 : index
      %c0_422 = arith.constant 0 : index
      %530 = vector.load %arg11[%c5_421, %c0_422] : memref<8x32xf32, #tpu.memory_space<vmem>>, vector<1x32xf32>
      tpu.vector_store %arg11[%c5_421, %c0_422], %529 {strides = array<i32>} : memref<8x32xf32, #tpu.memory_space<vmem>>, vector<1x32xf32>,
      %c6_i32_423 = arith.constant 6 : i32
      %531 = arith.addi %494, %c6_i32_423 : i32
      %532 = arith.index_cast %531 : i32 to index
      %533 = memref.load %arg2[%532] : memref<128xi32, #tpu.memory_space<smem>>
      %534 = arith.index_cast %533 : i32 to index
      %c0_424 = arith.constant 0 : index
      %535 = vector.load %arg3[%534, %c0_424] : memref<128x32xf32, #tpu.memory_space<vmem>>, vector<1x32xf32>
      %c6_425 = arith.constant 6 : index
      %c0_426 = arith.constant 0 : index
      %536 = vector.load %arg11[%c6_425, %c0_426] : memref<8x32xf32, #tpu.memory_space<vmem>>, vector<1x32xf32>
      tpu.vector_store %arg11[%c6_425, %c0_426], %535 {strides = array<i32>} : memref<8x32xf32, #tpu.memory_space<vmem>>, vector<1x32xf32>,
      %c7_i32_427 = arith.constant 7 : i32
      %537 = arith.addi %494, %c7_i32_427 : i32
      %538 = arith.index_cast %537 : i32 to index
      %539 = memref.load %arg2[%538] : memref<128xi32, #tpu.memory_space<smem>>
      %540 = arith.index_cast %539 : i32 to index
      %c0_428 = arith.constant 0 : index
      %541 = vector.load %arg3[%540, %c0_428] : memref<128x32xf32, #tpu.memory_space<vmem>>, vector<1x32xf32>
      %c7_429 = arith.constant 7 : index
      %c0_430 = arith.constant 0 : index
      %542 = vector.load %arg11[%c7_429, %c0_430] : memref<8x32xf32, #tpu.memory_space<vmem>>, vector<1x32xf32>
      tpu.vector_store %arg11[%c7_429, %c0_430], %541 {strides = array<i32>} : memref<8x32xf32, #tpu.memory_space<vmem>>, vector<1x32xf32>,
    } else {
    }
    %c0_251 = arith.constant 0 : index
    %c0_252 = arith.constant 0 : index
    %318 = vector.load %arg11[%c0_251, %c0_252] : memref<8x32xf32, #tpu.memory_space<vmem>>, vector<8x32xf32>
    %319 = arith.truncf %318 : vector<8x32xf32> to vector<8x32xbf16>
    %c0_253 = arith.constant 0 : index
    %c0_254 = arith.constant 0 : index
    %c0_255 = arith.constant 0 : index
    %320 = vector.load %arg10[%c0_253, %c0_254, %c0_255] : memref<2x8x32xf32, #tpu.memory_space<vmem>>, vector<1x8x32xf32>
    %321 = vector.shape_cast %320 : vector<1x8x32xf32> to vector<8x32xf32>
    %322 = arith.truncf %321 : vector<8x32xf32> to vector<8x32xbf16>
    %c0_256 = arith.constant 0 : index
    %c0_257 = arith.constant 0 : index
    %c0_258 = arith.constant 0 : index
    %323 = vector.load %arg5[%c0_256, %c0_257, %c0_258] : memref<2x32x32xbf16, #tpu.memory_space<vmem>>, vector<1x32x32xbf16>
    %324 = vector.shape_cast %323 : vector<1x32x32xbf16> to vector<32x32xbf16>
    %cst_259 = arith.constant dense<0.000000e+00> : vector<8x32xf32>
    %325 = tpu.matmul %319, %324, %cst_259 {dimension_numbers = #tpu.dot_dimension_numbers<[1], [0], [0], [1], [0, 0, 1, 1], [], []>} : vector<8x32xbf16>, vector<32x32xbf16>, vector<8x32xf32> -> vector<8x32xf32>
    %c0_260 = arith.constant 0 : index
    %c0_261 = arith.constant 0 : index
    %c0_262 = arith.constant 0 : index
    %326 = vector.load %arg6[%c0_260, %c0_261, %c0_262] : memref<2x32x32xbf16, #tpu.memory_space<vmem>>, vector<1x32x32xbf16>
    %327 = vector.shape_cast %326 : vector<1x32x32xbf16> to vector<32x32xbf16>
    %cst_263 = arith.constant dense<0.000000e+00> : vector<8x32xf32>
    %328 = tpu.matmul %322, %327, %cst_263 {dimension_numbers = #tpu.dot_dimension_numbers<[1], [0], [0], [1], [0, 0, 1, 1], [], []>} : vector<8x32xbf16>, vector<32x32xbf16>, vector<8x32xf32> -> vector<8x32xf32>
    %329 = arith.addf %325, %328 : vector<8x32xf32>
    %c0_264 = arith.constant 0 : index
    %c0_265 = arith.constant 0 : index
    %c0_266 = arith.constant 0 : index
    %330 = vector.load %arg7[%c0_264, %c0_265, %c0_266] : memref<2x1x32xf32, #tpu.memory_space<vmem>>, vector<1x1x32xf32>
    %331 = vector.shape_cast %330 : vector<1x1x32xf32> to vector<1x32xf32>
    %332 = vector.broadcast %331 : vector<1x32xf32> to vector<8x32xf32>
    %333 = arith.addf %329, %332 : vector<8x32xf32>
    %334 = math.tanh %333 : vector<8x32xf32>
    %c0_267 = arith.constant 0 : index
    %c0_268 = arith.constant 0 : index
    %c0_269 = arith.constant 0 : index
    %335 = vector.load %arg10[%c0_267, %c0_268, %c0_269] : memref<2x8x32xf32, #tpu.memory_space<vmem>>, vector<1x8x32xf32>
    %336 = vector.shape_cast %335 : vector<1x8x32xf32> to vector<8x32xf32>
    %337 = vector.shape_cast %334 : vector<8x32xf32> to vector<1x8x32xf32>
    tpu.vector_store %arg10[%c0_267, %c0_268, %c0_269], %337 {strides = array<i32>} : memref<2x8x32xf32, #tpu.memory_space<vmem>>, vector<1x8x32xf32>,
    %338 = arith.truncf %334 : vector<8x32xf32> to vector<8x32xbf16>
    %c1_270 = arith.constant 1 : index
    %c0_271 = arith.constant 0 : index
    %c0_272 = arith.constant 0 : index
    %339 = vector.load %arg10[%c1_270, %c0_271, %c0_272] : memref<2x8x32xf32, #tpu.memory_space<vmem>>, vector<1x8x32xf32>
    %340 = vector.shape_cast %339 : vector<1x8x32xf32> to vector<8x32xf32>
    %341 = arith.truncf %340 : vector<8x32xf32> to vector<8x32xbf16>
    %c1_273 = arith.constant 1 : index
    %c0_274 = arith.constant 0 : index
    %c0_275 = arith.constant 0 : index
    %342 = vector.load %arg5[%c1_273, %c0_274, %c0_275] : memref<2x32x32xbf16, #tpu.memory_space<vmem>>, vector<1x32x32xbf16>
    %343 = vector.shape_cast %342 : vector<1x32x32xbf16> to vector<32x32xbf16>
    %cst_276 = arith.constant dense<0.000000e+00> : vector<8x32xf32>
    %344 = tpu.matmul %338, %343, %cst_276 {dimension_numbers = #tpu.dot_dimension_numbers<[1], [0], [0], [1], [0, 0, 1, 1], [], []>} : vector<8x32xbf16>, vector<32x32xbf16>, vector<8x32xf32> -> vector<8x32xf32>
    %c1_277 = arith.constant 1 : index
    %c0_278 = arith.constant 0 : index
    %c0_279 = arith.constant 0 : index
    %345 = vector.load %arg6[%c1_277, %c0_278, %c0_279] : memref<2x32x32xbf16, #tpu.memory_space<vmem>>, vector<1x32x32xbf16>
    %346 = vector.shape_cast %345 : vector<1x32x32xbf16> to vector<32x32xbf16>
    %cst_280 = arith.constant dense<0.000000e+00> : vector<8x32xf32>
    %347 = tpu.matmul %341, %346, %cst_280 {dimension_numbers = #tpu.dot_dimension_numbers<[1], [0], [0], [1], [0, 0, 1, 1], [], []>} : vector<8x32xbf16>, vector<32x32xbf16>, vector<8x32xf32> -> vector<8x32xf32>
    %348 = arith.addf %344, %347 : vector<8x32xf32>
    %c1_281 = arith.constant 1 : index
    %c0_282 = arith.constant 0 : index
    %c0_283 = arith.constant 0 : index
    %349 = vector.load %arg7[%c1_281, %c0_282, %c0_283] : memref<2x1x32xf32, #tpu.memory_space<vmem>>, vector<1x1x32xf32>
    %350 = vector.shape_cast %349 : vector<1x1x32xf32> to vector<1x32xf32>
    %351 = vector.broadcast %350 : vector<1x32xf32> to vector<8x32xf32>
    %352 = arith.addf %348, %351 : vector<8x32xf32>
    %353 = math.tanh %352 : vector<8x32xf32>
    %c1_284 = arith.constant 1 : index
    %c0_285 = arith.constant 0 : index
    %c0_286 = arith.constant 0 : index
    %354 = vector.load %arg10[%c1_284, %c0_285, %c0_286] : memref<2x8x32xf32, #tpu.memory_space<vmem>>, vector<1x8x32xf32>
    %355 = vector.shape_cast %354 : vector<1x8x32xf32> to vector<8x32xf32>
    %356 = vector.shape_cast %353 : vector<8x32xf32> to vector<1x8x32xf32>
    tpu.vector_store %arg10[%c1_284, %c0_285, %c0_286], %356 {strides = array<i32>} : memref<2x8x32xf32, #tpu.memory_space<vmem>>, vector<1x8x32xf32>,
    %357 = arith.truncf %353 : vector<8x32xf32> to vector<8x32xbf16>
    %c0_287 = arith.constant 0 : index
    %c0_288 = arith.constant 0 : index
    %358 = vector.load %arg4[%c0_287, %c0_288] : memref<32x128xbf16, #tpu.memory_space<vmem>>, vector<32x128xbf16>
    %cst_289 = arith.constant dense<0.000000e+00> : vector<8x128xf32>
    %359 = tpu.matmul %357, %358, %cst_289 {dimension_numbers = #tpu.dot_dimension_numbers<[1], [0], [0], [1], [0, 0, 1, 1], [], []>} : vector<8x32xbf16>, vector<32x128xbf16>, vector<8x128xf32> -> vector<8x128xf32>
    %360 = vector.shape_cast %359 : vector<8x128xf32> to vector<8x1x128xf32>
    %c0_290 = arith.constant 0 : index
    %c5 = arith.constant 5 : index
    %c0_291 = arith.constant 0 : index
    %361 = vector.load %arg9[%c0_290, %c5, %c0_291] : memref<8x8x128xf32, #tpu.memory_space<vmem>>, vector<8x1x128xf32>
    tpu.vector_store %arg9[%c0_290, %c5, %c0_291], %360 {strides = array<i32>} : memref<8x8x128xf32, #tpu.memory_space<vmem>>, vector<8x1x128xf32>,
    %c1_i32_292 = arith.constant 1 : i32
    %362 = arith.addi %312, %c1_i32_292 : i32
    %c15_i32_293 = arith.constant 15 : i32
    %363 = arith.minsi %362, %c15_i32_293 : i32
    %c1_i32_294 = arith.constant 1 : i32
    %364 = arith.addi %312, %c1_i32_294 : i32
    %c16_i32_295 = arith.constant 16 : i32
    %365 = arith.cmpi slt, %364, %c16_i32_295 : i32
    %366 = arith.index_cast %363 : i32 to index
    %367 = memref.load %arg1[%366] : memref<16xi32, #tpu.memory_space<smem>>
    %c0_i32_296 = arith.constant 0 : i32
    %368 = arith.cmpi eq, %367, %c0_i32_296 : i32
    %369 = arith.andi %365, %368 : i1
    %370 = arith.extui %369 : i1 to i32
    %c0_i32_297 = arith.constant 0 : i32
    %371 = arith.cmpi ne, %370, %c0_i32_297 : i32
    scf.if %371 {
      %cst_398 = arith.constant -1.000000e+30 : f32
      %494 = vector.broadcast %cst_398 : f32 to vector<8x128xf32>
      %495 = arith.select %5, %359, %494 : vector<8x128xi1>, vector<8x128xf32>
      %cst_399 = arith.constant dense<0xFF800000> : vector<8xf32>
      %496 = vector.multi_reduction <maximumf>, %495, %cst_399 [1] : vector<8x128xf32> to vector<8xf32>
      %497 = vector.shape_cast %496 : vector<8xf32> to vector<8x1xf32>
      %498 = vector.broadcast %497 : vector<8x1xf32> to vector<8x128xf32>
      %499 = arith.cmpf oeq, %495, %498 : vector<8x128xf32>
      %c128_i32 = arith.constant 128 : i32
      %500 = vector.broadcast %c128_i32 : i32 to vector<8x128xi32>
      %501 = arith.select %499, %3, %500 : vector<8x128xi1>, vector<8x128xi32>
      %cst_400 = arith.constant dense<2147483647> : vector<8xi32>
      %502 = vector.multi_reduction <minsi>, %501, %cst_400 [1] : vector<8x128xi32> to vector<8xi32>
      %503 = vector.shape_cast %502 : vector<8xi32> to vector<8x1xi32>
      %504 = vector.broadcast %503 : vector<8x1xi32> to vector<8x128xi32>
      %505 = arith.cmpi eq, %3, %504 : vector<8x128xi32>
      %506 = arith.extui %505 : vector<8x128xi1> to vector<8x128xi32>
      %507 = arith.sitofp %506 : vector<8x128xi32> to vector<8x128xf32>
      %c0_401 = arith.constant 0 : index
      %c0_402 = arith.constant 0 : index
      %508 = vector.load %arg3[%c0_401, %c0_402] : memref<128x32xf32, #tpu.memory_space<vmem>>, vector<128x32xf32>
      %cst_403 = arith.constant dense<0.000000e+00> : vector<8x32xf32>
      %509 = tpu.matmul %507, %508, %cst_403 {dimension_numbers = #tpu.dot_dimension_numbers<[1], [0], [0], [1], [0, 0, 1, 1], [], []>} : vector<8x128xf32>, vector<128x32xf32>, vector<8x32xf32> -> vector<8x32xf32>
      %c0_404 = arith.constant 0 : index
      %c0_405 = arith.constant 0 : index
      %510 = vector.load %arg11[%c0_404, %c0_405] : memref<8x32xf32, #tpu.memory_space<vmem>>, vector<8x32xf32>
      tpu.vector_store %arg11[%c0_404, %c0_405], %509 {strides = array<i32>} : memref<8x32xf32, #tpu.memory_space<vmem>>, vector<8x32xf32>,
    } else {
    }
    %c8_i32_298 = arith.constant 8 : i32
    %372 = arith.muli %arg0, %c8_i32_298 : i32
    %c6_i32 = arith.constant 6 : i32
    %373 = arith.addi %372, %c6_i32 : i32
    %374 = arith.index_cast %373 : i32 to index
    %375 = memref.load %arg1[%374] : memref<16xi32, #tpu.memory_space<smem>>
    %c1_i32_299 = arith.constant 1 : i32
    %376 = arith.cmpi eq, %375, %c1_i32_299 : i32
    %377 = arith.extui %376 : i1 to i32
    %c0_i32_300 = arith.constant 0 : i32
    %378 = arith.cmpi ne, %377, %c0_i32_300 : i32
    scf.if %378 {
      %c8_i32_398 = arith.constant 8 : i32
      %494 = arith.muli %373, %c8_i32_398 : i32
      %c0_i32_399 = arith.constant 0 : i32
      %495 = arith.addi %494, %c0_i32_399 : i32
      %496 = arith.index_cast %495 : i32 to index
      %497 = memref.load %arg2[%496] : memref<128xi32, #tpu.memory_space<smem>>
      %498 = arith.index_cast %497 : i32 to index
      %c0_400 = arith.constant 0 : index
      %499 = vector.load %arg3[%498, %c0_400] : memref<128x32xf32, #tpu.memory_space<vmem>>, vector<1x32xf32>
      %c0_401 = arith.constant 0 : index
      %c0_402 = arith.constant 0 : index
      %500 = vector.load %arg11[%c0_401, %c0_402] : memref<8x32xf32, #tpu.memory_space<vmem>>, vector<1x32xf32>
      tpu.vector_store %arg11[%c0_401, %c0_402], %499 {strides = array<i32>} : memref<8x32xf32, #tpu.memory_space<vmem>>, vector<1x32xf32>,
      %c1_i32_403 = arith.constant 1 : i32
      %501 = arith.addi %494, %c1_i32_403 : i32
      %502 = arith.index_cast %501 : i32 to index
      %503 = memref.load %arg2[%502] : memref<128xi32, #tpu.memory_space<smem>>
      %504 = arith.index_cast %503 : i32 to index
      %c0_404 = arith.constant 0 : index
      %505 = vector.load %arg3[%504, %c0_404] : memref<128x32xf32, #tpu.memory_space<vmem>>, vector<1x32xf32>
      %c1_405 = arith.constant 1 : index
      %c0_406 = arith.constant 0 : index
      %506 = vector.load %arg11[%c1_405, %c0_406] : memref<8x32xf32, #tpu.memory_space<vmem>>, vector<1x32xf32>
      tpu.vector_store %arg11[%c1_405, %c0_406], %505 {strides = array<i32>} : memref<8x32xf32, #tpu.memory_space<vmem>>, vector<1x32xf32>,
      %c2_i32_407 = arith.constant 2 : i32
      %507 = arith.addi %494, %c2_i32_407 : i32
      %508 = arith.index_cast %507 : i32 to index
      %509 = memref.load %arg2[%508] : memref<128xi32, #tpu.memory_space<smem>>
      %510 = arith.index_cast %509 : i32 to index
      %c0_408 = arith.constant 0 : index
      %511 = vector.load %arg3[%510, %c0_408] : memref<128x32xf32, #tpu.memory_space<vmem>>, vector<1x32xf32>
      %c2_409 = arith.constant 2 : index
      %c0_410 = arith.constant 0 : index
      %512 = vector.load %arg11[%c2_409, %c0_410] : memref<8x32xf32, #tpu.memory_space<vmem>>, vector<1x32xf32>
      tpu.vector_store %arg11[%c2_409, %c0_410], %511 {strides = array<i32>} : memref<8x32xf32, #tpu.memory_space<vmem>>, vector<1x32xf32>,
      %c3_i32_411 = arith.constant 3 : i32
      %513 = arith.addi %494, %c3_i32_411 : i32
      %514 = arith.index_cast %513 : i32 to index
      %515 = memref.load %arg2[%514] : memref<128xi32, #tpu.memory_space<smem>>
      %516 = arith.index_cast %515 : i32 to index
      %c0_412 = arith.constant 0 : index
      %517 = vector.load %arg3[%516, %c0_412] : memref<128x32xf32, #tpu.memory_space<vmem>>, vector<1x32xf32>
      %c3_413 = arith.constant 3 : index
      %c0_414 = arith.constant 0 : index
      %518 = vector.load %arg11[%c3_413, %c0_414] : memref<8x32xf32, #tpu.memory_space<vmem>>, vector<1x32xf32>
      tpu.vector_store %arg11[%c3_413, %c0_414], %517 {strides = array<i32>} : memref<8x32xf32, #tpu.memory_space<vmem>>, vector<1x32xf32>,
      %c4_i32_415 = arith.constant 4 : i32
      %519 = arith.addi %494, %c4_i32_415 : i32
      %520 = arith.index_cast %519 : i32 to index
      %521 = memref.load %arg2[%520] : memref<128xi32, #tpu.memory_space<smem>>
      %522 = arith.index_cast %521 : i32 to index
      %c0_416 = arith.constant 0 : index
      %523 = vector.load %arg3[%522, %c0_416] : memref<128x32xf32, #tpu.memory_space<vmem>>, vector<1x32xf32>
      %c4_417 = arith.constant 4 : index
      %c0_418 = arith.constant 0 : index
      %524 = vector.load %arg11[%c4_417, %c0_418] : memref<8x32xf32, #tpu.memory_space<vmem>>, vector<1x32xf32>
      tpu.vector_store %arg11[%c4_417, %c0_418], %523 {strides = array<i32>} : memref<8x32xf32, #tpu.memory_space<vmem>>, vector<1x32xf32>,
      %c5_i32_419 = arith.constant 5 : i32
      %525 = arith.addi %494, %c5_i32_419 : i32
      %526 = arith.index_cast %525 : i32 to index
      %527 = memref.load %arg2[%526] : memref<128xi32, #tpu.memory_space<smem>>
      %528 = arith.index_cast %527 : i32 to index
      %c0_420 = arith.constant 0 : index
      %529 = vector.load %arg3[%528, %c0_420] : memref<128x32xf32, #tpu.memory_space<vmem>>, vector<1x32xf32>
      %c5_421 = arith.constant 5 : index
      %c0_422 = arith.constant 0 : index
      %530 = vector.load %arg11[%c5_421, %c0_422] : memref<8x32xf32, #tpu.memory_space<vmem>>, vector<1x32xf32>
      tpu.vector_store %arg11[%c5_421, %c0_422], %529 {strides = array<i32>} : memref<8x32xf32, #tpu.memory_space<vmem>>, vector<1x32xf32>,
      %c6_i32_423 = arith.constant 6 : i32
      %531 = arith.addi %494, %c6_i32_423 : i32
      %532 = arith.index_cast %531 : i32 to index
      %533 = memref.load %arg2[%532] : memref<128xi32, #tpu.memory_space<smem>>
      %534 = arith.index_cast %533 : i32 to index
      %c0_424 = arith.constant 0 : index
      %535 = vector.load %arg3[%534, %c0_424] : memref<128x32xf32, #tpu.memory_space<vmem>>, vector<1x32xf32>
      %c6_425 = arith.constant 6 : index
      %c0_426 = arith.constant 0 : index
      %536 = vector.load %arg11[%c6_425, %c0_426] : memref<8x32xf32, #tpu.memory_space<vmem>>, vector<1x32xf32>
      tpu.vector_store %arg11[%c6_425, %c0_426], %535 {strides = array<i32>} : memref<8x32xf32, #tpu.memory_space<vmem>>, vector<1x32xf32>,
      %c7_i32_427 = arith.constant 7 : i32
      %537 = arith.addi %494, %c7_i32_427 : i32
      %538 = arith.index_cast %537 : i32 to index
      %539 = memref.load %arg2[%538] : memref<128xi32, #tpu.memory_space<smem>>
      %540 = arith.index_cast %539 : i32 to index
      %c0_428 = arith.constant 0 : index
      %541 = vector.load %arg3[%540, %c0_428] : memref<128x32xf32, #tpu.memory_space<vmem>>, vector<1x32xf32>
      %c7_429 = arith.constant 7 : index
      %c0_430 = arith.constant 0 : index
      %542 = vector.load %arg11[%c7_429, %c0_430] : memref<8x32xf32, #tpu.memory_space<vmem>>, vector<1x32xf32>
      tpu.vector_store %arg11[%c7_429, %c0_430], %541 {strides = array<i32>} : memref<8x32xf32, #tpu.memory_space<vmem>>, vector<1x32xf32>,
    } else {
    }
    %c0_301 = arith.constant 0 : index
    %c0_302 = arith.constant 0 : index
    %379 = vector.load %arg11[%c0_301, %c0_302] : memref<8x32xf32, #tpu.memory_space<vmem>>, vector<8x32xf32>
    %380 = arith.truncf %379 : vector<8x32xf32> to vector<8x32xbf16>
    %c0_303 = arith.constant 0 : index
    %c0_304 = arith.constant 0 : index
    %c0_305 = arith.constant 0 : index
    %381 = vector.load %arg10[%c0_303, %c0_304, %c0_305] : memref<2x8x32xf32, #tpu.memory_space<vmem>>, vector<1x8x32xf32>
    %382 = vector.shape_cast %381 : vector<1x8x32xf32> to vector<8x32xf32>
    %383 = arith.truncf %382 : vector<8x32xf32> to vector<8x32xbf16>
    %c0_306 = arith.constant 0 : index
    %c0_307 = arith.constant 0 : index
    %c0_308 = arith.constant 0 : index
    %384 = vector.load %arg5[%c0_306, %c0_307, %c0_308] : memref<2x32x32xbf16, #tpu.memory_space<vmem>>, vector<1x32x32xbf16>
    %385 = vector.shape_cast %384 : vector<1x32x32xbf16> to vector<32x32xbf16>
    %cst_309 = arith.constant dense<0.000000e+00> : vector<8x32xf32>
    %386 = tpu.matmul %380, %385, %cst_309 {dimension_numbers = #tpu.dot_dimension_numbers<[1], [0], [0], [1], [0, 0, 1, 1], [], []>} : vector<8x32xbf16>, vector<32x32xbf16>, vector<8x32xf32> -> vector<8x32xf32>
    %c0_310 = arith.constant 0 : index
    %c0_311 = arith.constant 0 : index
    %c0_312 = arith.constant 0 : index
    %387 = vector.load %arg6[%c0_310, %c0_311, %c0_312] : memref<2x32x32xbf16, #tpu.memory_space<vmem>>, vector<1x32x32xbf16>
    %388 = vector.shape_cast %387 : vector<1x32x32xbf16> to vector<32x32xbf16>
    %cst_313 = arith.constant dense<0.000000e+00> : vector<8x32xf32>
    %389 = tpu.matmul %383, %388, %cst_313 {dimension_numbers = #tpu.dot_dimension_numbers<[1], [0], [0], [1], [0, 0, 1, 1], [], []>} : vector<8x32xbf16>, vector<32x32xbf16>, vector<8x32xf32> -> vector<8x32xf32>
    %390 = arith.addf %386, %389 : vector<8x32xf32>
    %c0_314 = arith.constant 0 : index
    %c0_315 = arith.constant 0 : index
    %c0_316 = arith.constant 0 : index
    %391 = vector.load %arg7[%c0_314, %c0_315, %c0_316] : memref<2x1x32xf32, #tpu.memory_space<vmem>>, vector<1x1x32xf32>
    %392 = vector.shape_cast %391 : vector<1x1x32xf32> to vector<1x32xf32>
    %393 = vector.broadcast %392 : vector<1x32xf32> to vector<8x32xf32>
    %394 = arith.addf %390, %393 : vector<8x32xf32>
    %395 = math.tanh %394 : vector<8x32xf32>
    %c0_317 = arith.constant 0 : index
    %c0_318 = arith.constant 0 : index
    %c0_319 = arith.constant 0 : index
    %396 = vector.load %arg10[%c0_317, %c0_318, %c0_319] : memref<2x8x32xf32, #tpu.memory_space<vmem>>, vector<1x8x32xf32>
    %397 = vector.shape_cast %396 : vector<1x8x32xf32> to vector<8x32xf32>
    %398 = vector.shape_cast %395 : vector<8x32xf32> to vector<1x8x32xf32>
    tpu.vector_store %arg10[%c0_317, %c0_318, %c0_319], %398 {strides = array<i32>} : memref<2x8x32xf32, #tpu.memory_space<vmem>>, vector<1x8x32xf32>,
    %399 = arith.truncf %395 : vector<8x32xf32> to vector<8x32xbf16>
    %c1_320 = arith.constant 1 : index
    %c0_321 = arith.constant 0 : index
    %c0_322 = arith.constant 0 : index
    %400 = vector.load %arg10[%c1_320, %c0_321, %c0_322] : memref<2x8x32xf32, #tpu.memory_space<vmem>>, vector<1x8x32xf32>
    %401 = vector.shape_cast %400 : vector<1x8x32xf32> to vector<8x32xf32>
    %402 = arith.truncf %401 : vector<8x32xf32> to vector<8x32xbf16>
    %c1_323 = arith.constant 1 : index
    %c0_324 = arith.constant 0 : index
    %c0_325 = arith.constant 0 : index
    %403 = vector.load %arg5[%c1_323, %c0_324, %c0_325] : memref<2x32x32xbf16, #tpu.memory_space<vmem>>, vector<1x32x32xbf16>
    %404 = vector.shape_cast %403 : vector<1x32x32xbf16> to vector<32x32xbf16>
    %cst_326 = arith.constant dense<0.000000e+00> : vector<8x32xf32>
    %405 = tpu.matmul %399, %404, %cst_326 {dimension_numbers = #tpu.dot_dimension_numbers<[1], [0], [0], [1], [0, 0, 1, 1], [], []>} : vector<8x32xbf16>, vector<32x32xbf16>, vector<8x32xf32> -> vector<8x32xf32>
    %c1_327 = arith.constant 1 : index
    %c0_328 = arith.constant 0 : index
    %c0_329 = arith.constant 0 : index
    %406 = vector.load %arg6[%c1_327, %c0_328, %c0_329] : memref<2x32x32xbf16, #tpu.memory_space<vmem>>, vector<1x32x32xbf16>
    %407 = vector.shape_cast %406 : vector<1x32x32xbf16> to vector<32x32xbf16>
    %cst_330 = arith.constant dense<0.000000e+00> : vector<8x32xf32>
    %408 = tpu.matmul %402, %407, %cst_330 {dimension_numbers = #tpu.dot_dimension_numbers<[1], [0], [0], [1], [0, 0, 1, 1], [], []>} : vector<8x32xbf16>, vector<32x32xbf16>, vector<8x32xf32> -> vector<8x32xf32>
    %409 = arith.addf %405, %408 : vector<8x32xf32>
    %c1_331 = arith.constant 1 : index
    %c0_332 = arith.constant 0 : index
    %c0_333 = arith.constant 0 : index
    %410 = vector.load %arg7[%c1_331, %c0_332, %c0_333] : memref<2x1x32xf32, #tpu.memory_space<vmem>>, vector<1x1x32xf32>
    %411 = vector.shape_cast %410 : vector<1x1x32xf32> to vector<1x32xf32>
    %412 = vector.broadcast %411 : vector<1x32xf32> to vector<8x32xf32>
    %413 = arith.addf %409, %412 : vector<8x32xf32>
    %414 = math.tanh %413 : vector<8x32xf32>
    %c1_334 = arith.constant 1 : index
    %c0_335 = arith.constant 0 : index
    %c0_336 = arith.constant 0 : index
    %415 = vector.load %arg10[%c1_334, %c0_335, %c0_336] : memref<2x8x32xf32, #tpu.memory_space<vmem>>, vector<1x8x32xf32>
    %416 = vector.shape_cast %415 : vector<1x8x32xf32> to vector<8x32xf32>
    %417 = vector.shape_cast %414 : vector<8x32xf32> to vector<1x8x32xf32>
    tpu.vector_store %arg10[%c1_334, %c0_335, %c0_336], %417 {strides = array<i32>} : memref<2x8x32xf32, #tpu.memory_space<vmem>>, vector<1x8x32xf32>,
    %418 = arith.truncf %414 : vector<8x32xf32> to vector<8x32xbf16>
    %c0_337 = arith.constant 0 : index
    %c0_338 = arith.constant 0 : index
    %419 = vector.load %arg4[%c0_337, %c0_338] : memref<32x128xbf16, #tpu.memory_space<vmem>>, vector<32x128xbf16>
    %cst_339 = arith.constant dense<0.000000e+00> : vector<8x128xf32>
    %420 = tpu.matmul %418, %419, %cst_339 {dimension_numbers = #tpu.dot_dimension_numbers<[1], [0], [0], [1], [0, 0, 1, 1], [], []>} : vector<8x32xbf16>, vector<32x128xbf16>, vector<8x128xf32> -> vector<8x128xf32>
    %421 = vector.shape_cast %420 : vector<8x128xf32> to vector<8x1x128xf32>
    %c0_340 = arith.constant 0 : index
    %c6 = arith.constant 6 : index
    %c0_341 = arith.constant 0 : index
    %422 = vector.load %arg9[%c0_340, %c6, %c0_341] : memref<8x8x128xf32, #tpu.memory_space<vmem>>, vector<8x1x128xf32>
    tpu.vector_store %arg9[%c0_340, %c6, %c0_341], %421 {strides = array<i32>} : memref<8x8x128xf32, #tpu.memory_space<vmem>>, vector<8x1x128xf32>,
    %c1_i32_342 = arith.constant 1 : i32
    %423 = arith.addi %373, %c1_i32_342 : i32
    %c15_i32_343 = arith.constant 15 : i32
    %424 = arith.minsi %423, %c15_i32_343 : i32
    %c1_i32_344 = arith.constant 1 : i32
    %425 = arith.addi %373, %c1_i32_344 : i32
    %c16_i32_345 = arith.constant 16 : i32
    %426 = arith.cmpi slt, %425, %c16_i32_345 : i32
    %427 = arith.index_cast %424 : i32 to index
    %428 = memref.load %arg1[%427] : memref<16xi32, #tpu.memory_space<smem>>
    %c0_i32_346 = arith.constant 0 : i32
    %429 = arith.cmpi eq, %428, %c0_i32_346 : i32
    %430 = arith.andi %426, %429 : i1
    %431 = arith.extui %430 : i1 to i32
    %c0_i32_347 = arith.constant 0 : i32
    %432 = arith.cmpi ne, %431, %c0_i32_347 : i32
    scf.if %432 {
      %cst_398 = arith.constant -1.000000e+30 : f32
      %494 = vector.broadcast %cst_398 : f32 to vector<8x128xf32>
      %495 = arith.select %5, %420, %494 : vector<8x128xi1>, vector<8x128xf32>
      %cst_399 = arith.constant dense<0xFF800000> : vector<8xf32>
      %496 = vector.multi_reduction <maximumf>, %495, %cst_399 [1] : vector<8x128xf32> to vector<8xf32>
      %497 = vector.shape_cast %496 : vector<8xf32> to vector<8x1xf32>
      %498 = vector.broadcast %497 : vector<8x1xf32> to vector<8x128xf32>
      %499 = arith.cmpf oeq, %495, %498 : vector<8x128xf32>
      %c128_i32 = arith.constant 128 : i32
      %500 = vector.broadcast %c128_i32 : i32 to vector<8x128xi32>
      %501 = arith.select %499, %3, %500 : vector<8x128xi1>, vector<8x128xi32>
      %cst_400 = arith.constant dense<2147483647> : vector<8xi32>
      %502 = vector.multi_reduction <minsi>, %501, %cst_400 [1] : vector<8x128xi32> to vector<8xi32>
      %503 = vector.shape_cast %502 : vector<8xi32> to vector<8x1xi32>
      %504 = vector.broadcast %503 : vector<8x1xi32> to vector<8x128xi32>
      %505 = arith.cmpi eq, %3, %504 : vector<8x128xi32>
      %506 = arith.extui %505 : vector<8x128xi1> to vector<8x128xi32>
      %507 = arith.sitofp %506 : vector<8x128xi32> to vector<8x128xf32>
      %c0_401 = arith.constant 0 : index
      %c0_402 = arith.constant 0 : index
      %508 = vector.load %arg3[%c0_401, %c0_402] : memref<128x32xf32, #tpu.memory_space<vmem>>, vector<128x32xf32>
      %cst_403 = arith.constant dense<0.000000e+00> : vector<8x32xf32>
      %509 = tpu.matmul %507, %508, %cst_403 {dimension_numbers = #tpu.dot_dimension_numbers<[1], [0], [0], [1], [0, 0, 1, 1], [], []>} : vector<8x128xf32>, vector<128x32xf32>, vector<8x32xf32> -> vector<8x32xf32>
      %c0_404 = arith.constant 0 : index
      %c0_405 = arith.constant 0 : index
      %510 = vector.load %arg11[%c0_404, %c0_405] : memref<8x32xf32, #tpu.memory_space<vmem>>, vector<8x32xf32>
      tpu.vector_store %arg11[%c0_404, %c0_405], %509 {strides = array<i32>} : memref<8x32xf32, #tpu.memory_space<vmem>>, vector<8x32xf32>,
    } else {
    }
    %c8_i32_348 = arith.constant 8 : i32
    %433 = arith.muli %arg0, %c8_i32_348 : i32
    %c7_i32 = arith.constant 7 : i32
    %434 = arith.addi %433, %c7_i32 : i32
    %435 = arith.index_cast %434 : i32 to index
    %436 = memref.load %arg1[%435] : memref<16xi32, #tpu.memory_space<smem>>
    %c1_i32_349 = arith.constant 1 : i32
    %437 = arith.cmpi eq, %436, %c1_i32_349 : i32
    %438 = arith.extui %437 : i1 to i32
    %c0_i32_350 = arith.constant 0 : i32
    %439 = arith.cmpi ne, %438, %c0_i32_350 : i32
    scf.if %439 {
      %c8_i32_398 = arith.constant 8 : i32
      %494 = arith.muli %434, %c8_i32_398 : i32
      %c0_i32_399 = arith.constant 0 : i32
      %495 = arith.addi %494, %c0_i32_399 : i32
      %496 = arith.index_cast %495 : i32 to index
      %497 = memref.load %arg2[%496] : memref<128xi32, #tpu.memory_space<smem>>
      %498 = arith.index_cast %497 : i32 to index
      %c0_400 = arith.constant 0 : index
      %499 = vector.load %arg3[%498, %c0_400] : memref<128x32xf32, #tpu.memory_space<vmem>>, vector<1x32xf32>
      %c0_401 = arith.constant 0 : index
      %c0_402 = arith.constant 0 : index
      %500 = vector.load %arg11[%c0_401, %c0_402] : memref<8x32xf32, #tpu.memory_space<vmem>>, vector<1x32xf32>
      tpu.vector_store %arg11[%c0_401, %c0_402], %499 {strides = array<i32>} : memref<8x32xf32, #tpu.memory_space<vmem>>, vector<1x32xf32>,
      %c1_i32_403 = arith.constant 1 : i32
      %501 = arith.addi %494, %c1_i32_403 : i32
      %502 = arith.index_cast %501 : i32 to index
      %503 = memref.load %arg2[%502] : memref<128xi32, #tpu.memory_space<smem>>
      %504 = arith.index_cast %503 : i32 to index
      %c0_404 = arith.constant 0 : index
      %505 = vector.load %arg3[%504, %c0_404] : memref<128x32xf32, #tpu.memory_space<vmem>>, vector<1x32xf32>
      %c1_405 = arith.constant 1 : index
      %c0_406 = arith.constant 0 : index
      %506 = vector.load %arg11[%c1_405, %c0_406] : memref<8x32xf32, #tpu.memory_space<vmem>>, vector<1x32xf32>
      tpu.vector_store %arg11[%c1_405, %c0_406], %505 {strides = array<i32>} : memref<8x32xf32, #tpu.memory_space<vmem>>, vector<1x32xf32>,
      %c2_i32_407 = arith.constant 2 : i32
      %507 = arith.addi %494, %c2_i32_407 : i32
      %508 = arith.index_cast %507 : i32 to index
      %509 = memref.load %arg2[%508] : memref<128xi32, #tpu.memory_space<smem>>
      %510 = arith.index_cast %509 : i32 to index
      %c0_408 = arith.constant 0 : index
      %511 = vector.load %arg3[%510, %c0_408] : memref<128x32xf32, #tpu.memory_space<vmem>>, vector<1x32xf32>
      %c2_409 = arith.constant 2 : index
      %c0_410 = arith.constant 0 : index
      %512 = vector.load %arg11[%c2_409, %c0_410] : memref<8x32xf32, #tpu.memory_space<vmem>>, vector<1x32xf32>
      tpu.vector_store %arg11[%c2_409, %c0_410], %511 {strides = array<i32>} : memref<8x32xf32, #tpu.memory_space<vmem>>, vector<1x32xf32>,
      %c3_i32_411 = arith.constant 3 : i32
      %513 = arith.addi %494, %c3_i32_411 : i32
      %514 = arith.index_cast %513 : i32 to index
      %515 = memref.load %arg2[%514] : memref<128xi32, #tpu.memory_space<smem>>
      %516 = arith.index_cast %515 : i32 to index
      %c0_412 = arith.constant 0 : index
      %517 = vector.load %arg3[%516, %c0_412] : memref<128x32xf32, #tpu.memory_space<vmem>>, vector<1x32xf32>
      %c3_413 = arith.constant 3 : index
      %c0_414 = arith.constant 0 : index
      %518 = vector.load %arg11[%c3_413, %c0_414] : memref<8x32xf32, #tpu.memory_space<vmem>>, vector<1x32xf32>
      tpu.vector_store %arg11[%c3_413, %c0_414], %517 {strides = array<i32>} : memref<8x32xf32, #tpu.memory_space<vmem>>, vector<1x32xf32>,
      %c4_i32_415 = arith.constant 4 : i32
      %519 = arith.addi %494, %c4_i32_415 : i32
      %520 = arith.index_cast %519 : i32 to index
      %521 = memref.load %arg2[%520] : memref<128xi32, #tpu.memory_space<smem>>
      %522 = arith.index_cast %521 : i32 to index
      %c0_416 = arith.constant 0 : index
      %523 = vector.load %arg3[%522, %c0_416] : memref<128x32xf32, #tpu.memory_space<vmem>>, vector<1x32xf32>
      %c4_417 = arith.constant 4 : index
      %c0_418 = arith.constant 0 : index
      %524 = vector.load %arg11[%c4_417, %c0_418] : memref<8x32xf32, #tpu.memory_space<vmem>>, vector<1x32xf32>
      tpu.vector_store %arg11[%c4_417, %c0_418], %523 {strides = array<i32>} : memref<8x32xf32, #tpu.memory_space<vmem>>, vector<1x32xf32>,
      %c5_i32_419 = arith.constant 5 : i32
      %525 = arith.addi %494, %c5_i32_419 : i32
      %526 = arith.index_cast %525 : i32 to index
      %527 = memref.load %arg2[%526] : memref<128xi32, #tpu.memory_space<smem>>
      %528 = arith.index_cast %527 : i32 to index
      %c0_420 = arith.constant 0 : index
      %529 = vector.load %arg3[%528, %c0_420] : memref<128x32xf32, #tpu.memory_space<vmem>>, vector<1x32xf32>
      %c5_421 = arith.constant 5 : index
      %c0_422 = arith.constant 0 : index
      %530 = vector.load %arg11[%c5_421, %c0_422] : memref<8x32xf32, #tpu.memory_space<vmem>>, vector<1x32xf32>
      tpu.vector_store %arg11[%c5_421, %c0_422], %529 {strides = array<i32>} : memref<8x32xf32, #tpu.memory_space<vmem>>, vector<1x32xf32>,
      %c6_i32_423 = arith.constant 6 : i32
      %531 = arith.addi %494, %c6_i32_423 : i32
      %532 = arith.index_cast %531 : i32 to index
      %533 = memref.load %arg2[%532] : memref<128xi32, #tpu.memory_space<smem>>
      %534 = arith.index_cast %533 : i32 to index
      %c0_424 = arith.constant 0 : index
      %535 = vector.load %arg3[%534, %c0_424] : memref<128x32xf32, #tpu.memory_space<vmem>>, vector<1x32xf32>
      %c6_425 = arith.constant 6 : index
      %c0_426 = arith.constant 0 : index
      %536 = vector.load %arg11[%c6_425, %c0_426] : memref<8x32xf32, #tpu.memory_space<vmem>>, vector<1x32xf32>
      tpu.vector_store %arg11[%c6_425, %c0_426], %535 {strides = array<i32>} : memref<8x32xf32, #tpu.memory_space<vmem>>, vector<1x32xf32>,
      %c7_i32_427 = arith.constant 7 : i32
      %537 = arith.addi %494, %c7_i32_427 : i32
      %538 = arith.index_cast %537 : i32 to index
      %539 = memref.load %arg2[%538] : memref<128xi32, #tpu.memory_space<smem>>
      %540 = arith.index_cast %539 : i32 to index
      %c0_428 = arith.constant 0 : index
      %541 = vector.load %arg3[%540, %c0_428] : memref<128x32xf32, #tpu.memory_space<vmem>>, vector<1x32xf32>
      %c7_429 = arith.constant 7 : index
      %c0_430 = arith.constant 0 : index
      %542 = vector.load %arg11[%c7_429, %c0_430] : memref<8x32xf32, #tpu.memory_space<vmem>>, vector<1x32xf32>
      tpu.vector_store %arg11[%c7_429, %c0_430], %541 {strides = array<i32>} : memref<8x32xf32, #tpu.memory_space<vmem>>, vector<1x32xf32>,
    } else {
    }
    %c0_351 = arith.constant 0 : index
    %c0_352 = arith.constant 0 : index
    %440 = vector.load %arg11[%c0_351, %c0_352] : memref<8x32xf32, #tpu.memory_space<vmem>>, vector<8x32xf32>
    %441 = arith.truncf %440 : vector<8x32xf32> to vector<8x32xbf16>
    %c0_353 = arith.constant 0 : index
    %c0_354 = arith.constant 0 : index
    %c0_355 = arith.constant 0 : index
    %442 = vector.load %arg10[%c0_353, %c0_354, %c0_355] : memref<2x8x32xf32, #tpu.memory_space<vmem>>, vector<1x8x32xf32>
    %443 = vector.shape_cast %442 : vector<1x8x32xf32> to vector<8x32xf32>
    %444 = arith.truncf %443 : vector<8x32xf32> to vector<8x32xbf16>
    %c0_356 = arith.constant 0 : index
    %c0_357 = arith.constant 0 : index
    %c0_358 = arith.constant 0 : index
    %445 = vector.load %arg5[%c0_356, %c0_357, %c0_358] : memref<2x32x32xbf16, #tpu.memory_space<vmem>>, vector<1x32x32xbf16>
    %446 = vector.shape_cast %445 : vector<1x32x32xbf16> to vector<32x32xbf16>
    %cst_359 = arith.constant dense<0.000000e+00> : vector<8x32xf32>
    %447 = tpu.matmul %441, %446, %cst_359 {dimension_numbers = #tpu.dot_dimension_numbers<[1], [0], [0], [1], [0, 0, 1, 1], [], []>} : vector<8x32xbf16>, vector<32x32xbf16>, vector<8x32xf32> -> vector<8x32xf32>
    %c0_360 = arith.constant 0 : index
    %c0_361 = arith.constant 0 : index
    %c0_362 = arith.constant 0 : index
    %448 = vector.load %arg6[%c0_360, %c0_361, %c0_362] : memref<2x32x32xbf16, #tpu.memory_space<vmem>>, vector<1x32x32xbf16>
    %449 = vector.shape_cast %448 : vector<1x32x32xbf16> to vector<32x32xbf16>
    %cst_363 = arith.constant dense<0.000000e+00> : vector<8x32xf32>
    %450 = tpu.matmul %444, %449, %cst_363 {dimension_numbers = #tpu.dot_dimension_numbers<[1], [0], [0], [1], [0, 0, 1, 1], [], []>} : vector<8x32xbf16>, vector<32x32xbf16>, vector<8x32xf32> -> vector<8x32xf32>
    %451 = arith.addf %447, %450 : vector<8x32xf32>
    %c0_364 = arith.constant 0 : index
    %c0_365 = arith.constant 0 : index
    %c0_366 = arith.constant 0 : index
    %452 = vector.load %arg7[%c0_364, %c0_365, %c0_366] : memref<2x1x32xf32, #tpu.memory_space<vmem>>, vector<1x1x32xf32>
    %453 = vector.shape_cast %452 : vector<1x1x32xf32> to vector<1x32xf32>
    %454 = vector.broadcast %453 : vector<1x32xf32> to vector<8x32xf32>
    %455 = arith.addf %451, %454 : vector<8x32xf32>
    %456 = math.tanh %455 : vector<8x32xf32>
    %c0_367 = arith.constant 0 : index
    %c0_368 = arith.constant 0 : index
    %c0_369 = arith.constant 0 : index
    %457 = vector.load %arg10[%c0_367, %c0_368, %c0_369] : memref<2x8x32xf32, #tpu.memory_space<vmem>>, vector<1x8x32xf32>
    %458 = vector.shape_cast %457 : vector<1x8x32xf32> to vector<8x32xf32>
    %459 = vector.shape_cast %456 : vector<8x32xf32> to vector<1x8x32xf32>
    tpu.vector_store %arg10[%c0_367, %c0_368, %c0_369], %459 {strides = array<i32>} : memref<2x8x32xf32, #tpu.memory_space<vmem>>, vector<1x8x32xf32>,
    %460 = arith.truncf %456 : vector<8x32xf32> to vector<8x32xbf16>
    %c1_370 = arith.constant 1 : index
    %c0_371 = arith.constant 0 : index
    %c0_372 = arith.constant 0 : index
    %461 = vector.load %arg10[%c1_370, %c0_371, %c0_372] : memref<2x8x32xf32, #tpu.memory_space<vmem>>, vector<1x8x32xf32>
    %462 = vector.shape_cast %461 : vector<1x8x32xf32> to vector<8x32xf32>
    %463 = arith.truncf %462 : vector<8x32xf32> to vector<8x32xbf16>
    %c1_373 = arith.constant 1 : index
    %c0_374 = arith.constant 0 : index
    %c0_375 = arith.constant 0 : index
    %464 = vector.load %arg5[%c1_373, %c0_374, %c0_375] : memref<2x32x32xbf16, #tpu.memory_space<vmem>>, vector<1x32x32xbf16>
    %465 = vector.shape_cast %464 : vector<1x32x32xbf16> to vector<32x32xbf16>
    %cst_376 = arith.constant dense<0.000000e+00> : vector<8x32xf32>
    %466 = tpu.matmul %460, %465, %cst_376 {dimension_numbers = #tpu.dot_dimension_numbers<[1], [0], [0], [1], [0, 0, 1, 1], [], []>} : vector<8x32xbf16>, vector<32x32xbf16>, vector<8x32xf32> -> vector<8x32xf32>
    %c1_377 = arith.constant 1 : index
    %c0_378 = arith.constant 0 : index
    %c0_379 = arith.constant 0 : index
    %467 = vector.load %arg6[%c1_377, %c0_378, %c0_379] : memref<2x32x32xbf16, #tpu.memory_space<vmem>>, vector<1x32x32xbf16>
    %468 = vector.shape_cast %467 : vector<1x32x32xbf16> to vector<32x32xbf16>
    %cst_380 = arith.constant dense<0.000000e+00> : vector<8x32xf32>
    %469 = tpu.matmul %463, %468, %cst_380 {dimension_numbers = #tpu.dot_dimension_numbers<[1], [0], [0], [1], [0, 0, 1, 1], [], []>} : vector<8x32xbf16>, vector<32x32xbf16>, vector<8x32xf32> -> vector<8x32xf32>
    %470 = arith.addf %466, %469 : vector<8x32xf32>
    %c1_381 = arith.constant 1 : index
    %c0_382 = arith.constant 0 : index
    %c0_383 = arith.constant 0 : index
    %471 = vector.load %arg7[%c1_381, %c0_382, %c0_383] : memref<2x1x32xf32, #tpu.memory_space<vmem>>, vector<1x1x32xf32>
    %472 = vector.shape_cast %471 : vector<1x1x32xf32> to vector<1x32xf32>
    %473 = vector.broadcast %472 : vector<1x32xf32> to vector<8x32xf32>
    %474 = arith.addf %470, %473 : vector<8x32xf32>
    %475 = math.tanh %474 : vector<8x32xf32>
    %c1_384 = arith.constant 1 : index
    %c0_385 = arith.constant 0 : index
    %c0_386 = arith.constant 0 : index
    %476 = vector.load %arg10[%c1_384, %c0_385, %c0_386] : memref<2x8x32xf32, #tpu.memory_space<vmem>>, vector<1x8x32xf32>
    %477 = vector.shape_cast %476 : vector<1x8x32xf32> to vector<8x32xf32>
    %478 = vector.shape_cast %475 : vector<8x32xf32> to vector<1x8x32xf32>
    tpu.vector_store %arg10[%c1_384, %c0_385, %c0_386], %478 {strides = array<i32>} : memref<2x8x32xf32, #tpu.memory_space<vmem>>, vector<1x8x32xf32>,
    %479 = arith.truncf %475 : vector<8x32xf32> to vector<8x32xbf16>
    %c0_387 = arith.constant 0 : index
    %c0_388 = arith.constant 0 : index
    %480 = vector.load %arg4[%c0_387, %c0_388] : memref<32x128xbf16, #tpu.memory_space<vmem>>, vector<32x128xbf16>
    %cst_389 = arith.constant dense<0.000000e+00> : vector<8x128xf32>
    %481 = tpu.matmul %479, %480, %cst_389 {dimension_numbers = #tpu.dot_dimension_numbers<[1], [0], [0], [1], [0, 0, 1, 1], [], []>} : vector<8x32xbf16>, vector<32x128xbf16>, vector<8x128xf32> -> vector<8x128xf32>
    %482 = vector.shape_cast %481 : vector<8x128xf32> to vector<8x1x128xf32>
    %c0_390 = arith.constant 0 : index
    %c7 = arith.constant 7 : index
    %c0_391 = arith.constant 0 : index
    %483 = vector.load %arg9[%c0_390, %c7, %c0_391] : memref<8x8x128xf32, #tpu.memory_space<vmem>>, vector<8x1x128xf32>
    tpu.vector_store %arg9[%c0_390, %c7, %c0_391], %482 {strides = array<i32>} : memref<8x8x128xf32, #tpu.memory_space<vmem>>, vector<8x1x128xf32>,
    %c1_i32_392 = arith.constant 1 : i32
    %484 = arith.addi %434, %c1_i32_392 : i32
    %c15_i32_393 = arith.constant 15 : i32
    %485 = arith.minsi %484, %c15_i32_393 : i32
    %c1_i32_394 = arith.constant 1 : i32
    %486 = arith.addi %434, %c1_i32_394 : i32
    %c16_i32_395 = arith.constant 16 : i32
    %487 = arith.cmpi slt, %486, %c16_i32_395 : i32
    %488 = arith.index_cast %485 : i32 to index
    %489 = memref.load %arg1[%488] : memref<16xi32, #tpu.memory_space<smem>>
    %c0_i32_396 = arith.constant 0 : i32
    %490 = arith.cmpi eq, %489, %c0_i32_396 : i32
    %491 = arith.andi %487, %490 : i1
    %492 = arith.extui %491 : i1 to i32
    %c0_i32_397 = arith.constant 0 : i32
    %493 = arith.cmpi ne, %492, %c0_i32_397 : i32
    scf.if %493 {
      %cst_398 = arith.constant -1.000000e+30 : f32
      %494 = vector.broadcast %cst_398 : f32 to vector<8x128xf32>
      %495 = arith.select %5, %481, %494 : vector<8x128xi1>, vector<8x128xf32>
      %cst_399 = arith.constant dense<0xFF800000> : vector<8xf32>
      %496 = vector.multi_reduction <maximumf>, %495, %cst_399 [1] : vector<8x128xf32> to vector<8xf32>
      %497 = vector.shape_cast %496 : vector<8xf32> to vector<8x1xf32>
      %498 = vector.broadcast %497 : vector<8x1xf32> to vector<8x128xf32>
      %499 = arith.cmpf oeq, %495, %498 : vector<8x128xf32>
      %c128_i32 = arith.constant 128 : i32
      %500 = vector.broadcast %c128_i32 : i32 to vector<8x128xi32>
      %501 = arith.select %499, %3, %500 : vector<8x128xi1>, vector<8x128xi32>
      %cst_400 = arith.constant dense<2147483647> : vector<8xi32>
      %502 = vector.multi_reduction <minsi>, %501, %cst_400 [1] : vector<8x128xi32> to vector<8xi32>
      %503 = vector.shape_cast %502 : vector<8xi32> to vector<8x1xi32>
      %504 = vector.broadcast %503 : vector<8x1xi32> to vector<8x128xi32>
      %505 = arith.cmpi eq, %3, %504 : vector<8x128xi32>
      %506 = arith.extui %505 : vector<8x128xi1> to vector<8x128xi32>
      %507 = arith.sitofp %506 : vector<8x128xi32> to vector<8x128xf32>
      %c0_401 = arith.constant 0 : index
      %c0_402 = arith.constant 0 : index
      %508 = vector.load %arg3[%c0_401, %c0_402] : memref<128x32xf32, #tpu.memory_space<vmem>>, vector<128x32xf32>
      %cst_403 = arith.constant dense<0.000000e+00> : vector<8x32xf32>
      %509 = tpu.matmul %507, %508, %cst_403 {dimension_numbers = #tpu.dot_dimension_numbers<[1], [0], [0], [1], [0, 0, 1, 1], [], []>} : vector<8x128xf32>, vector<128x32xf32>, vector<8x32xf32> -> vector<8x32xf32>
      %c0_404 = arith.constant 0 : index
      %c0_405 = arith.constant 0 : index
      %510 = vector.load %arg11[%c0_404, %c0_405] : memref<8x32xf32, #tpu.memory_space<vmem>>, vector<8x32xf32>
      tpu.vector_store %arg11[%c0_404, %c0_405], %509 {strides = array<i32>} : memref<8x32xf32, #tpu.memory_space<vmem>>, vector<8x32xf32>,
    } else {
    }
    return
  }
  func.func @transform_0(%arg0: i32, %arg1: memref<16xi32, #tpu.memory_space<smem>>, %arg2: memref<128xi32, #tpu.memory_space<smem>>) -> (i32, i32) {
    %c0_i32 = arith.constant 0 : i32
    %c0_i32_0 = arith.constant 0 : i32
    %c0_i32_1 = arith.constant 0 : i32
    return %c0_i32, %c0_i32_0 : i32, i32
  }
  func.func @transform_1(%arg0: i32, %arg1: memref<16xi32, #tpu.memory_space<smem>>, %arg2: memref<128xi32, #tpu.memory_space<smem>>) -> (i32, i32) {
    %c0_i32 = arith.constant 0 : i32
    %c0_i32_0 = arith.constant 0 : i32
    %c0_i32_1 = arith.constant 0 : i32
    return %c0_i32, %c0_i32_0 : i32, i32
  }
  func.func @transform_2(%arg0: i32, %arg1: memref<16xi32, #tpu.memory_space<smem>>, %arg2: memref<128xi32, #tpu.memory_space<smem>>) -> (i32, i32, i32) {
    %c0_i32 = arith.constant 0 : i32
    %c0_i32_0 = arith.constant 0 : i32
    %c0_i32_1 = arith.constant 0 : i32
    %c0_i32_2 = arith.constant 0 : i32
    return %c0_i32, %c0_i32_0, %c0_i32_1 : i32, i32, i32
  }
  func.func @transform_3(%arg0: i32, %arg1: memref<16xi32, #tpu.memory_space<smem>>, %arg2: memref<128xi32, #tpu.memory_space<smem>>) -> (i32, i32, i32) {
    %c0_i32 = arith.constant 0 : i32
    %c0_i32_0 = arith.constant 0 : i32
    %c0_i32_1 = arith.constant 0 : i32
    %c0_i32_2 = arith.constant 0 : i32
    return %c0_i32, %c0_i32_0, %c0_i32_1 : i32, i32, i32
  }
  func.func @transform_4(%arg0: i32, %arg1: memref<16xi32, #tpu.memory_space<smem>>, %arg2: memref<128xi32, #tpu.memory_space<smem>>) -> (i32, i32, i32) {
    %c0_i32 = arith.constant 0 : i32
    %c0_i32_0 = arith.constant 0 : i32
    %c0_i32_1 = arith.constant 0 : i32
    %c0_i32_2 = arith.constant 0 : i32
    return %c0_i32, %c0_i32_0, %c0_i32_1 : i32, i32, i32
  }
  func.func @transform_5(%arg0: i32, %arg1: memref<16xi32, #tpu.memory_space<smem>>, %arg2: memref<128xi32, #tpu.memory_space<smem>>) -> (i32, i32, i32) {
    %c0_i32 = arith.constant 0 : i32
    %c0_i32_0 = arith.constant 0 : i32
    %c0_i32_1 = arith.constant 0 : i32
    %c0_i32_2 = arith.constant 0 : i32
    return %c0_i32, %c0_i32_0, %c0_i32_1 : i32, i32, i32
  }
  func.func @transform_6(%arg0: i32, %arg1: memref<16xi32, #tpu.memory_space<smem>>, %arg2: memref<128xi32, #tpu.memory_space<smem>>) -> (i32, i32, i32) {
    %c0_i32 = arith.constant 0 : i32
    %c0_i32_0 = arith.constant 0 : i32
    %c0_i32_1 = arith.constant 0 : i32
    return %c0_i32, %arg0, %c0_i32_0 : i32, i32, i32
  }
}

</mosaic_0001>

<llo_original>
// kernel: tpu_custom_call.1
$region0: #{tpu_custom_call.1}
  #allocation0 [shape = 'u32[]', space=smem, size = 0x4, offset = 0x4, fixed_abs, tag = 'smem constant byte address 0x4 - core index']
  #allocation1 [shape = 'u32[72,128]{1,0:T(1,128)}', space=vmem, size = 0x9000, scoped, tag = 'internal scratch']
  #allocation2 [shape = 'f32[2,8,32]{2,1,0:T(8,128)}', space=vmem, size = 0x2000, scoped, tag = 'scratch operand']
  #allocation3 [shape = 'f32[8,32]{1,0:T(8,128)}', space=vmem, size = 0x1000, scoped, tag = 'scratch operand']
  #allocation4 [shape = 's32[1]{0}', space=sflag, size = 0x4, scoped, tag = 'scoped memory for tpu_custom_call.1']
  #allocation5 [shape = 'u8[512]{0}', space=smem, size = 0x200, scoped, tag = 'prefetched SMEM operand 0']
  #allocation6 [shape = 'u8[512]{0}', space=smem, size = 0x200, scoped, tag = 'prefetched SMEM operand 1']
  %s0 = inlined_call_operand.vmem [shape: s32[16], index: 0, kind: input, shape index: {}]
  %s1 = inlined_call_operand.vmem [shape: s32[128], index: 1, kind: input, shape index: {}]
  %s2 = inlined_call_operand.vmem [shape: f32[128,32], index: 2, kind: input, shape index: {}]
  %s3 = inlined_call_operand.vmem [shape: bf16[32,128], index: 3, kind: input, shape index: {}]
  %s4 = inlined_call_operand.vmem [shape: bf16[2,32,32], index: 4, kind: input, shape index: {}]
  %s5 = inlined_call_operand.vmem [shape: bf16[2,32,32], index: 5, kind: input, shape index: {}]
  %s6 = inlined_call_operand.vmem [shape: f32[2,1,32], index: 6, kind: input, shape index: {}]
  %s7 = inlined_call_operand.vmem [shape: f32[2,8,32], index: 7, kind: input, shape index: {}]
  %s8 = inlined_call_operand.hbm [shape: f32[8,16,128], index: 8, kind: output, shape index: {}]
  %s9 = sld [smem:[#allocation0]]
  $region125: #{tpu_custom_call.1} parent=0
    _
  %s11 = ssub.s32 1, %s9
  %s12 = scalar_select 0, %s11, %s9
  %s14 = sshll.u32 %s0, 4
  %s15 = int_to_ptr.vmem [resolvable:$true] %s14
  %17 = dma.vmem_to_smem %s15, 16, [#allocation5], [#allocation4]
  %s19 = sshll.u32 %s1, 4
  %s20 = int_to_ptr.vmem [resolvable:$true] %s19
  %22 = dma.vmem_to_smem %s20, 16, [#allocation6], [#allocation4]
  %24 = dma.done [#allocation4], 32
  %25 = sfence
  $region1: #{tpu_custom_call.1} parent=0
    #allocation7 [shape = 'u8[65536]{0}', space=vmem, size = 0x10000, scoped, tag = 'output window, operand 0']
    #allocation8 [shape = 's32[2]{0}', space=sflag, size = 0x8, scoped, tag = 'scoped memory for tpu_custom_call.1']
    %26 = vsyncpa [#allocation8], 0
    %s27 = scalar_lea.sflag [#allocation8], 1
    %28 = vsyncpa %s27, 0
    loop: start=0, step=1, limit=4
    $region2: #{tpu_custom_call.1} parent=1 // loop_pre_header
      _
    $region3: #{tpu_custom_call.1} parent=1 // loop_header
      %s30 = sphi 0, %s34
      %p31 = scmp.ge.s32.totalorder %s30, 4
      %s38 = sphi 0, %s38
      %s40 = sphi 0, %s38
      %s41 = sphi 0, %s40
      %s55 = sphi 0, %s41
      %s59 = sphi 0, %s59
      %s61 = sphi 0, %s59
      %s62 = sphi 0, %s61
      %s76 = sphi 0, %s62
      %s80 = sphi 0, %s80
      %s82 = sphi 0, %s80
      %s83 = sphi 0, %s82
      %s97 = sphi 0, %s83
      %s101 = sphi 0, %s101
      %s103 = sphi 0, %s101
      %s104 = sphi 0, %s103
      %s118 = sphi 0, %s104
      %s122 = sphi 0, %s122
      %s124 = sphi 0, %s122
      %s125 = sphi 0, %s124
      %s139 = sphi 0, %s125
      %s143 = sphi 0, %s143
      %s145 = sphi 0, %s143
      %s146 = sphi 0, %s145
      %s160 = sphi 0, %s146
      %s166 = sphi 0, %s168
      %s169 = sphi 0, %s166
      %s170 = sphi 0, %s169
      %s186 = sphi 0, %s170
    $region4: #{tpu_custom_call.1} parent=1 // loop_header_branch
      %33 = sbr.rel (%p31) target = $region8
    $region5: #{tpu_custom_call.1} parent=1 // loop_body
      %s35 = ssub.s32 %s30, 1
      %s36 = ssub.s32 %s30, 2
      %s37 = sadd.s32 %s30, 1
      %s39 = sadd.s32 %s38, 1
      %p42 = scmp.eq.s32.totalorder %s30, 1
      %p43 = scmp.ne.s32.totalorder %s38, %s40
      %p44 = scmp.eq.s32.totalorder %s30, 0
      %p45 = por %p43, %p44
      %p46 = scmp.ne.s32.totalorder %s38, %s40
      %p47 = scmp.eq.s32.totalorder %s35, 1
      %p48 = por %p46, %p47
      %p49 = scmp.ne.s32.totalorder %s40, %s41
      %p50 = scmp.eq.s32.totalorder %s35, 0
      %p51 = por %p49, %p50
      %p52 = scmp.ne.s32.totalorder %s40, %s41
      %p53 = scmp.eq.s32.totalorder %s36, 1
      %p54 = por %p52, %p53
      %p56 = scmp.ne.s32.totalorder %s41, %s55
      %p57 = scmp.eq.s32.totalorder %s36, 0
      %p58 = por %p56, %p57
      %s60 = sadd.s32 %s59, 1
      %p63 = scmp.eq.s32.totalorder %s30, 1
      %p64 = scmp.ne.s32.totalorder %s59, %s61
      %p65 = scmp.eq.s32.totalorder %s30, 0
      %p66 = por %p64, %p65
      %p67 = scmp.ne.s32.totalorder %s59, %s61
      %p68 = scmp.eq.s32.totalorder %s35, 1
      %p69 = por %p67, %p68
      %p70 = scmp.ne.s32.totalorder %s61, %s62
      %p71 = scmp.eq.s32.totalorder %s35, 0
      %p72 = por %p70, %p71
      %p73 = scmp.ne.s32.totalorder %s61, %s62
      %p74 = scmp.eq.s32.totalorder %s36, 1
      %p75 = por %p73, %p74
      %p77 = scmp.ne.s32.totalorder %s62, %s76
      %p78 = scmp.eq.s32.totalorder %s36, 0
      %p79 = por %p77, %p78
      %s81 = sadd.s32 %s80, 1
      %p84 = scmp.eq.s32.totalorder %s30, 1
      %p85 = scmp.ne.s32.totalorder %s80, %s82
      %p86 = scmp.eq.s32.totalorder %s30, 0
      %p87 = por %p85, %p86
      %p88 = scmp.ne.s32.totalorder %s80, %s82
      %p89 = scmp.eq.s32.totalorder %s35, 1
      %p90 = por %p88, %p89
      %p91 = scmp.ne.s32.totalorder %s82, %s83
      %p92 = scmp.eq.s32.totalorder %s35, 0
      %p93 = por %p91, %p92
      %p94 = scmp.ne.s32.totalorder %s82, %s83
      %p95 = scmp.eq.s32.totalorder %s36, 1
      %p96 = por %p94, %p95
      %p98 = scmp.ne.s32.totalorder %s83, %s97
      %p99 = scmp.eq.s32.totalorder %s36, 0
      %p100 = por %p98, %p99
      %s102 = sadd.s32 %s101, 1
      %p105 = scmp.eq.s32.totalorder %s30, 1
      %p106 = scmp.ne.s32.totalorder %s101, %s103
      %p107 = scmp.eq.s32.totalorder %s30, 0
      %p108 = por %p106, %p107
      %p109 = scmp.ne.s32.totalorder %s101, %s103
      %p110 = scmp.eq.s32.totalorder %s35, 1
      %p111 = por %p109, %p110
      %p112 = scmp.ne.s32.totalorder %s103, %s104
      %p113 = scmp.eq.s32.totalorder %s35, 0
      %p114 = por %p112, %p113
      %p115 = scmp.ne.s32.totalorder %s103, %s104
      %p116 = scmp.eq.s32.totalorder %s36, 1
      %p117 = por %p115, %p116
      %p119 = scmp.ne.s32.totalorder %s104, %s118
      %p120 = scmp.eq.s32.totalorder %s36, 0
      %p121 = por %p119, %p120
      %s123 = sadd.s32 %s122, 1
      %p126 = scmp.eq.s32.totalorder %s30, 1
      %p127 = scmp.ne.s32.totalorder %s122, %s124
      %p128 = scmp.eq.s32.totalorder %s30, 0
      %p129 = por %p127, %p128
      %p130 = scmp.ne.s32.totalorder %s122, %s124
      %p131 = scmp.eq.s32.totalorder %s35, 1
      %p132 = por %p130, %p131
      %p133 = scmp.ne.s32.totalorder %s124, %s125
      %p134 = scmp.eq.s32.totalorder %s35, 0
      %p135 = por %p133, %p134
      %p136 = scmp.ne.s32.totalorder %s124, %s125
      %p137 = scmp.eq.s32.totalorder %s36, 1
      %p138 = por %p136, %p137
      %p140 = scmp.ne.s32.totalorder %s125, %s139
      %p141 = scmp.eq.s32.totalorder %s36, 0
      %p142 = por %p140, %p141
      %s144 = sadd.s32 %s143, 1
      %p147 = scmp.eq.s32.totalorder %s30, 1
      %p148 = scmp.ne.s32.totalorder %s143, %s145
      %p149 = scmp.eq.s32.totalorder %s30, 0
      %p150 = por %p148, %p149
      %p151 = scmp.ne.s32.totalorder %s143, %s145
      %p152 = scmp.eq.s32.totalorder %s35, 1
      %p153 = por %p151, %p152
      %p154 = scmp.ne.s32.totalorder %s145, %s146
      %p155 = scmp.eq.s32.totalorder %s35, 0
      %p156 = por %p154, %p155
      %p157 = scmp.ne.s32.totalorder %s145, %s146
      %p158 = scmp.eq.s32.totalorder %s36, 1
      %p159 = por %p157, %p158
      %p161 = scmp.ne.s32.totalorder %s146, %s160
      %p162 = scmp.eq.s32.totalorder %s36, 0
      %p163 = por %p161, %p162
      %s164 = ssub.s32 %s30, %s37
      %p165 = scmp.eq.s32.totalorder %s164, 0
      %s167 = sadd.s32 %s166, 1
      %s168 = scalar_select %p165, %s166, %s167
      %p171 = pneg %p165
      %p172 = scmp.eq.s32.totalorder %s30, 1
      %p173 = por %p171, %p172
      %p174 = scmp.ne.s32.totalorder %s166, %s169
      %p175 = scmp.eq.s32.totalorder %s30, 0
      %p176 = por %p174, %p175
      %p177 = scmp.ne.s32.totalorder %s166, %s169
      %p178 = scmp.eq.s32.totalorder %s35, 1
      %p179 = por %p177, %p178
      %p180 = scmp.ne.s32.totalorder %s169, %s170
      %p181 = scmp.eq.s32.totalorder %s35, 0
      %p182 = por %p180, %p181
      %p183 = scmp.ne.s32.totalorder %s169, %s170
      %p184 = scmp.eq.s32.totalorder %s36, 1
      %p185 = por %p183, %p184
      %p187 = scmp.ne.s32.totalorder %s170, %s186
      %p188 = scmp.eq.s32.totalorder %s36, 0
      %p189 = por %p187, %p188
      %p190 = scmp.le.s32.totalorder 1, %s30
      %p191 = scmp.lt.s32.totalorder %s30, 3
      %p192 = pnand %p190, %p191
      %p193 = pneg %p192
      // Predicated region
      $region9: #{tpu_custom_call.1} parent=5 // pred_check
        _
      $region10: #{tpu_custom_call.1} parent=5 // pred_check_branch
        %195 = sbr.rel (%p192) target = $region12
      $region11: #{tpu_custom_call.1} parent=5 // pred_region
        %s196 = ssub.s32 %s30, 1
        // Predicated region
        $region13: #{tpu_custom_call.1} parent=11 // pred_check
          %p197 = pneg %p51
        $region14: #{tpu_custom_call.1} parent=11 // pred_check_branch
          %199 = sbr.rel (%p197) target = $region16
        $region15: #{tpu_custom_call.1} parent=11 // pred_region
          _
        $region16: #{tpu_custom_call.1} parent=11 // pred_fallthru
          _
        // Predicated region
        $region17: #{tpu_custom_call.1} parent=11 // pred_check
          %p200 = pneg %p72
        $region18: #{tpu_custom_call.1} parent=11 // pred_check_branch
          %202 = sbr.rel (%p200) target = $region20
        $region19: #{tpu_custom_call.1} parent=11 // pred_region
          _
        $region20: #{tpu_custom_call.1} parent=11 // pred_fallthru
          _
        // Predicated region
        $region21: #{tpu_custom_call.1} parent=11 // pred_check
          %p203 = pneg %p93
        $region22: #{tpu_custom_call.1} parent=11 // pred_check_branch
          %205 = sbr.rel (%p203) target = $region24
        $region23: #{tpu_custom_call.1} parent=11 // pred_region
          _
        $region24: #{tpu_custom_call.1} parent=11 // pred_fallthru
          _
        // Predicated region
        $region25: #{tpu_custom_call.1} parent=11 // pred_check
          %p206 = pneg %p114
        $region26: #{tpu_custom_call.1} parent=11 // pred_check_branch
          %208 = sbr.rel (%p206) target = $region28
        $region27: #{tpu_custom_call.1} parent=11 // pred_region
          _
        $region28: #{tpu_custom_call.1} parent=11 // pred_fallthru
          _
        // Predicated region
        $region29: #{tpu_custom_call.1} parent=11 // pred_check
          %p209 = pneg %p135
        $region30: #{tpu_custom_call.1} parent=11 // pred_check_branch
          %211 = sbr.rel (%p209) target = $region32
        $region31: #{tpu_custom_call.1} parent=11 // pred_region
          _
        $region32: #{tpu_custom_call.1} parent=11 // pred_fallthru
          _
        // Predicated region
        $region33: #{tpu_custom_call.1} parent=11 // pred_check
          %p212 = pneg %p156
        $region34: #{tpu_custom_call.1} parent=11 // pred_check_branch
          %214 = sbr.rel (%p212) target = $region36
        $region35: #{tpu_custom_call.1} parent=11 // pred_region
          _
        $region36: #{tpu_custom_call.1} parent=11 // pred_fallthru
          _
      $region12: #{tpu_custom_call.1} parent=5 // pred_fallthru
        _
      %p215 = scmp.lt.s32.totalorder %s30, 2
      // Predicated region
      $region37: #{tpu_custom_call.1} parent=5 // pred_check
        %p216 = pneg %p215
      $region38: #{tpu_custom_call.1} parent=5 // pred_check_branch
        %218 = sbr.rel (%p216) target = $region40
      $region39: #{tpu_custom_call.1} parent=5 // pred_region
        _
      $region40: #{tpu_custom_call.1} parent=5 // pred_fallthru
        _
      %p219 = scmp.le.s32.totalorder 1, %s30
      %p220 = scmp.lt.s32.totalorder %s30, 3
      %p221 = pnand %p219, %p220
      %p222 = pneg %p221
      // Predicated region
      $region41: #{tpu_custom_call.1} parent=5 // pred_check
        _
      $region42: #{tpu_custom_call.1} parent=5 // pred_check_branch
        %224 = sbr.rel (%p221) target = $region44
      $region43: #{tpu_custom_call.1} parent=5 // pred_region
        %s225 = ssub.s32 %s30, 1
        %p226 = pneg %p51
        %p227 = pneg %p48
        %p228 = pneg %p72
        %p229 = pneg %p69
        %p230 = pneg %p93
        %p231 = pneg %p90
        %p232 = pneg %p114
        %p233 = pneg %p111
        %p234 = pneg %p135
        %p235 = pneg %p132
        %p236 = pneg %p156
        %p237 = pneg %p153
        %p238 = pneg %p182
        %p239 = pneg %p179
        %s240 = sand.u32 %s169, 1
        %s241 = scalar_lea.sflag [#allocation8], %s240
        %s242 = sand.u32 %s169, 1
        %s243 = smul.addr %s242, 64
        %s244 = scalar_lea.vmem [#allocation7], %s243
        %p246 = scmp.eq.s32.totalorder %s35, 0
        // Predicated region
        $region45: #{tpu_custom_call.1} parent=43 // pred_check
          %p247 = pneg %p246
        $region46: #{tpu_custom_call.1} parent=43 // pred_check_branch
          %249 = sbr.rel (%p247) target = $region48
        $region47: #{tpu_custom_call.1} parent=43 // pred_region
          %v250 = vld [vmem:[%s7] sm:$0xff]
          %v251 = vld [vmem:[%s7 + $0x8] sm:$0xff]
          %vm252 = vcmask 261120
          %253 = vst.msk [vmem:[#allocation2] sm:$0xff] %vm252, %v250
          %254 = vst.msk [vmem:[#allocation2 + $0x8] sm:$0xff] %vm252, %v251
          %255 = vst.msk [vmem:[#allocation3] sm:$0xff] %vm252, 0.0
        $region48: #{tpu_custom_call.1} parent=43 // pred_fallthru
          _
        %v256 = vlaneseq
        %v257 = vand.u32 %v256, 127
        %vm258 = vcmp.lt.s32.totalorder %v257, 64
        %s259 = smul.u32 %s35, 8
        %s260 = sld [smem:[#allocation5 + %s259]]
        %p261 = scmp.eq.s32.totalorder %s260, 1
        // Predicated region
        $region49: #{tpu_custom_call.1} parent=43 // pred_check
          %p262 = pneg %p261
        $region50: #{tpu_custom_call.1} parent=43 // pred_check_branch
          %264 = sbr.rel (%p262) target = $region52
        $region51: #{tpu_custom_call.1} parent=43 // pred_region
          %s265 = smul.u32 %s35, 64
          %s266 = sld [smem:[#allocation6 + %s265]]
          %s267 = scalar_lea.vmem %s2, %s266
          %v268 = vld [vmem:[%s267] sm:$0x1]
          %vm269 = vcmask 253952
          %270 = vst.msk [vmem:[#allocation3] sm:$0x1] %vm269, %v268
          %s271 = sadd.s32 %s265, 1
          %s272 = sld [smem:[#allocation6 + %s271]]
          %s273 = scalar_lea.vmem %s2, %s272
          %v274 = vld [vmem:[%s273] sm:$0x1]
          %275 = vst.msk [vmem:[#allocation3 + $0x1] sm:$0x1] %vm269, %v274
          %s276 = sadd.s32 %s265, 2
          %s277 = sld [smem:[#allocation6 + %s276]]
          %s278 = scalar_lea.vmem %s2, %s277
          %v279 = vld [vmem:[%s278] sm:$0x1]
          %280 = vst.msk [vmem:[#allocation3 + $0x2] sm:$0x1] %vm269, %v279
          %s281 = sadd.s32 %s265, 3
          %s282 = sld [smem:[#allocation6 + %s281]]
          %s283 = scalar_lea.vmem %s2, %s282
          %v284 = vld [vmem:[%s283] sm:$0x1]
          %285 = vst.msk [vmem:[#allocation3 + $0x3] sm:$0x1] %vm269, %v284
          %s286 = sadd.s32 %s265, 4
          %s287 = sld [smem:[#allocation6 + %s286]]
          %s288 = scalar_lea.vmem %s2, %s287
          %v289 = vld [vmem:[%s288] sm:$0x1]
          %290 = vst.msk [vmem:[#allocation3 + $0x4] sm:$0x1] %vm269, %v289
          %s291 = sadd.s32 %s265, 5
          %s292 = sld [smem:[#allocation6 + %s291]]
          %s293 = scalar_lea.vmem %s2, %s292
          %v294 = vld [vmem:[%s293] sm:$0x1]
          %295 = vst.msk [vmem:[#allocation3 + $0x5] sm:$0x1] %vm269, %v294
          %s296 = sadd.s32 %s265, 6
          %s297 = sld [smem:[#allocation6 + %s296]]
          %s298 = scalar_lea.vmem %s2, %s297
          %v299 = vld [vmem:[%s298] sm:$0x1]
          %300 = vst.msk [vmem:[#allocation3 + $0x6] sm:$0x1] %vm269, %v299
          %s301 = sadd.s32 %s265, 7
          %s302 = sld [smem:[#allocation6 + %s301]]
          %s303 = scalar_lea.vmem %s2, %s302
          %v304 = vld [vmem:[%s303] sm:$0x1]
          %305 = vst.msk [vmem:[#allocation3 + $0x7] sm:$0x1] %vm269, %v304
        $region52: #{tpu_custom_call.1} parent=43 // pred_fallthru
          _
        %v306 = vld [vmem:[#allocation3] sm:$0xff]
        %v307 = vpack.c.bf16 %v306, %v306
        %v308 = vld [vmem:[#allocation2] sm:$0xff]
        %v309 = vpack.c.bf16 %v308, %v308
        %v310 = vld [vmem:[%s4] sm:$0xf]
        %v311 = vld [vmem:[%s4 + $0x4] sm:$0xf]
        %v312 = vld [vmem:[%s4 + $0x8] sm:$0xf]
        %v313 = vld [vmem:[%s4 + $0xc] sm:$0xf]
        %v314 = vld [vmem:[%s5] sm:$0xf]
        %v315 = vld [vmem:[%s5 + $0x4] sm:$0xf]
        %v316 = vld [vmem:[%s5 + $0x8] sm:$0xf]
        %v317 = vld [vmem:[%s5 + $0xc] sm:$0xf]
        %v322 = vunpack.c.l.b16 %v314
        %v323 = vunpack.c.l.b16 %v315
        %v324 = vunpack.c.l.b16 %v316
        %v325 = vunpack.c.l.b16 %v317
        %v326 = vpack.c.b16 %v323, %v322
        %v327 = vpack.c.b16 %v325, %v324
        %vm330 = vcmask 261120
        %v332 = vsel %vm330, %v309, 0
        %334 = vmatpush.bf16.msra.mxu0 0
        %335 = vmatpush.bf16.msra.mxu0 0
        %336 = vmatpush.bf16.msra.mxu0 0
        %337 = vmatpush.bf16.msra.mxu0 0
        %338 = vmatpush.bf16.msra.mxu0 0
        %339 = vmatpush.bf16.msra.mxu0 0
        %340 = vmatpush.bf16.msra.mxu0 %v327
        %341 = vmatpush.bf16.msra.mxu0 %v326
        %342 = vmatmul.bf16.gmra.mxu0 %v332
        %v343 = vpop.f32.mrf.mxu0
        %v344 = vadd.f32 0.0, %v343
        %v345 = vpop.f32.mrf.mxu0
        %346 = vdwg.mxu0
        %v351 = vunpack.c.l.b16 %v310
        %v352 = vunpack.c.l.b16 %v311
        %v353 = vunpack.c.l.b16 %v312
        %v354 = vunpack.c.l.b16 %v313
        %v355 = vpack.c.b16 %v352, %v351
        %v356 = vpack.c.b16 %v354, %v353
        %v360 = vsel %vm330, %v307, 0
        %362 = vmatpush.bf16.msra.mxu0 0
        %363 = vmatpush.bf16.msra.mxu0 0
        %364 = vmatpush.bf16.msra.mxu0 0
        %365 = vmatpush.bf16.msra.mxu0 0
        %366 = vmatpush.bf16.msra.mxu0 0
        %367 = vmatpush.bf16.msra.mxu0 0
        %368 = vmatpush.bf16.msra.mxu0 %v356
        %369 = vmatpush.bf16.msra.mxu0 %v355
        %370 = vmatmul.bf16.gmra.mxu0 %v360
        %v371 = vpop.f32.mrf.mxu0
        %v372 = vadd.f32 %v344, %v371
        %v373 = vpop.f32.mrf.mxu0
        %374 = vdwg.mxu0
        %v375 = vld [vmem:[%s6] sm:$0x1]
        %v377 = vperm.slane %v375, 0
        %v379 = vadd.f32 %v372, %v377
        %v380 = vtanh.pop %v379
        %381 = vst.msk [vmem:[#allocation2] sm:$0xff] %vm330, %v380
        %v382 = vpack.c.bf16 %v380, %v380
        %s383 = scalar_lea.vmem [#allocation2], 8
        %v384 = vld [vmem:[%s383] sm:$0xff]
        %v385 = vpack.c.bf16 %v384, %v384
        %s386 = scalar_lea.vmem %s4, 16
        %v387 = vld [vmem:[%s386] sm:$0xf]
        %v388 = vld [vmem:[%s386 + $0x4] sm:$0xf]
        %v389 = vld [vmem:[%s386 + $0x8] sm:$0xf]
        %v390 = vld [vmem:[%s386 + $0xc] sm:$0xf]
        %s391 = scalar_lea.vmem %s5, 16
        %v392 = vld [vmem:[%s391] sm:$0xf]
        %v393 = vld [vmem:[%s391 + $0x4] sm:$0xf]
        %v394 = vld [vmem:[%s391 + $0x8] sm:$0xf]
        %v395 = vld [vmem:[%s391 + $0xc] sm:$0xf]
        %v400 = vunpack.c.l.b16 %v392
        %v401 = vunpack.c.l.b16 %v393
        %v402 = vunpack.c.l.b16 %v394
        %v403 = vunpack.c.l.b16 %v395
        %v404 = vpack.c.b16 %v401, %v400
        %v405 = vpack.c.b16 %v403, %v402
        %v409 = vsel %vm330, %v385, 0
        %411 = vmatpush.bf16.msra.mxu0 0
        %412 = vmatpush.bf16.msra.mxu0 0
        %413 = vmatpush.bf16.msra.mxu0 0
        %414 = vmatpush.bf16.msra.mxu0 0
        %415 = vmatpush.bf16.msra.mxu0 0
        %416 = vmatpush.bf16.msra.mxu0 0
        %417 = vmatpush.bf16.msra.mxu0 %v405
        %418 = vmatpush.bf16.msra.mxu0 %v404
        %419 = vmatmul.bf16.gmra.mxu0 %v409
        %v420 = vpop.f32.mrf.mxu0
        %v421 = vadd.f32 0.0, %v420
        %v422 = vpop.f32.mrf.mxu0
        %423 = vdwg.mxu0
        %v428 = vunpack.c.l.b16 %v387
        %v429 = vunpack.c.l.b16 %v388
        %v430 = vunpack.c.l.b16 %v389
        %v431 = vunpack.c.l.b16 %v390
        %v432 = vpack.c.b16 %v429, %v428
        %v433 = vpack.c.b16 %v431, %v430
        %v437 = vsel %vm330, %v382, 0
        %439 = vmatpush.bf16.msra.mxu0 0
        %440 = vmatpush.bf16.msra.mxu0 0
        %441 = vmatpush.bf16.msra.mxu0 0
        %442 = vmatpush.bf16.msra.mxu0 0
        %443 = vmatpush.bf16.msra.mxu0 0
        %444 = vmatpush.bf16.msra.mxu0 0
        %445 = vmatpush.bf16.msra.mxu0 %v433
        %446 = vmatpush.bf16.msra.mxu0 %v432
        %447 = vmatmul.bf16.gmra.mxu0 %v437
        %v448 = vpop.f32.mrf.mxu0
        %v449 = vadd.f32 %v421, %v448
        %v450 = vpop.f32.mrf.mxu0
        %451 = vdwg.mxu0
        %s452 = scalar_lea.vmem %s6, 1
        %v453 = vld [vmem:[%s452] sm:$0x1]
        %v455 = vperm.slane %v453, 0
        %v457 = vadd.f32 %v449, %v455
        %v458 = vtanh.pop %v457
        %459 = vst.msk [vmem:[%s383] sm:$0xff] %vm330, %v458
        %v460 = vpack.c.bf16 %v458, %v458
        %v461 = vld [vmem:[%s3] sm:$0xf]
        %v462 = vld [vmem:[%s3 + $0x4] sm:$0xf]
        %v463 = vld [vmem:[%s3 + $0x8] sm:$0xf]
        %v464 = vld [vmem:[%s3 + $0xc] sm:$0xf]
        %v469 = vunpack.c.l.b16 %v461
        %v470 = vunpack.c.l.b16 %v462
        %v471 = vunpack.c.l.b16 %v463
        %v472 = vunpack.c.l.b16 %v464
        %v473 = vpack.c.b16 %v470, %v469
        %v474 = vpack.c.b16 %v472, %v471
        %v478 = vsel %vm330, %v460, 0
        %480 = vmatpush.bf16.msra.mxu0 0
        %481 = vmatpush.bf16.msra.mxu0 0
        %482 = vmatpush.bf16.msra.mxu0 0
        %483 = vmatpush.bf16.msra.mxu0 0
        %484 = vmatpush.bf16.msra.mxu0 0
        %485 = vmatpush.bf16.msra.mxu0 0
        %486 = vmatpush.bf16.msra.mxu0 %v474
        %487 = vmatpush.bf16.msra.mxu0 %v473
        %488 = vmatmul.bf16.gmra.mxu0 %v478
        %v489 = vpop.f32.mrf.mxu0
        %v490 = vadd.f32 0.0, %v489
        %v491 = vpop.f32.mrf.mxu0
        %492 = vdwg.mxu0
        %v494 = vrot.slane %v490, 1
        %v495 = vrot.slane %v490, 2
        %v496 = vrot.slane %v490, 3
        %v497 = vrot.slane %v490, 4
        %v498 = vrot.slane %v490, 5
        %v499 = vrot.slane %v490, 6
        %v500 = vrot.slane %v490, 7
        %508 = vst [vmem:[%s244] sm:$0x1] %v490
        %509 = vst [vmem:[%s244 + $0x8] sm:$0x1] %v494
        %510 = vst [vmem:[%s244 + $0x10] sm:$0x1] %v495
        %511 = vst [vmem:[%s244 + $0x18] sm:$0x1] %v496
        %512 = vst [vmem:[%s244 + $0x20] sm:$0x1] %v497
        %513 = vst [vmem:[%s244 + $0x28] sm:$0x1] %v498
        %514 = vst [vmem:[%s244 + $0x30] sm:$0x1] %v499
        %515 = vst [vmem:[%s244 + $0x38] sm:$0x1] %v500
        %s516 = sadd.s32 %s259, 1
        %p517 = scmp.lt.s32.totalorder %s516, 15
        %s518 = scalar_select %p517, %s516, 15
        %p519 = scmp.lt.s32.totalorder %s516, 16
        %s520 = sld [smem:[#allocation5 + %s518]]
        %p521 = scmp.eq.s32.totalorder %s520, 0
        %p522 = pnand %p519, %p521
        %p523 = pneg %p522
        // Predicated region
        $region53: #{tpu_custom_call.1} parent=43 // pred_check
          _
        $region54: #{tpu_custom_call.1} parent=43 // pred_check_branch
          %525 = sbr.rel (%p522) target = $region56
        $region55: #{tpu_custom_call.1} parent=43 // pred_region
          %v526 = vsel %vm258, %v490, -1e+30
          %527 = vmax.xlane.f32.xlu0 %v526
          %v528 = vpop.xlane.xlu0 %527
          %vm529 = vcmp.eq.f32.partialorder %v526, %v528
          %v530 = vsel %vm529, %v257, 128
          %v531 = vand.u32 %v530, 65535
          %v532 = vshra.s32 %v530, 16
          %v533 = vcvt.s32.f32 %v531
          %v534 = vcvt.s32.f32 %v532
          %535 = vmin.xlane.f32.xlu0 %v534
          %v536 = vpop.xlane.xlu0 %535
          %vm537 = vcmp.eq.f32.partialorder %v534, %v536
          %v538 = vsel %vm537, %v533, inf
          %539 = vmin.xlane.f32.xlu0 %v538
          %v540 = vpop.xlane.xlu0 %539
          %v541 = vcvt.f32.s32 %v540
          %v542 = vcvt.f32.s32 %v536
          %v543 = vshll.u32 %v542, 16
          %v544 = vadd.s32 %v543, %v541
          %vm545 = vcmp.eq.s32.totalorder %v257, %v544
          %v546 = vsel %vm545, 1, 0
          %v547 = vcvt.s32.f32 %v546
          %v548 = vld [vmem:[%s2] sm:$0xff]
          %v549 = vld [vmem:[%s2 + $0x8] sm:$0xff]
          %v550 = vld [vmem:[%s2 + $0x10] sm:$0xff]
          %v551 = vld [vmem:[%s2 + $0x18] sm:$0xff]
          %v552 = vld [vmem:[%s2 + $0x20] sm:$0xff]
          %v553 = vld [vmem:[%s2 + $0x28] sm:$0xff]
          %v554 = vld [vmem:[%s2 + $0x30] sm:$0xff]
          %v555 = vld [vmem:[%s2 + $0x38] sm:$0xff]
          %v556 = vld [vmem:[%s2 + $0x40] sm:$0xff]
          %v557 = vld [vmem:[%s2 + $0x48] sm:$0xff]
          %v558 = vld [vmem:[%s2 + $0x50] sm:$0xff]
          %v559 = vld [vmem:[%s2 + $0x58] sm:$0xff]
          %v560 = vld [vmem:[%s2 + $0x60] sm:$0xff]
          %v561 = vld [vmem:[%s2 + $0x68] sm:$0xff]
          %v562 = vld [vmem:[%s2 + $0x70] sm:$0xff]
          %v563 = vld [vmem:[%s2 + $0x78] sm:$0xff]
          %564 = vmatpush.msra.mxu0 %v563
          %565 = vmatpush.msra.mxu0 %v562
          %566 = vmatpush.msra.mxu0 %v561
          %567 = vmatpush.msra.mxu0 %v560
          %568 = vmatpush.msra.mxu0 %v559
          %569 = vmatpush.msra.mxu0 %v558
          %570 = vmatpush.msra.mxu0 %v557
          %571 = vmatpush.msra.mxu0 %v556
          %572 = vmatpush.msra.mxu0 %v555
          %573 = vmatpush.msra.mxu0 %v554
          %574 = vmatpush.msra.mxu0 %v553
          %575 = vmatpush.msra.mxu0 %v552
          %576 = vmatpush.msra.mxu0 %v551
          %577 = vmatpush.msra.mxu0 %v550
          %578 = vmatpush.msra.mxu0 %v549
          %579 = vmatpush.msra.mxu0 %v548
          %580 = vmatmul.f32.gmra.mxu0 %v547
          %v581 = vpop.f32.mrf.mxu0
          %v582 = vadd.f32 0.0, %v581
          %583 = vdwg.mxu0
          %584 = vst.msk [vmem:[#allocation3] sm:$0xff] %vm330, %v582
        $region56: #{tpu_custom_call.1} parent=43 // pred_fallthru
          _
        %s585 = sld [smem:[#allocation5 + %s516]]
        %p586 = scmp.eq.s32.totalorder %s585, 1
        // Predicated region
        $region57: #{tpu_custom_call.1} parent=43 // pred_check
          %p587 = pneg %p586
        $region58: #{tpu_custom_call.1} parent=43 // pred_check_branch
          %589 = sbr.rel (%p587) target = $region60
        $region59: #{tpu_custom_call.1} parent=43 // pred_region
          %s590 = smul.u32 %s516, 8
          %s591 = sld [smem:[#allocation6 + %s590]]
          %s592 = scalar_lea.vmem %s2, %s591
          %v593 = vld [vmem:[%s592] sm:$0x1]
          %vm594 = vcmask 253952
          %595 = vst.msk [vmem:[#allocation3] sm:$0x1] %vm594, %v593
          %s596 = sadd.s32 %s590, 1
          %s597 = sld [smem:[#allocation6 + %s596]]
          %s598 = scalar_lea.vmem %s2, %s597
          %v599 = vld [vmem:[%s598] sm:$0x1]
          %600 = vst.msk [vmem:[#allocation3 + $0x1] sm:$0x1] %vm594, %v599
          %s601 = sadd.s32 %s590, 2
          %s602 = sld [smem:[#allocation6 + %s601]]
          %s603 = scalar_lea.vmem %s2, %s602
          %v604 = vld [vmem:[%s603] sm:$0x1]
          %605 = vst.msk [vmem:[#allocation3 + $0x2] sm:$0x1] %vm594, %v604
          %s606 = sadd.s32 %s590, 3
          %s607 = sld [smem:[#allocation6 + %s606]]
          %s608 = scalar_lea.vmem %s2, %s607
          %v609 = vld [vmem:[%s608] sm:$0x1]
          %610 = vst.msk [vmem:[#allocation3 + $0x3] sm:$0x1] %vm594, %v609
          %s611 = sadd.s32 %s590, 4
          %s612 = sld [smem:[#allocation6 + %s611]]
          %s613 = scalar_lea.vmem %s2, %s612
          %v614 = vld [vmem:[%s613] sm:$0x1]
          %615 = vst.msk [vmem:[#allocation3 + $0x4] sm:$0x1] %vm594, %v614
          %s616 = sadd.s32 %s590, 5
          %s617 = sld [smem:[#allocation6 + %s616]]
          %s618 = scalar_lea.vmem %s2, %s617
          %v619 = vld [vmem:[%s618] sm:$0x1]
          %620 = vst.msk [vmem:[#allocation3 + $0x5] sm:$0x1] %vm594, %v619
          %s621 = sadd.s32 %s590, 6
          %s622 = sld [smem:[#allocation6 + %s621]]
          %s623 = scalar_lea.vmem %s2, %s622
          %v624 = vld [vmem:[%s623] sm:$0x1]
          %625 = vst.msk [vmem:[#allocation3 + $0x6] sm:$0x1] %vm594, %v624
          %s626 = sadd.s32 %s590, 7
          %s627 = sld [smem:[#allocation6 + %s626]]
          %s628 = scalar_lea.vmem %s2, %s627
          %v629 = vld [vmem:[%s628] sm:$0x1]
          %630 = vst.msk [vmem:[#allocation3 + $0x7] sm:$0x1] %vm594, %v629
        $region60: #{tpu_custom_call.1} parent=43 // pred_fallthru
          _
        %v631 = vld [vmem:[#allocation3] sm:$0xff]
        %v632 = vpack.c.bf16 %v631, %v631
        %v633 = vld [vmem:[#allocation2] sm:$0xff]
        %v634 = vpack.c.bf16 %v633, %v633
        %v635 = vld [vmem:[%s4] sm:$0xf]
        %v636 = vld [vmem:[%s4 + $0x4] sm:$0xf]
        %v637 = vld [vmem:[%s4 + $0x8] sm:$0xf]
        %v638 = vld [vmem:[%s4 + $0xc] sm:$0xf]
        %v639 = vld [vmem:[%s5] sm:$0xf]
        %v640 = vld [vmem:[%s5 + $0x4] sm:$0xf]
        %v641 = vld [vmem:[%s5 + $0x8] sm:$0xf]
        %v642 = vld [vmem:[%s5 + $0xc] sm:$0xf]
        %v647 = vunpack.c.l.b16 %v639
        %v648 = vunpack.c.l.b16 %v640
        %v649 = vunpack.c.l.b16 %v641
        %v650 = vunpack.c.l.b16 %v642
        %v651 = vpack.c.b16 %v648, %v647
        %v652 = vpack.c.b16 %v650, %v649
        %v656 = vsel %vm330, %v634, 0
        %658 = vmatpush.bf16.msra.mxu0 0
        %659 = vmatpush.bf16.msra.mxu0 0
        %660 = vmatpush.bf16.msra.mxu0 0
        %661 = vmatpush.bf16.msra.mxu0 0
        %662 = vmatpush.bf16.msra.mxu0 0
        %663 = vmatpush.bf16.msra.mxu0 0
        %664 = vmatpush.bf16.msra.mxu0 %v652
        %665 = vmatpush.bf16.msra.mxu0 %v651
        %666 = vmatmul.bf16.gmra.mxu0 %v656
        %v667 = vpop.f32.mrf.mxu0
        %v668 = vadd.f32 0.0, %v667
        %v669 = vpop.f32.mrf.mxu0
        %670 = vdwg.mxu0
        %v675 = vunpack.c.l.b16 %v635
        %v676 = vunpack.c.l.b16 %v636
        %v677 = vunpack.c.l.b16 %v637
        %v678 = vunpack.c.l.b16 %v638
        %v679 = vpack.c.b16 %v676, %v675
        %v680 = vpack.c.b16 %v678, %v677
        %v684 = vsel %vm330, %v632, 0
        %686 = vmatpush.bf16.msra.mxu0 0
        %687 = vmatpush.bf16.msra.mxu0 0
        %688 = vmatpush.bf16.msra.mxu0 0
        %689 = vmatpush.bf16.msra.mxu0 0
        %690 = vmatpush.bf16.msra.mxu0 0
        %691 = vmatpush.bf16.msra.mxu0 0
        %692 = vmatpush.bf16.msra.mxu0 %v680
        %693 = vmatpush.bf16.msra.mxu0 %v679
        %694 = vmatmul.bf16.gmra.mxu0 %v684
        %v695 = vpop.f32.mrf.mxu0
        %v696 = vadd.f32 %v668, %v695
        %v697 = vpop.f32.mrf.mxu0
        %698 = vdwg.mxu0
        %v699 = vld [vmem:[%s6] sm:$0x1]
        %v701 = vperm.slane %v699, 0
        %v703 = vadd.f32 %v696, %v701
        %v704 = vtanh.pop %v703
        %705 = vst.msk [vmem:[#allocation2] sm:$0xff] %vm330, %v704
        %v706 = vpack.c.bf16 %v704, %v704
        %v707 = vld [vmem:[%s383] sm:$0xff]
        %v708 = vpack.c.bf16 %v707, %v707
        %v709 = vld [vmem:[%s386] sm:$0xf]
        %v710 = vld [vmem:[%s386 + $0x4] sm:$0xf]
        %v711 = vld [vmem:[%s386 + $0x8] sm:$0xf]
        %v712 = vld [vmem:[%s386 + $0xc] sm:$0xf]
        %v713 = vld [vmem:[%s391] sm:$0xf]
        %v714 = vld [vmem:[%s391 + $0x4] sm:$0xf]
        %v715 = vld [vmem:[%s391 + $0x8] sm:$0xf]
        %v716 = vld [vmem:[%s391 + $0xc] sm:$0xf]
        %v721 = vunpack.c.l.b16 %v713
        %v722 = vunpack.c.l.b16 %v714
        %v723 = vunpack.c.l.b16 %v715
        %v724 = vunpack.c.l.b16 %v716
        %v725 = vpack.c.b16 %v722, %v721
        %v726 = vpack.c.b16 %v724, %v723
        %v730 = vsel %vm330, %v708, 0
        %732 = vmatpush.bf16.msra.mxu0 0
        %733 = vmatpush.bf16.msra.mxu0 0
        %734 = vmatpush.bf16.msra.mxu0 0
        %735 = vmatpush.bf16.msra.mxu0 0
        %736 = vmatpush.bf16.msra.mxu0 0
        %737 = vmatpush.bf16.msra.mxu0 0
        %738 = vmatpush.bf16.msra.mxu0 %v726
        %739 = vmatpush.bf16.msra.mxu0 %v725
        %740 = vmatmul.bf16.gmra.mxu0 %v730
        %v741 = vpop.f32.mrf.mxu0
        %v742 = vadd.f32 0.0, %v741
        %v743 = vpop.f32.mrf.mxu0
        %744 = vdwg.mxu0
        %v749 = vunpack.c.l.b16 %v709
        %v750 = vunpack.c.l.b16 %v710
        %v751 = vunpack.c.l.b16 %v711
        %v752 = vunpack.c.l.b16 %v712
        %v753 = vpack.c.b16 %v750, %v749
        %v754 = vpack.c.b16 %v752, %v751
        %v758 = vsel %vm330, %v706, 0
        %760 = vmatpush.bf16.msra.mxu0 0
        %761 = vmatpush.bf16.msra.mxu0 0
        %762 = vmatpush.bf16.msra.mxu0 0
        %763 = vmatpush.bf16.msra.mxu0 0
        %764 = vmatpush.bf16.msra.mxu0 0
        %765 = vmatpush.bf16.msra.mxu0 0
        %766 = vmatpush.bf16.msra.mxu0 %v754
        %767 = vmatpush.bf16.msra.mxu0 %v753
        %768 = vmatmul.bf16.gmra.mxu0 %v758
        %v769 = vpop.f32.mrf.mxu0
        %v770 = vadd.f32 %v742, %v769
        %v771 = vpop.f32.mrf.mxu0
        %772 = vdwg.mxu0
        %v773 = vld [vmem:[%s452] sm:$0x1]
        %v775 = vperm.slane %v773, 0
        %v777 = vadd.f32 %v770, %v775
        %v778 = vtanh.pop %v777
        %779 = vst.msk [vmem:[%s383] sm:$0xff] %vm330, %v778
        %v780 = vpack.c.bf16 %v778, %v778
        %v781 = vld [vmem:[%s3] sm:$0xf]
        %v782 = vld [vmem:[%s3 + $0x4] sm:$0xf]
        %v783 = vld [vmem:[%s3 + $0x8] sm:$0xf]
        %v784 = vld [vmem:[%s3 + $0xc] sm:$0xf]
        %v789 = vunpack.c.l.b16 %v781
        %v790 = vunpack.c.l.b16 %v782
        %v791 = vunpack.c.l.b16 %v783
        %v792 = vunpack.c.l.b16 %v784
        %v793 = vpack.c.b16 %v790, %v789
        %v794 = vpack.c.b16 %v792, %v791
        %v798 = vsel %vm330, %v780, 0
        %800 = vmatpush.bf16.msra.mxu0 0
        %801 = vmatpush.bf16.msra.mxu0 0
        %802 = vmatpush.bf16.msra.mxu0 0
        %803 = vmatpush.bf16.msra.mxu0 0
        %804 = vmatpush.bf16.msra.mxu0 0
        %805 = vmatpush.bf16.msra.mxu0 0
        %806 = vmatpush.bf16.msra.mxu0 %v794
        %807 = vmatpush.bf16.msra.mxu0 %v793
        %808 = vmatmul.bf16.gmra.mxu0 %v798
        %v809 = vpop.f32.mrf.mxu0
        %v810 = vadd.f32 0.0, %v809
        %v811 = vpop.f32.mrf.mxu0
        %812 = vdwg.mxu0
        %v814 = vrot.slane %v810, 1
        %v815 = vrot.slane %v810, 2
        %v816 = vrot.slane %v810, 3
        %v817 = vrot.slane %v810, 4
        %v818 = vrot.slane %v810, 5
        %v819 = vrot.slane %v810, 6
        %v820 = vrot.slane %v810, 7
        %828 = vst [vmem:[%s244 + $0x1] sm:$0x1] %v810
        %829 = vst [vmem:[%s244 + $0x9] sm:$0x1] %v814
        %830 = vst [vmem:[%s244 + $0x11] sm:$0x1] %v815
        %831 = vst [vmem:[%s244 + $0x19] sm:$0x1] %v816
        %832 = vst [vmem:[%s244 + $0x21] sm:$0x1] %v817
        %833 = vst [vmem:[%s244 + $0x29] sm:$0x1] %v818
        %834 = vst [vmem:[%s244 + $0x31] sm:$0x1] %v819
        %835 = vst [vmem:[%s244 + $0x39] sm:$0x1] %v820
        %s836 = sadd.s32 %s259, 2
        %p837 = scmp.lt.s32.totalorder %s836, 15
        %s838 = scalar_select %p837, %s836, 15
        %p839 = scmp.lt.s32.totalorder %s836, 16
        %s840 = sld [smem:[#allocation5 + %s838]]
        %p841 = scmp.eq.s32.totalorder %s840, 0
        %p842 = pnand %p839, %p841
        %p843 = pneg %p842
        // Predicated region
        $region61: #{tpu_custom_call.1} parent=43 // pred_check
          _
        $region62: #{tpu_custom_call.1} parent=43 // pred_check_branch
          %845 = sbr.rel (%p842) target = $region64
        $region63: #{tpu_custom_call.1} parent=43 // pred_region
          %v846 = vsel %vm258, %v810, -1e+30
          %847 = vmax.xlane.f32.xlu0 %v846
          %v848 = vpop.xlane.xlu0 %847
          %vm849 = vcmp.eq.f32.partialorder %v846, %v848
          %v850 = vsel %vm849, %v257, 128
          %v851 = vand.u32 %v850, 65535
          %v852 = vshra.s32 %v850, 16
          %v853 = vcvt.s32.f32 %v851
          %v854 = vcvt.s32.f32 %v852
          %855 = vmin.xlane.f32.xlu0 %v854
          %v856 = vpop.xlane.xlu0 %855
          %vm857 = vcmp.eq.f32.partialorder %v854, %v856
          %v858 = vsel %vm857, %v853, inf
          %859 = vmin.xlane.f32.xlu0 %v858
          %v860 = vpop.xlane.xlu0 %859
          %v861 = vcvt.f32.s32 %v860
          %v862 = vcvt.f32.s32 %v856
          %v863 = vshll.u32 %v862, 16
          %v864 = vadd.s32 %v863, %v861
          %vm865 = vcmp.eq.s32.totalorder %v257, %v864
          %v866 = vsel %vm865, 1, 0
          %v867 = vcvt.s32.f32 %v866
          %v868 = vld [vmem:[%s2] sm:$0xff]
          %v869 = vld [vmem:[%s2 + $0x8] sm:$0xff]
          %v870 = vld [vmem:[%s2 + $0x10] sm:$0xff]
          %v871 = vld [vmem:[%s2 + $0x18] sm:$0xff]
          %v872 = vld [vmem:[%s2 + $0x20] sm:$0xff]
          %v873 = vld [vmem:[%s2 + $0x28] sm:$0xff]
          %v874 = vld [vmem:[%s2 + $0x30] sm:$0xff]
          %v875 = vld [vmem:[%s2 + $0x38] sm:$0xff]
          %v876 = vld [vmem:[%s2 + $0x40] sm:$0xff]
          %v877 = vld [vmem:[%s2 + $0x48] sm:$0xff]
          %v878 = vld [vmem:[%s2 + $0x50] sm:$0xff]
          %v879 = vld [vmem:[%s2 + $0x58] sm:$0xff]
          %v880 = vld [vmem:[%s2 + $0x60] sm:$0xff]
          %v881 = vld [vmem:[%s2 + $0x68] sm:$0xff]
          %v882 = vld [vmem:[%s2 + $0x70] sm:$0xff]
          %v883 = vld [vmem:[%s2 + $0x78] sm:$0xff]
          %884 = vmatpush.msra.mxu0 %v883
          %885 = vmatpush.msra.mxu0 %v882
          %886 = vmatpush.msra.mxu0 %v881
          %887 = vmatpush.msra.mxu0 %v880
          %888 = vmatpush.msra.mxu0 %v879
          %889 = vmatpush.msra.mxu0 %v878
          %890 = vmatpush.msra.mxu0 %v877
          %891 = vmatpush.msra.mxu0 %v876
          %892 = vmatpush.msra.mxu0 %v875
          %893 = vmatpush.msra.mxu0 %v874
          %894 = vmatpush.msra.mxu0 %v873
          %895 = vmatpush.msra.mxu0 %v872
          %896 = vmatpush.msra.mxu0 %v871
          %897 = vmatpush.msra.mxu0 %v870
          %898 = vmatpush.msra.mxu0 %v869
          %899 = vmatpush.msra.mxu0 %v868
          %900 = vmatmul.f32.gmra.mxu0 %v867
          %v901 = vpop.f32.mrf.mxu0
          %v902 = vadd.f32 0.0, %v901
          %903 = vdwg.mxu0
          %904 = vst.msk [vmem:[#allocation3] sm:$0xff] %vm330, %v902
        $region64: #{tpu_custom_call.1} parent=43 // pred_fallthru
          _
        %s905 = sld [smem:[#allocation5 + %s836]]
        %p906 = scmp.eq.s32.totalorder %s905, 1
        // Predicated region
        $region65: #{tpu_custom_call.1} parent=43 // pred_check
          %p907 = pneg %p906
        $region66: #{tpu_custom_call.1} parent=43 // pred_check_branch
          %909 = sbr.rel (%p907) target = $region68
        $region67: #{tpu_custom_call.1} parent=43 // pred_region
          %s910 = smul.u32 %s836, 8
          %s911 = sld [smem:[#allocation6 + %s910]]
          %s912 = scalar_lea.vmem %s2, %s911
          %v913 = vld [vmem:[%s912] sm:$0x1]
          %vm914 = vcmask 253952
          %915 = vst.msk [vmem:[#allocation3] sm:$0x1] %vm914, %v913
          %s916 = sadd.s32 %s910, 1
          %s917 = sld [smem:[#allocation6 + %s916]]
          %s918 = scalar_lea.vmem %s2, %s917
          %v919 = vld [vmem:[%s918] sm:$0x1]
          %920 = vst.msk [vmem:[#allocation3 + $0x1] sm:$0x1] %vm914, %v919
          %s921 = sadd.s32 %s910, 2
          %s922 = sld [smem:[#allocation6 + %s921]]
          %s923 = scalar_lea.vmem %s2, %s922
          %v924 = vld [vmem:[%s923] sm:$0x1]
          %925 = vst.msk [vmem:[#allocation3 + $0x2] sm:$0x1] %vm914, %v924
          %s926 = sadd.s32 %s910, 3
          %s927 = sld [smem:[#allocation6 + %s926]]
          %s928 = scalar_lea.vmem %s2, %s927
          %v929 = vld [vmem:[%s928] sm:$0x1]
          %930 = vst.msk [vmem:[#allocation3 + $0x3] sm:$0x1] %vm914, %v929
          %s931 = sadd.s32 %s910, 4
          %s932 = sld [smem:[#allocation6 + %s931]]
          %s933 = scalar_lea.vmem %s2, %s932
          %v934 = vld [vmem:[%s933] sm:$0x1]
          %935 = vst.msk [vmem:[#allocation3 + $0x4] sm:$0x1] %vm914, %v934
          %s936 = sadd.s32 %s910, 5
          %s937 = sld [smem:[#allocation6 + %s936]]
          %s938 = scalar_lea.vmem %s2, %s937
          %v939 = vld [vmem:[%s938] sm:$0x1]
          %940 = vst.msk [vmem:[#allocation3 + $0x5] sm:$0x1] %vm914, %v939
          %s941 = sadd.s32 %s910, 6
          %s942 = sld [smem:[#allocation6 + %s941]]
          %s943 = scalar_lea.vmem %s2, %s942
          %v944 = vld [vmem:[%s943] sm:$0x1]
          %945 = vst.msk [vmem:[#allocation3 + $0x6] sm:$0x1] %vm914, %v944
          %s946 = sadd.s32 %s910, 7
          %s947 = sld [smem:[#allocation6 + %s946]]
          %s948 = scalar_lea.vmem %s2, %s947
          %v949 = vld [vmem:[%s948] sm:$0x1]
          %950 = vst.msk [vmem:[#allocation3 + $0x7] sm:$0x1] %vm914, %v949
        $region68: #{tpu_custom_call.1} parent=43 // pred_fallthru
          _
        %v951 = vld [vmem:[#allocation3] sm:$0xff]
        %v952 = vpack.c.bf16 %v951, %v951
        %v953 = vld [vmem:[#allocation2] sm:$0xff]
        %v954 = vpack.c.bf16 %v953, %v953
        %v955 = vld [vmem:[%s4] sm:$0xf]
        %v956 = vld [vmem:[%s4 + $0x4] sm:$0xf]
        %v957 = vld [vmem:[%s4 + $0x8] sm:$0xf]
        %v958 = vld [vmem:[%s4 + $0xc] sm:$0xf]
        %v959 = vld [vmem:[%s5] sm:$0xf]
        %v960 = vld [vmem:[%s5 + $0x4] sm:$0xf]
        %v961 = vld [vmem:[%s5 + $0x8] sm:$0xf]
        %v962 = vld [vmem:[%s5 + $0xc] sm:$0xf]
        %v967 = vunpack.c.l.b16 %v959
        %v968 = vunpack.c.l.b16 %v960
        %v969 = vunpack.c.l.b16 %v961
        %v970 = vunpack.c.l.b16 %v962
        %v971 = vpack.c.b16 %v968, %v967
        %v972 = vpack.c.b16 %v970, %v969
        %v976 = vsel %vm330, %v954, 0
        %978 = vmatpush.bf16.msra.mxu0 0
        %979 = vmatpush.bf16.msra.mxu0 0
        %980 = vmatpush.bf16.msra.mxu0 0
        %981 = vmatpush.bf16.msra.mxu0 0
        %982 = vmatpush.bf16.msra.mxu0 0
        %983 = vmatpush.bf16.msra.mxu0 0
        %984 = vmatpush.bf16.msra.mxu0 %v972
        %985 = vmatpush.bf16.msra.mxu0 %v971
        %986 = vmatmul.bf16.gmra.mxu0 %v976
        %v987 = vpop.f32.mrf.mxu0
        %v988 = vadd.f32 0.0, %v987
        %v989 = vpop.f32.mrf.mxu0
        %990 = vdwg.mxu0
        %v995 = vunpack.c.l.b16 %v955
        %v996 = vunpack.c.l.b16 %v956
        %v997 = vunpack.c.l.b16 %v957
        %v998 = vunpack.c.l.b16 %v958
        %v999 = vpack.c.b16 %v996, %v995
        %v1000 = vpack.c.b16 %v998, %v997
        %v1004 = vsel %vm330, %v952, 0
        %1006 = vmatpush.bf16.msra.mxu0 0
        %1007 = vmatpush.bf16.msra.mxu0 0
        %1008 = vmatpush.bf16.msra.mxu0 0
        %1009 = vmatpush.bf16.msra.mxu0 0
        %1010 = vmatpush.bf16.msra.mxu0 0
        %1011 = vmatpush.bf16.msra.mxu0 0
        %1012 = vmatpush.bf16.msra.mxu0 %v1000
        %1013 = vmatpush.bf16.msra.mxu0 %v999
        %1014 = vmatmul.bf16.gmra.mxu0 %v1004
        %v1015 = vpop.f32.mrf.mxu0
        %v1016 = vadd.f32 %v988, %v1015
        %v1017 = vpop.f32.mrf.mxu0
        %1018 = vdwg.mxu0
        %v1019 = vld [vmem:[%s6] sm:$0x1]
        %v1021 = vperm.slane %v1019, 0
        %v1023 = vadd.f32 %v1016, %v1021
        %v1024 = vtanh.pop %v1023
        %1025 = vst.msk [vmem:[#allocation2] sm:$0xff] %vm330, %v1024
        %v1026 = vpack.c.bf16 %v1024, %v1024
        %v1027 = vld [vmem:[%s383] sm:$0xff]
        %v1028 = vpack.c.bf16 %v1027, %v1027
        %v1029 = vld [vmem:[%s386] sm:$0xf]
        %v1030 = vld [vmem:[%s386 + $0x4] sm:$0xf]
        %v1031 = vld [vmem:[%s386 + $0x8] sm:$0xf]
        %v1032 = vld [vmem:[%s386 + $0xc] sm:$0xf]
        %v1033 = vld [vmem:[%s391] sm:$0xf]
        %v1034 = vld [vmem:[%s391 + $0x4] sm:$0xf]
        %v1035 = vld [vmem:[%s391 + $0x8] sm:$0xf]
        %v1036 = vld [vmem:[%s391 + $0xc] sm:$0xf]
        %v1041 = vunpack.c.l.b16 %v1033
        %v1042 = vunpack.c.l.b16 %v1034
        %v1043 = vunpack.c.l.b16 %v1035
        %v1044 = vunpack.c.l.b16 %v1036
        %v1045 = vpack.c.b16 %v1042, %v1041
        %v1046 = vpack.c.b16 %v1044, %v1043
        %v1050 = vsel %vm330, %v1028, 0
        %1052 = vmatpush.bf16.msra.mxu0 0
        %1053 = vmatpush.bf16.msra.mxu0 0
        %1054 = vmatpush.bf16.msra.mxu0 0
        %1055 = vmatpush.bf16.msra.mxu0 0
        %1056 = vmatpush.bf16.msra.mxu0 0
        %1057 = vmatpush.bf16.msra.mxu0 0
        %1058 = vmatpush.bf16.msra.mxu0 %v1046
        %1059 = vmatpush.bf16.msra.mxu0 %v1045
        %1060 = vmatmul.bf16.gmra.mxu0 %v1050
        %v1061 = vpop.f32.mrf.mxu0
        %v1062 = vadd.f32 0.0, %v1061
        %v1063 = vpop.f32.mrf.mxu0
        %1064 = vdwg.mxu0
        %v1069 = vunpack.c.l.b16 %v1029
        %v1070 = vunpack.c.l.b16 %v1030
        %v1071 = vunpack.c.l.b16 %v1031
        %v1072 = vunpack.c.l.b16 %v1032
        %v1073 = vpack.c.b16 %v1070, %v1069
        %v1074 = vpack.c.b16 %v1072, %v1071
        %v1078 = vsel %vm330, %v1026, 0
        %1080 = vmatpush.bf16.msra.mxu0 0
        %1081 = vmatpush.bf16.msra.mxu0 0
        %1082 = vmatpush.bf16.msra.mxu0 0
        %1083 = vmatpush.bf16.msra.mxu0 0
        %1084 = vmatpush.bf16.msra.mxu0 0
        %1085 = vmatpush.bf16.msra.mxu0 0
        %1086 = vmatpush.bf16.msra.mxu0 %v1074
        %1087 = vmatpush.bf16.msra.mxu0 %v1073
        %1088 = vmatmul.bf16.gmra.mxu0 %v1078
        %v1089 = vpop.f32.mrf.mxu0
        %v1090 = vadd.f32 %v1062, %v1089
        %v1091 = vpop.f32.mrf.mxu0
        %1092 = vdwg.mxu0
        %v1093 = vld [vmem:[%s452] sm:$0x1]
        %v1095 = vperm.slane %v1093, 0
        %v1097 = vadd.f32 %v1090, %v1095
        %v1098 = vtanh.pop %v1097
        %1099 = vst.msk [vmem:[%s383] sm:$0xff] %vm330, %v1098
        %v1100 = vpack.c.bf16 %v1098, %v1098
        %v1101 = vld [vmem:[%s3] sm:$0xf]
        %v1102 = vld [vmem:[%s3 + $0x4] sm:$0xf]
        %v1103 = vld [vmem:[%s3 + $0x8] sm:$0xf]
        %v1104 = vld [vmem:[%s3 + $0xc] sm:$0xf]
        %v1109 = vunpack.c.l.b16 %v1101
        %v1110 = vunpack.c.l.b16 %v1102
        %v1111 = vunpack.c.l.b16 %v1103
        %v1112 = vunpack.c.l.b16 %v1104
        %v1113 = vpack.c.b16 %v1110, %v1109
        %v1114 = vpack.c.b16 %v1112, %v1111
        %v1118 = vsel %vm330, %v1100, 0
        %1120 = vmatpush.bf16.msra.mxu0 0
        %1121 = vmatpush.bf16.msra.mxu0 0
        %1122 = vmatpush.bf16.msra.mxu0 0
        %1123 = vmatpush.bf16.msra.mxu0 0
        %1124 = vmatpush.bf16.msra.mxu0 0
        %1125 = vmatpush.bf16.msra.mxu0 0
        %1126 = vmatpush.bf16.msra.mxu0 %v1114
        %1127 = vmatpush.bf16.msra.mxu0 %v1113
        %1128 = vmatmul.bf16.gmra.mxu0 %v1118
        %v1129 = vpop.f32.mrf.mxu0
        %v1130 = vadd.f32 0.0, %v1129
        %v1131 = vpop.f32.mrf.mxu0
        %1132 = vdwg.mxu0
        %v1134 = vrot.slane %v1130, 1
        %v1135 = vrot.slane %v1130, 2
        %v1136 = vrot.slane %v1130, 3
        %v1137 = vrot.slane %v1130, 4
        %v1138 = vrot.slane %v1130, 5
        %v1139 = vrot.slane %v1130, 6
        %v1140 = vrot.slane %v1130, 7
        %1148 = vst [vmem:[%s244 + $0x2] sm:$0x1] %v1130
        %1149 = vst [vmem:[%s244 + $0xa] sm:$0x1] %v1134
        %1150 = vst [vmem:[%s244 + $0x12] sm:$0x1] %v1135
        %1151 = vst [vmem:[%s244 + $0x1a] sm:$0x1] %v1136
        %1152 = vst [vmem:[%s244 + $0x22] sm:$0x1] %v1137
        %1153 = vst [vmem:[%s244 + $0x2a] sm:$0x1] %v1138
        %1154 = vst [vmem:[%s244 + $0x32] sm:$0x1] %v1139
        %1155 = vst [vmem:[%s244 + $0x3a] sm:$0x1] %v1140
        %s1156 = sadd.s32 %s259, 3
        %p1157 = scmp.lt.s32.totalorder %s1156, 15
        %s1158 = scalar_select %p1157, %s1156, 15
        %p1159 = scmp.lt.s32.totalorder %s1156, 16
        %s1160 = sld [smem:[#allocation5 + %s1158]]
        %p1161 = scmp.eq.s32.totalorder %s1160, 0
        %p1162 = pnand %p1159, %p1161
        %p1163 = pneg %p1162
        // Predicated region
        $region69: #{tpu_custom_call.1} parent=43 // pred_check
          _
        $region70: #{tpu_custom_call.1} parent=43 // pred_check_branch
          %1165 = sbr.rel (%p1162) target = $region72
        $region71: #{tpu_custom_call.1} parent=43 // pred_region
          %v1166 = vsel %vm258, %v1130, -1e+30
          %1167 = vmax.xlane.f32.xlu0 %v1166
          %v1168 = vpop.xlane.xlu0 %1167
          %vm1169 = vcmp.eq.f32.partialorder %v1166, %v1168
          %v1170 = vsel %vm1169, %v257, 128
          %v1171 = vand.u32 %v1170, 65535
          %v1172 = vshra.s32 %v1170, 16
          %v1173 = vcvt.s32.f32 %v1171
          %v1174 = vcvt.s32.f32 %v1172
          %1175 = vmin.xlane.f32.xlu0 %v1174
          %v1176 = vpop.xlane.xlu0 %1175
          %vm1177 = vcmp.eq.f32.partialorder %v1174, %v1176
          %v1178 = vsel %vm1177, %v1173, inf
          %1179 = vmin.xlane.f32.xlu0 %v1178
          %v1180 = vpop.xlane.xlu0 %1179
          %v1181 = vcvt.f32.s32 %v1180
          %v1182 = vcvt.f32.s32 %v1176
          %v1183 = vshll.u32 %v1182, 16
          %v1184 = vadd.s32 %v1183, %v1181
          %vm1185 = vcmp.eq.s32.totalorder %v257, %v1184
          %v1186 = vsel %vm1185, 1, 0
          %v1187 = vcvt.s32.f32 %v1186
          %v1188 = vld [vmem:[%s2] sm:$0xff]
          %v1189 = vld [vmem:[%s2 + $0x8] sm:$0xff]
          %v1190 = vld [vmem:[%s2 + $0x10] sm:$0xff]
          %v1191 = vld [vmem:[%s2 + $0x18] sm:$0xff]
          %v1192 = vld [vmem:[%s2 + $0x20] sm:$0xff]
          %v1193 = vld [vmem:[%s2 + $0x28] sm:$0xff]
          %v1194 = vld [vmem:[%s2 + $0x30] sm:$0xff]
          %v1195 = vld [vmem:[%s2 + $0x38] sm:$0xff]
          %v1196 = vld [vmem:[%s2 + $0x40] sm:$0xff]
          %v1197 = vld [vmem:[%s2 + $0x48] sm:$0xff]
          %v1198 = vld [vmem:[%s2 + $0x50] sm:$0xff]
          %v1199 = vld [vmem:[%s2 + $0x58] sm:$0xff]
          %v1200 = vld [vmem:[%s2 + $0x60] sm:$0xff]
          %v1201 = vld [vmem:[%s2 + $0x68] sm:$0xff]
          %v1202 = vld [vmem:[%s2 + $0x70] sm:$0xff]
          %v1203 = vld [vmem:[%s2 + $0x78] sm:$0xff]
          %1204 = vmatpush.msra.mxu0 %v1203
          %1205 = vmatpush.msra.mxu0 %v1202
          %1206 = vmatpush.msra.mxu0 %v1201
          %1207 = vmatpush.msra.mxu0 %v1200
          %1208 = vmatpush.msra.mxu0 %v1199
          %1209 = vmatpush.msra.mxu0 %v1198
          %1210 = vmatpush.msra.mxu0 %v1197
          %1211 = vmatpush.msra.mxu0 %v1196
          %1212 = vmatpush.msra.mxu0 %v1195
          %1213 = vmatpush.msra.mxu0 %v1194
          %1214 = vmatpush.msra.mxu0 %v1193
          %1215 = vmatpush.msra.mxu0 %v1192
          %1216 = vmatpush.msra.mxu0 %v1191
          %1217 = vmatpush.msra.mxu0 %v1190
          %1218 = vmatpush.msra.mxu0 %v1189
          %1219 = vmatpush.msra.mxu0 %v1188
          %1220 = vmatmul.f32.gmra.mxu0 %v1187
          %v1221 = vpop.f32.mrf.mxu0
          %v1222 = vadd.f32 0.0, %v1221
          %1223 = vdwg.mxu0
          %1224 = vst.msk [vmem:[#allocation3] sm:$0xff] %vm330, %v1222
        $region72: #{tpu_custom_call.1} parent=43 // pred_fallthru
          _
        %s1225 = sld [smem:[#allocation5 + %s1156]]
        %p1226 = scmp.eq.s32.totalorder %s1225, 1
        // Predicated region
        $region73: #{tpu_custom_call.1} parent=43 // pred_check
          %p1227 = pneg %p1226
        $region74: #{tpu_custom_call.1} parent=43 // pred_check_branch
          %1229 = sbr.rel (%p1227) target = $region76
        $region75: #{tpu_custom_call.1} parent=43 // pred_region
          %s1230 = smul.u32 %s1156, 8
          %s1231 = sld [smem:[#allocation6 + %s1230]]
          %s1232 = scalar_lea.vmem %s2, %s1231
          %v1233 = vld [vmem:[%s1232] sm:$0x1]
          %vm1234 = vcmask 253952
          %1235 = vst.msk [vmem:[#allocation3] sm:$0x1] %vm1234, %v1233
          %s1236 = sadd.s32 %s1230, 1
          %s1237 = sld [smem:[#allocation6 + %s1236]]
          %s1238 = scalar_lea.vmem %s2, %s1237
          %v1239 = vld [vmem:[%s1238] sm:$0x1]
          %1240 = vst.msk [vmem:[#allocation3 + $0x1] sm:$0x1] %vm1234, %v1239
          %s1241 = sadd.s32 %s1230, 2
          %s1242 = sld [smem:[#allocation6 + %s1241]]
          %s1243 = scalar_lea.vmem %s2, %s1242
          %v1244 = vld [vmem:[%s1243] sm:$0x1]
          %1245 = vst.msk [vmem:[#allocation3 + $0x2] sm:$0x1] %vm1234, %v1244
          %s1246 = sadd.s32 %s1230, 3
          %s1247 = sld [smem:[#allocation6 + %s1246]]
          %s1248 = scalar_lea.vmem %s2, %s1247
          %v1249 = vld [vmem:[%s1248] sm:$0x1]
          %1250 = vst.msk [vmem:[#allocation3 + $0x3] sm:$0x1] %vm1234, %v1249
          %s1251 = sadd.s32 %s1230, 4
          %s1252 = sld [smem:[#allocation6 + %s1251]]
          %s1253 = scalar_lea.vmem %s2, %s1252
          %v1254 = vld [vmem:[%s1253] sm:$0x1]
          %1255 = vst.msk [vmem:[#allocation3 + $0x4] sm:$0x1] %vm1234, %v1254
          %s1256 = sadd.s32 %s1230, 5
          %s1257 = sld [smem:[#allocation6 + %s1256]]
          %s1258 = scalar_lea.vmem %s2, %s1257
          %v1259 = vld [vmem:[%s1258] sm:$0x1]
          %1260 = vst.msk [vmem:[#allocation3 + $0x5] sm:$0x1] %vm1234, %v1259
          %s1261 = sadd.s32 %s1230, 6
          %s1262 = sld [smem:[#allocation6 + %s1261]]
          %s1263 = scalar_lea.vmem %s2, %s1262
          %v1264 = vld [vmem:[%s1263] sm:$0x1]
          %1265 = vst.msk [vmem:[#allocation3 + $0x6] sm:$0x1] %vm1234, %v1264
          %s1266 = sadd.s32 %s1230, 7
          %s1267 = sld [smem:[#allocation6 + %s1266]]
          %s1268 = scalar_lea.vmem %s2, %s1267
          %v1269 = vld [vmem:[%s1268] sm:$0x1]
          %1270 = vst.msk [vmem:[#allocation3 + $0x7] sm:$0x1] %vm1234, %v1269
        $region76: #{tpu_custom_call.1} parent=43 // pred_fallthru
          _
        %v1271 = vld [vmem:[#allocation3] sm:$0xff]
        %v1272 = vpack.c.bf16 %v1271, %v1271
        %v1273 = vld [vmem:[#allocation2] sm:$0xff]
        %v1274 = vpack.c.bf16 %v1273, %v1273
        %v1275 = vld [vmem:[%s4] sm:$0xf]
        %v1276 = vld [vmem:[%s4 + $0x4] sm:$0xf]
        %v1277 = vld [vmem:[%s4 + $0x8] sm:$0xf]
        %v1278 = vld [vmem:[%s4 + $0xc] sm:$0xf]
        %v1279 = vld [vmem:[%s5] sm:$0xf]
        %v1280 = vld [vmem:[%s5 + $0x4] sm:$0xf]
        %v1281 = vld [vmem:[%s5 + $0x8] sm:$0xf]
        %v1282 = vld [vmem:[%s5 + $0xc] sm:$0xf]
        %v1287 = vunpack.c.l.b16 %v1279
        %v1288 = vunpack.c.l.b16 %v1280
        %v1289 = vunpack.c.l.b16 %v1281
        %v1290 = vunpack.c.l.b16 %v1282
        %v1291 = vpack.c.b16 %v1288, %v1287
        %v1292 = vpack.c.b16 %v1290, %v1289
        %v1296 = vsel %vm330, %v1274, 0
        %1298 = vmatpush.bf16.msra.mxu0 0
        %1299 = vmatpush.bf16.msra.mxu0 0
        %1300 = vmatpush.bf16.msra.mxu0 0
        %1301 = vmatpush.bf16.msra.mxu0 0
        %1302 = vmatpush.bf16.msra.mxu0 0
        %1303 = vmatpush.bf16.msra.mxu0 0
        %1304 = vmatpush.bf16.msra.mxu0 %v1292
        %1305 = vmatpush.bf16.msra.mxu0 %v1291
        %1306 = vmatmul.bf16.gmra.mxu0 %v1296
        %v1307 = vpop.f32.mrf.mxu0
        %v1308 = vadd.f32 0.0, %v1307
        %v1309 = vpop.f32.mrf.mxu0
        %1310 = vdwg.mxu0
        %v1315 = vunpack.c.l.b16 %v1275
        %v1316 = vunpack.c.l.b16 %v1276
        %v1317 = vunpack.c.l.b16 %v1277
        %v1318 = vunpack.c.l.b16 %v1278
        %v1319 = vpack.c.b16 %v1316, %v1315
        %v1320 = vpack.c.b16 %v1318, %v1317
        %v1324 = vsel %vm330, %v1272, 0
        %1326 = vmatpush.bf16.msra.mxu0 0
        %1327 = vmatpush.bf16.msra.mxu0 0
        %1328 = vmatpush.bf16.msra.mxu0 0
        %1329 = vmatpush.bf16.msra.mxu0 0
        %1330 = vmatpush.bf16.msra.mxu0 0
        %1331 = vmatpush.bf16.msra.mxu0 0
        %1332 = vmatpush.bf16.msra.mxu0 %v1320
        %1333 = vmatpush.bf16.msra.mxu0 %v1319
        %1334 = vmatmul.bf16.gmra.mxu0 %v1324
        %v1335 = vpop.f32.mrf.mxu0
        %v1336 = vadd.f32 %v1308, %v1335
        %v1337 = vpop.f32.mrf.mxu0
        %1338 = vdwg.mxu0
        %v1339 = vld [vmem:[%s6] sm:$0x1]
        %v1341 = vperm.slane %v1339, 0
        %v1343 = vadd.f32 %v1336, %v1341
        %v1344 = vtanh.pop %v1343
        %1345 = vst.msk [vmem:[#allocation2] sm:$0xff] %vm330, %v1344
        %v1346 = vpack.c.bf16 %v1344, %v1344
        %v1347 = vld [vmem:[%s383] sm:$0xff]
        %v1348 = vpack.c.bf16 %v1347, %v1347
        %v1349 = vld [vmem:[%s386] sm:$0xf]
        %v1350 = vld [vmem:[%s386 + $0x4] sm:$0xf]
        %v1351 = vld [vmem:[%s386 + $0x8] sm:$0xf]
        %v1352 = vld [vmem:[%s386 + $0xc] sm:$0xf]
        %v1353 = vld [vmem:[%s391] sm:$0xf]
        %v1354 = vld [vmem:[%s391 + $0x4] sm:$0xf]
        %v1355 = vld [vmem:[%s391 + $0x8] sm:$0xf]
        %v1356 = vld [vmem:[%s391 + $0xc] sm:$0xf]
        %v1361 = vunpack.c.l.b16 %v1353
        %v1362 = vunpack.c.l.b16 %v1354
        %v1363 = vunpack.c.l.b16 %v1355
        %v1364 = vunpack.c.l.b16 %v1356
        %v1365 = vpack.c.b16 %v1362, %v1361
        %v1366 = vpack.c.b16 %v1364, %v1363
        %v1370 = vsel %vm330, %v1348, 0
        %1372 = vmatpush.bf16.msra.mxu0 0
        %1373 = vmatpush.bf16.msra.mxu0 0
        %1374 = vmatpush.bf16.msra.mxu0 0
        %1375 = vmatpush.bf16.msra.mxu0 0
        %1376 = vmatpush.bf16.msra.mxu0 0
        %1377 = vmatpush.bf16.msra.mxu0 0
        %1378 = vmatpush.bf16.msra.mxu0 %v1366
        %1379 = vmatpush.bf16.msra.mxu0 %v1365
        %1380 = vmatmul.bf16.gmra.mxu0 %v1370
        %v1381 = vpop.f32.mrf.mxu0
        %v1382 = vadd.f32 0.0, %v1381
        %v1383 = vpop.f32.mrf.mxu0
        %1384 = vdwg.mxu0
        %v1389 = vunpack.c.l.b16 %v1349
        %v1390 = vunpack.c.l.b16 %v1350
        %v1391 = vunpack.c.l.b16 %v1351
        %v1392 = vunpack.c.l.b16 %v1352
        %v1393 = vpack.c.b16 %v1390, %v1389
        %v1394 = vpack.c.b16 %v1392, %v1391
        %v1398 = vsel %vm330, %v1346, 0
        %1400 = vmatpush.bf16.msra.mxu0 0
        %1401 = vmatpush.bf16.msra.mxu0 0
        %1402 = vmatpush.bf16.msra.mxu0 0
        %1403 = vmatpush.bf16.msra.mxu0 0
        %1404 = vmatpush.bf16.msra.mxu0 0
        %1405 = vmatpush.bf16.msra.mxu0 0
        %1406 = vmatpush.bf16.msra.mxu0 %v1394
        %1407 = vmatpush.bf16.msra.mxu0 %v1393
        %1408 = vmatmul.bf16.gmra.mxu0 %v1398
        %v1409 = vpop.f32.mrf.mxu0
        %v1410 = vadd.f32 %v1382, %v1409
        %v1411 = vpop.f32.mrf.mxu0
        %1412 = vdwg.mxu0
        %v1413 = vld [vmem:[%s452] sm:$0x1]
        %v1415 = vperm.slane %v1413, 0
        %v1417 = vadd.f32 %v1410, %v1415
        %v1418 = vtanh.pop %v1417
        %1419 = vst.msk [vmem:[%s383] sm:$0xff] %vm330, %v1418
        %v1420 = vpack.c.bf16 %v1418, %v1418
        %v1421 = vld [vmem:[%s3] sm:$0xf]
        %v1422 = vld [vmem:[%s3 + $0x4] sm:$0xf]
        %v1423 = vld [vmem:[%s3 + $0x8] sm:$0xf]
        %v1424 = vld [vmem:[%s3 + $0xc] sm:$0xf]
        %v1429 = vunpack.c.l.b16 %v1421
        %v1430 = vunpack.c.l.b16 %v1422
        %v1431 = vunpack.c.l.b16 %v1423
        %v1432 = vunpack.c.l.b16 %v1424
        %v1433 = vpack.c.b16 %v1430, %v1429
        %v1434 = vpack.c.b16 %v1432, %v1431
        %v1438 = vsel %vm330, %v1420, 0
        %1440 = vmatpush.bf16.msra.mxu0 0
        %1441 = vmatpush.bf16.msra.mxu0 0
        %1442 = vmatpush.bf16.msra.mxu0 0
        %1443 = vmatpush.bf16.msra.mxu0 0
        %1444 = vmatpush.bf16.msra.mxu0 0
        %1445 = vmatpush.bf16.msra.mxu0 0
        %1446 = vmatpush.bf16.msra.mxu0 %v1434
        %1447 = vmatpush.bf16.msra.mxu0 %v1433
        %1448 = vmatmul.bf16.gmra.mxu0 %v1438
        %v1449 = vpop.f32.mrf.mxu0
        %v1450 = vadd.f32 0.0, %v1449
        %v1451 = vpop.f32.mrf.mxu0
        %1452 = vdwg.mxu0
        %v1454 = vrot.slane %v1450, 1
        %v1455 = vrot.slane %v1450, 2
        %v1456 = vrot.slane %v1450, 3
        %v1457 = vrot.slane %v1450, 4
        %v1458 = vrot.slane %v1450, 5
        %v1459 = vrot.slane %v1450, 6
        %v1460 = vrot.slane %v1450, 7
        %1468 = vst [vmem:[%s244 + $0x3] sm:$0x1] %v1450
        %1469 = vst [vmem:[%s244 + $0xb] sm:$0x1] %v1454
        %1470 = vst [vmem:[%s244 + $0x13] sm:$0x1] %v1455
        %1471 = vst [vmem:[%s244 + $0x1b] sm:$0x1] %v1456
        %1472 = vst [vmem:[%s244 + $0x23] sm:$0x1] %v1457
        %1473 = vst [vmem:[%s244 + $0x2b] sm:$0x1] %v1458
        %1474 = vst [vmem:[%s244 + $0x33] sm:$0x1] %v1459
        %1475 = vst [vmem:[%s244 + $0x3b] sm:$0x1] %v1460
        %s1476 = sadd.s32 %s259, 4
        %p1477 = scmp.lt.s32.totalorder %s1476, 15
        %s1478 = scalar_select %p1477, %s1476, 15
        %p1479 = scmp.lt.s32.totalorder %s1476, 16
        %s1480 = sld [smem:[#allocation5 + %s1478]]
        %p1481 = scmp.eq.s32.totalorder %s1480, 0
        %p1482 = pnand %p1479, %p1481
        %p1483 = pneg %p1482
        // Predicated region
        $region77: #{tpu_custom_call.1} parent=43 // pred_check
          _
        $region78: #{tpu_custom_call.1} parent=43 // pred_check_branch
          %1485 = sbr.rel (%p1482) target = $region80
        $region79: #{tpu_custom_call.1} parent=43 // pred_region
          %v1486 = vsel %vm258, %v1450, -1e+30
          %1487 = vmax.xlane.f32.xlu0 %v1486
          %v1488 = vpop.xlane.xlu0 %1487
          %vm1489 = vcmp.eq.f32.partialorder %v1486, %v1488
          %v1490 = vsel %vm1489, %v257, 128
          %v1491 = vand.u32 %v1490, 65535
          %v1492 = vshra.s32 %v1490, 16
          %v1493 = vcvt.s32.f32 %v1491
          %v1494 = vcvt.s32.f32 %v1492
          %1495 = vmin.xlane.f32.xlu0 %v1494
          %v1496 = vpop.xlane.xlu0 %1495
          %vm1497 = vcmp.eq.f32.partialorder %v1494, %v1496
          %v1498 = vsel %vm1497, %v1493, inf
          %1499 = vmin.xlane.f32.xlu0 %v1498
          %v1500 = vpop.xlane.xlu0 %1499
          %v1501 = vcvt.f32.s32 %v1500
          %v1502 = vcvt.f32.s32 %v1496
          %v1503 = vshll.u32 %v1502, 16
          %v1504 = vadd.s32 %v1503, %v1501
          %vm1505 = vcmp.eq.s32.totalorder %v257, %v1504
          %v1506 = vsel %vm1505, 1, 0
          %v1507 = vcvt.s32.f32 %v1506
          %v1508 = vld [vmem:[%s2] sm:$0xff]
          %v1509 = vld [vmem:[%s2 + $0x8] sm:$0xff]
          %v1510 = vld [vmem:[%s2 + $0x10] sm:$0xff]
          %v1511 = vld [vmem:[%s2 + $0x18] sm:$0xff]
          %v1512 = vld [vmem:[%s2 + $0x20] sm:$0xff]
          %v1513 = vld [vmem:[%s2 + $0x28] sm:$0xff]
          %v1514 = vld [vmem:[%s2 + $0x30] sm:$0xff]
          %v1515 = vld [vmem:[%s2 + $0x38] sm:$0xff]
          %v1516 = vld [vmem:[%s2 + $0x40] sm:$0xff]
          %v1517 = vld [vmem:[%s2 + $0x48] sm:$0xff]
          %v1518 = vld [vmem:[%s2 + $0x50] sm:$0xff]
          %v1519 = vld [vmem:[%s2 + $0x58] sm:$0xff]
          %v1520 = vld [vmem:[%s2 + $0x60] sm:$0xff]
          %v1521 = vld [vmem:[%s2 + $0x68] sm:$0xff]
          %v1522 = vld [vmem:[%s2 + $0x70] sm:$0xff]
          %v1523 = vld [vmem:[%s2 + $0x78] sm:$0xff]
          %1524 = vmatpush.msra.mxu0 %v1523
          %1525 = vmatpush.msra.mxu0 %v1522
          %1526 = vmatpush.msra.mxu0 %v1521
          %1527 = vmatpush.msra.mxu0 %v1520
          %1528 = vmatpush.msra.mxu0 %v1519
          %1529 = vmatpush.msra.mxu0 %v1518
          %1530 = vmatpush.msra.mxu0 %v1517
          %1531 = vmatpush.msra.mxu0 %v1516
          %1532 = vmatpush.msra.mxu0 %v1515
          %1533 = vmatpush.msra.mxu0 %v1514
          %1534 = vmatpush.msra.mxu0 %v1513
          %1535 = vmatpush.msra.mxu0 %v1512
          %1536 = vmatpush.msra.mxu0 %v1511
          %1537 = vmatpush.msra.mxu0 %v1510
          %1538 = vmatpush.msra.mxu0 %v1509
          %1539 = vmatpush.msra.mxu0 %v1508
          %1540 = vmatmul.f32.gmra.mxu0 %v1507
          %v1541 = vpop.f32.mrf.mxu0
          %v1542 = vadd.f32 0.0, %v1541
          %1543 = vdwg.mxu0
          %1544 = vst.msk [vmem:[#allocation3] sm:$0xff] %vm330, %v1542
        $region80: #{tpu_custom_call.1} parent=43 // pred_fallthru
          _
        %s1545 = sld [smem:[#allocation5 + %s1476]]
        %p1546 = scmp.eq.s32.totalorder %s1545, 1
        // Predicated region
        $region81: #{tpu_custom_call.1} parent=43 // pred_check
          %p1547 = pneg %p1546
        $region82: #{tpu_custom_call.1} parent=43 // pred_check_branch
          %1549 = sbr.rel (%p1547) target = $region84
        $region83: #{tpu_custom_call.1} parent=43 // pred_region
          %s1550 = smul.u32 %s1476, 8
          %s1551 = sld [smem:[#allocation6 + %s1550]]
          %s1552 = scalar_lea.vmem %s2, %s1551
          %v1553 = vld [vmem:[%s1552] sm:$0x1]
          %vm1554 = vcmask 253952
          %1555 = vst.msk [vmem:[#allocation3] sm:$0x1] %vm1554, %v1553
          %s1556 = sadd.s32 %s1550, 1
          %s1557 = sld [smem:[#allocation6 + %s1556]]
          %s1558 = scalar_lea.vmem %s2, %s1557
          %v1559 = vld [vmem:[%s1558] sm:$0x1]
          %1560 = vst.msk [vmem:[#allocation3 + $0x1] sm:$0x1] %vm1554, %v1559
          %s1561 = sadd.s32 %s1550, 2
          %s1562 = sld [smem:[#allocation6 + %s1561]]
          %s1563 = scalar_lea.vmem %s2, %s1562
          %v1564 = vld [vmem:[%s1563] sm:$0x1]
          %1565 = vst.msk [vmem:[#allocation3 + $0x2] sm:$0x1] %vm1554, %v1564
          %s1566 = sadd.s32 %s1550, 3
          %s1567 = sld [smem:[#allocation6 + %s1566]]
          %s1568 = scalar_lea.vmem %s2, %s1567
          %v1569 = vld [vmem:[%s1568] sm:$0x1]
          %1570 = vst.msk [vmem:[#allocation3 + $0x3] sm:$0x1] %vm1554, %v1569
          %s1571 = sadd.s32 %s1550, 4
          %s1572 = sld [smem:[#allocation6 + %s1571]]
          %s1573 = scalar_lea.vmem %s2, %s1572
          %v1574 = vld [vmem:[%s1573] sm:$0x1]
          %1575 = vst.msk [vmem:[#allocation3 + $0x4] sm:$0x1] %vm1554, %v1574
          %s1576 = sadd.s32 %s1550, 5
          %s1577 = sld [smem:[#allocation6 + %s1576]]
          %s1578 = scalar_lea.vmem %s2, %s1577
          %v1579 = vld [vmem:[%s1578] sm:$0x1]
          %1580 = vst.msk [vmem:[#allocation3 + $0x5] sm:$0x1] %vm1554, %v1579
          %s1581 = sadd.s32 %s1550, 6
          %s1582 = sld [smem:[#allocation6 + %s1581]]
          %s1583 = scalar_lea.vmem %s2, %s1582
          %v1584 = vld [vmem:[%s1583] sm:$0x1]
          %1585 = vst.msk [vmem:[#allocation3 + $0x6] sm:$0x1] %vm1554, %v1584
          %s1586 = sadd.s32 %s1550, 7
          %s1587 = sld [smem:[#allocation6 + %s1586]]
          %s1588 = scalar_lea.vmem %s2, %s1587
          %v1589 = vld [vmem:[%s1588] sm:$0x1]
          %1590 = vst.msk [vmem:[#allocation3 + $0x7] sm:$0x1] %vm1554, %v1589
        $region84: #{tpu_custom_call.1} parent=43 // pred_fallthru
          _
        %v1591 = vld [vmem:[#allocation3] sm:$0xff]
        %v1592 = vpack.c.bf16 %v1591, %v1591
        %v1593 = vld [vmem:[#allocation2] sm:$0xff]
        %v1594 = vpack.c.bf16 %v1593, %v1593
        %v1595 = vld [vmem:[%s4] sm:$0xf]
        %v1596 = vld [vmem:[%s4 + $0x4] sm:$0xf]
        %v1597 = vld [vmem:[%s4 + $0x8] sm:$0xf]
        %v1598 = vld [vmem:[%s4 + $0xc] sm:$0xf]
        %v1599 = vld [vmem:[%s5] sm:$0xf]
        %v1600 = vld [vmem:[%s5 + $0x4] sm:$0xf]
        %v1601 = vld [vmem:[%s5 + $0x8] sm:$0xf]
        %v1602 = vld [vmem:[%s5 + $0xc] sm:$0xf]
        %v1607 = vunpack.c.l.b16 %v1599
        %v1608 = vunpack.c.l.b16 %v1600
        %v1609 = vunpack.c.l.b16 %v1601
        %v1610 = vunpack.c.l.b16 %v1602
        %v1611 = vpack.c.b16 %v1608, %v1607
        %v1612 = vpack.c.b16 %v1610, %v1609
        %v1616 = vsel %vm330, %v1594, 0
        %1618 = vmatpush.bf16.msra.mxu0 0
        %1619 = vmatpush.bf16.msra.mxu0 0
        %1620 = vmatpush.bf16.msra.mxu0 0
        %1621 = vmatpush.bf16.msra.mxu0 0
        %1622 = vmatpush.bf16.msra.mxu0 0
        %1623 = vmatpush.bf16.msra.mxu0 0
        %1624 = vmatpush.bf16.msra.mxu0 %v1612
        %1625 = vmatpush.bf16.msra.mxu0 %v1611
        %1626 = vmatmul.bf16.gmra.mxu0 %v1616
        %v1627 = vpop.f32.mrf.mxu0
        %v1628 = vadd.f32 0.0, %v1627
        %v1629 = vpop.f32.mrf.mxu0
        %1630 = vdwg.mxu0
        %v1635 = vunpack.c.l.b16 %v1595
        %v1636 = vunpack.c.l.b16 %v1596
        %v1637 = vunpack.c.l.b16 %v1597
        %v1638 = vunpack.c.l.b16 %v1598
        %v1639 = vpack.c.b16 %v1636, %v1635
        %v1640 = vpack.c.b16 %v1638, %v1637
        %v1644 = vsel %vm330, %v1592, 0
        %1646 = vmatpush.bf16.msra.mxu0 0
        %1647 = vmatpush.bf16.msra.mxu0 0
        %1648 = vmatpush.bf16.msra.mxu0 0
        %1649 = vmatpush.bf16.msra.mxu0 0
        %1650 = vmatpush.bf16.msra.mxu0 0
        %1651 = vmatpush.bf16.msra.mxu0 0
        %1652 = vmatpush.bf16.msra.mxu0 %v1640
        %1653 = vmatpush.bf16.msra.mxu0 %v1639
        %1654 = vmatmul.bf16.gmra.mxu0 %v1644
        %v1655 = vpop.f32.mrf.mxu0
        %v1656 = vadd.f32 %v1628, %v1655
        %v1657 = vpop.f32.mrf.mxu0
        %1658 = vdwg.mxu0
        %v1659 = vld [vmem:[%s6] sm:$0x1]
        %v1661 = vperm.slane %v1659, 0
        %v1663 = vadd.f32 %v1656, %v1661
        %v1664 = vtanh.pop %v1663
        %1665 = vst.msk [vmem:[#allocation2] sm:$0xff] %vm330, %v1664
        %v1666 = vpack.c.bf16 %v1664, %v1664
        %v1667 = vld [vmem:[%s383] sm:$0xff]
        %v1668 = vpack.c.bf16 %v1667, %v1667
        %v1669 = vld [vmem:[%s386] sm:$0xf]
        %v1670 = vld [vmem:[%s386 + $0x4] sm:$0xf]
        %v1671 = vld [vmem:[%s386 + $0x8] sm:$0xf]
        %v1672 = vld [vmem:[%s386 + $0xc] sm:$0xf]
        %v1673 = vld [vmem:[%s391] sm:$0xf]
        %v1674 = vld [vmem:[%s391 + $0x4] sm:$0xf]
        %v1675 = vld [vmem:[%s391 + $0x8] sm:$0xf]
        %v1676 = vld [vmem:[%s391 + $0xc] sm:$0xf]
        %v1681 = vunpack.c.l.b16 %v1673
        %v1682 = vunpack.c.l.b16 %v1674
        %v1683 = vunpack.c.l.b16 %v1675
        %v1684 = vunpack.c.l.b16 %v1676
        %v1685 = vpack.c.b16 %v1682, %v1681
        %v1686 = vpack.c.b16 %v1684, %v1683
        %v1690 = vsel %vm330, %v1668, 0
        %1692 = vmatpush.bf16.msra.mxu0 0
        %1693 = vmatpush.bf16.msra.mxu0 0
        %1694 = vmatpush.bf16.msra.mxu0 0
        %1695 = vmatpush.bf16.msra.mxu0 0
        %1696 = vmatpush.bf16.msra.mxu0 0
        %1697 = vmatpush.bf16.msra.mxu0 0
        %1698 = vmatpush.bf16.msra.mxu0 %v1686
        %1699 = vmatpush.bf16.msra.mxu0 %v1685
        %1700 = vmatmul.bf16.gmra.mxu0 %v1690
        %v1701 = vpop.f32.mrf.mxu0
        %v1702 = vadd.f32 0.0, %v1701
        %v1703 = vpop.f32.mrf.mxu0
        %1704 = vdwg.mxu0
        %v1709 = vunpack.c.l.b16 %v1669
        %v1710 = vunpack.c.l.b16 %v1670
        %v1711 = vunpack.c.l.b16 %v1671
        %v1712 = vunpack.c.l.b16 %v1672
        %v1713 = vpack.c.b16 %v1710, %v1709
        %v1714 = vpack.c.b16 %v1712, %v1711
        %v1718 = vsel %vm330, %v1666, 0
        %1720 = vmatpush.bf16.msra.mxu0 0
        %1721 = vmatpush.bf16.msra.mxu0 0
        %1722 = vmatpush.bf16.msra.mxu0 0
        %1723 = vmatpush.bf16.msra.mxu0 0
        %1724 = vmatpush.bf16.msra.mxu0 0
        %1725 = vmatpush.bf16.msra.mxu0 0
        %1726 = vmatpush.bf16.msra.mxu0 %v1714
        %1727 = vmatpush.bf16.msra.mxu0 %v1713
        %1728 = vmatmul.bf16.gmra.mxu0 %v1718
        %v1729 = vpop.f32.mrf.mxu0
        %v1730 = vadd.f32 %v1702, %v1729
        %v1731 = vpop.f32.mrf.mxu0
        %1732 = vdwg.mxu0
        %v1733 = vld [vmem:[%s452] sm:$0x1]
        %v1735 = vperm.slane %v1733, 0
        %v1737 = vadd.f32 %v1730, %v1735
        %v1738 = vtanh.pop %v1737
        %1739 = vst.msk [vmem:[%s383] sm:$0xff] %vm330, %v1738
        %v1740 = vpack.c.bf16 %v1738, %v1738
        %v1741 = vld [vmem:[%s3] sm:$0xf]
        %v1742 = vld [vmem:[%s3 + $0x4] sm:$0xf]
        %v1743 = vld [vmem:[%s3 + $0x8] sm:$0xf]
        %v1744 = vld [vmem:[%s3 + $0xc] sm:$0xf]
        %v1749 = vunpack.c.l.b16 %v1741
        %v1750 = vunpack.c.l.b16 %v1742
        %v1751 = vunpack.c.l.b16 %v1743
        %v1752 = vunpack.c.l.b16 %v1744
        %v1753 = vpack.c.b16 %v1750, %v1749
        %v1754 = vpack.c.b16 %v1752, %v1751
        %v1758 = vsel %vm330, %v1740, 0
        %1760 = vmatpush.bf16.msra.mxu0 0
        %1761 = vmatpush.bf16.msra.mxu0 0
        %1762 = vmatpush.bf16.msra.mxu0 0
        %1763 = vmatpush.bf16.msra.mxu0 0
        %1764 = vmatpush.bf16.msra.mxu0 0
        %1765 = vmatpush.bf16.msra.mxu0 0
        %1766 = vmatpush.bf16.msra.mxu0 %v1754
        %1767 = vmatpush.bf16.msra.mxu0 %v1753
        %1768 = vmatmul.bf16.gmra.mxu0 %v1758
        %v1769 = vpop.f32.mrf.mxu0
        %v1770 = vadd.f32 0.0, %v1769
        %v1771 = vpop.f32.mrf.mxu0
        %1772 = vdwg.mxu0
        %v1774 = vrot.slane %v1770, 1
        %v1775 = vrot.slane %v1770, 2
        %v1776 = vrot.slane %v1770, 3
        %v1777 = vrot.slane %v1770, 4
        %v1778 = vrot.slane %v1770, 5
        %v1779 = vrot.slane %v1770, 6
        %v1780 = vrot.slane %v1770, 7
        %1788 = vst [vmem:[%s244 + $0x4] sm:$0x1] %v1770
        %1789 = vst [vmem:[%s244 + $0xc] sm:$0x1] %v1774
        %1790 = vst [vmem:[%s244 + $0x14] sm:$0x1] %v1775
        %1791 = vst [vmem:[%s244 + $0x1c] sm:$0x1] %v1776
        %1792 = vst [vmem:[%s244 + $0x24] sm:$0x1] %v1777
        %1793 = vst [vmem:[%s244 + $0x2c] sm:$0x1] %v1778
        %1794 = vst [vmem:[%s244 + $0x34] sm:$0x1] %v1779
        %1795 = vst [vmem:[%s244 + $0x3c] sm:$0x1] %v1780
        %s1796 = sadd.s32 %s259, 5
        %p1797 = scmp.lt.s32.totalorder %s1796, 15
        %s1798 = scalar_select %p1797, %s1796, 15
        %p1799 = scmp.lt.s32.totalorder %s1796, 16
        %s1800 = sld [smem:[#allocation5 + %s1798]]
        %p1801 = scmp.eq.s32.totalorder %s1800, 0
        %p1802 = pnand %p1799, %p1801
        %p1803 = pneg %p1802
        // Predicated region
        $region85: #{tpu_custom_call.1} parent=43 // pred_check
          _
        $region86: #{tpu_custom_call.1} parent=43 // pred_check_branch
          %1805 = sbr.rel (%p1802) target = $region88
        $region87: #{tpu_custom_call.1} parent=43 // pred_region
          %v1806 = vsel %vm258, %v1770, -1e+30
          %1807 = vmax.xlane.f32.xlu0 %v1806
          %v1808 = vpop.xlane.xlu0 %1807
          %vm1809 = vcmp.eq.f32.partialorder %v1806, %v1808
          %v1810 = vsel %vm1809, %v257, 128
          %v1811 = vand.u32 %v1810, 65535
          %v1812 = vshra.s32 %v1810, 16
          %v1813 = vcvt.s32.f32 %v1811
          %v1814 = vcvt.s32.f32 %v1812
          %1815 = vmin.xlane.f32.xlu0 %v1814
          %v1816 = vpop.xlane.xlu0 %1815
          %vm1817 = vcmp.eq.f32.partialorder %v1814, %v1816
          %v1818 = vsel %vm1817, %v1813, inf
          %1819 = vmin.xlane.f32.xlu0 %v1818
          %v1820 = vpop.xlane.xlu0 %1819
          %v1821 = vcvt.f32.s32 %v1820
          %v1822 = vcvt.f32.s32 %v1816
          %v1823 = vshll.u32 %v1822, 16
          %v1824 = vadd.s32 %v1823, %v1821
          %vm1825 = vcmp.eq.s32.totalorder %v257, %v1824
          %v1826 = vsel %vm1825, 1, 0
          %v1827 = vcvt.s32.f32 %v1826
          %v1828 = vld [vmem:[%s2] sm:$0xff]
          %v1829 = vld [vmem:[%s2 + $0x8] sm:$0xff]
          %v1830 = vld [vmem:[%s2 + $0x10] sm:$0xff]
          %v1831 = vld [vmem:[%s2 + $0x18] sm:$0xff]
          %v1832 = vld [vmem:[%s2 + $0x20] sm:$0xff]
          %v1833 = vld [vmem:[%s2 + $0x28] sm:$0xff]
          %v1834 = vld [vmem:[%s2 + $0x30] sm:$0xff]
          %v1835 = vld [vmem:[%s2 + $0x38] sm:$0xff]
          %v1836 = vld [vmem:[%s2 + $0x40] sm:$0xff]
          %v1837 = vld [vmem:[%s2 + $0x48] sm:$0xff]
          %v1838 = vld [vmem:[%s2 + $0x50] sm:$0xff]
          %v1839 = vld [vmem:[%s2 + $0x58] sm:$0xff]
          %v1840 = vld [vmem:[%s2 + $0x60] sm:$0xff]
          %v1841 = vld [vmem:[%s2 + $0x68] sm:$0xff]
          %v1842 = vld [vmem:[%s2 + $0x70] sm:$0xff]
          %v1843 = vld [vmem:[%s2 + $0x78] sm:$0xff]
          %1844 = vmatpush.msra.mxu0 %v1843
          %1845 = vmatpush.msra.mxu0 %v1842
          %1846 = vmatpush.msra.mxu0 %v1841
          %1847 = vmatpush.msra.mxu0 %v1840
          %1848 = vmatpush.msra.mxu0 %v1839
          %1849 = vmatpush.msra.mxu0 %v1838
          %1850 = vmatpush.msra.mxu0 %v1837
          %1851 = vmatpush.msra.mxu0 %v1836
          %1852 = vmatpush.msra.mxu0 %v1835
          %1853 = vmatpush.msra.mxu0 %v1834
          %1854 = vmatpush.msra.mxu0 %v1833
          %1855 = vmatpush.msra.mxu0 %v1832
          %1856 = vmatpush.msra.mxu0 %v1831
          %1857 = vmatpush.msra.mxu0 %v1830
          %1858 = vmatpush.msra.mxu0 %v1829
          %1859 = vmatpush.msra.mxu0 %v1828
          %1860 = vmatmul.f32.gmra.mxu0 %v1827
          %v1861 = vpop.f32.mrf.mxu0
          %v1862 = vadd.f32 0.0, %v1861
          %1863 = vdwg.mxu0
          %1864 = vst.msk [vmem:[#allocation3] sm:$0xff] %vm330, %v1862
        $region88: #{tpu_custom_call.1} parent=43 // pred_fallthru
          _
        %s1865 = sld [smem:[#allocation5 + %s1796]]
        %p1866 = scmp.eq.s32.totalorder %s1865, 1
        // Predicated region
        $region89: #{tpu_custom_call.1} parent=43 // pred_check
          %p1867 = pneg %p1866
        $region90: #{tpu_custom_call.1} parent=43 // pred_check_branch
          %1869 = sbr.rel (%p1867) target = $region92
        $region91: #{tpu_custom_call.1} parent=43 // pred_region
          %s1870 = smul.u32 %s1796, 8
          %s1871 = sld [smem:[#allocation6 + %s1870]]
          %s1872 = scalar_lea.vmem %s2, %s1871
          %v1873 = vld [vmem:[%s1872] sm:$0x1]
          %vm1874 = vcmask 253952
          %1875 = vst.msk [vmem:[#allocation3] sm:$0x1] %vm1874, %v1873
          %s1876 = sadd.s32 %s1870, 1
          %s1877 = sld [smem:[#allocation6 + %s1876]]
          %s1878 = scalar_lea.vmem %s2, %s1877
          %v1879 = vld [vmem:[%s1878] sm:$0x1]
          %1880 = vst.msk [vmem:[#allocation3 + $0x1] sm:$0x1] %vm1874, %v1879
          %s1881 = sadd.s32 %s1870, 2
          %s1882 = sld [smem:[#allocation6 + %s1881]]
          %s1883 = scalar_lea.vmem %s2, %s1882
          %v1884 = vld [vmem:[%s1883] sm:$0x1]
          %1885 = vst.msk [vmem:[#allocation3 + $0x2] sm:$0x1] %vm1874, %v1884
          %s1886 = sadd.s32 %s1870, 3
          %s1887 = sld [smem:[#allocation6 + %s1886]]
          %s1888 = scalar_lea.vmem %s2, %s1887
          %v1889 = vld [vmem:[%s1888] sm:$0x1]
          %1890 = vst.msk [vmem:[#allocation3 + $0x3] sm:$0x1] %vm1874, %v1889
          %s1891 = sadd.s32 %s1870, 4
          %s1892 = sld [smem:[#allocation6 + %s1891]]
          %s1893 = scalar_lea.vmem %s2, %s1892
          %v1894 = vld [vmem:[%s1893] sm:$0x1]
          %1895 = vst.msk [vmem:[#allocation3 + $0x4] sm:$0x1] %vm1874, %v1894
          %s1896 = sadd.s32 %s1870, 5
          %s1897 = sld [smem:[#allocation6 + %s1896]]
          %s1898 = scalar_lea.vmem %s2, %s1897
          %v1899 = vld [vmem:[%s1898] sm:$0x1]
          %1900 = vst.msk [vmem:[#allocation3 + $0x5] sm:$0x1] %vm1874, %v1899
          %s1901 = sadd.s32 %s1870, 6
          %s1902 = sld [smem:[#allocation6 + %s1901]]
          %s1903 = scalar_lea.vmem %s2, %s1902
          %v1904 = vld [vmem:[%s1903] sm:$0x1]
          %1905 = vst.msk [vmem:[#allocation3 + $0x6] sm:$0x1] %vm1874, %v1904
          %s1906 = sadd.s32 %s1870, 7
          %s1907 = sld [smem:[#allocation6 + %s1906]]
          %s1908 = scalar_lea.vmem %s2, %s1907
          %v1909 = vld [vmem:[%s1908] sm:$0x1]
          %1910 = vst.msk [vmem:[#allocation3 + $0x7] sm:$0x1] %vm1874, %v1909
        $region92: #{tpu_custom_call.1} parent=43 // pred_fallthru
          _
        %v1911 = vld [vmem:[#allocation3] sm:$0xff]
        %v1912 = vpack.c.bf16 %v1911, %v1911
        %v1913 = vld [vmem:[#allocation2] sm:$0xff]
        %v1914 = vpack.c.bf16 %v1913, %v1913
        %v1915 = vld [vmem:[%s4] sm:$0xf]
        %v1916 = vld [vmem:[%s4 + $0x4] sm:$0xf]
        %v1917 = vld [vmem:[%s4 + $0x8] sm:$0xf]
        %v1918 = vld [vmem:[%s4 + $0xc] sm:$0xf]
        %v1919 = vld [vmem:[%s5] sm:$0xf]
        %v1920 = vld [vmem:[%s5 + $0x4] sm:$0xf]
        %v1921 = vld [vmem:[%s5 + $0x8] sm:$0xf]
        %v1922 = vld [vmem:[%s5 + $0xc] sm:$0xf]
        %v1927 = vunpack.c.l.b16 %v1919
        %v1928 = vunpack.c.l.b16 %v1920
        %v1929 = vunpack.c.l.b16 %v1921
        %v1930 = vunpack.c.l.b16 %v1922
        %v1931 = vpack.c.b16 %v1928, %v1927
        %v1932 = vpack.c.b16 %v1930, %v1929
        %v1936 = vsel %vm330, %v1914, 0
        %1938 = vmatpush.bf16.msra.mxu0 0
        %1939 = vmatpush.bf16.msra.mxu0 0
        %1940 = vmatpush.bf16.msra.mxu0 0
        %1941 = vmatpush.bf16.msra.mxu0 0
        %1942 = vmatpush.bf16.msra.mxu0 0
        %1943 = vmatpush.bf16.msra.mxu0 0
        %1944 = vmatpush.bf16.msra.mxu0 %v1932
        %1945 = vmatpush.bf16.msra.mxu0 %v1931
        %1946 = vmatmul.bf16.gmra.mxu0 %v1936
        %v1947 = vpop.f32.mrf.mxu0
        %v1948 = vadd.f32 0.0, %v1947
        %v1949 = vpop.f32.mrf.mxu0
        %1950 = vdwg.mxu0
        %v1955 = vunpack.c.l.b16 %v1915
        %v1956 = vunpack.c.l.b16 %v1916
        %v1957 = vunpack.c.l.b16 %v1917
        %v1958 = vunpack.c.l.b16 %v1918
        %v1959 = vpack.c.b16 %v1956, %v1955
        %v1960 = vpack.c.b16 %v1958, %v1957
        %v1964 = vsel %vm330, %v1912, 0
        %1966 = vmatpush.bf16.msra.mxu0 0
        %1967 = vmatpush.bf16.msra.mxu0 0
        %1968 = vmatpush.bf16.msra.mxu0 0
        %1969 = vmatpush.bf16.msra.mxu0 0
        %1970 = vmatpush.bf16.msra.mxu0 0
        %1971 = vmatpush.bf16.msra.mxu0 0
        %1972 = vmatpush.bf16.msra.mxu0 %v1960
        %1973 = vmatpush.bf16.msra.mxu0 %v1959
        %1974 = vmatmul.bf16.gmra.mxu0 %v1964
        %v1975 = vpop.f32.mrf.mxu0
        %v1976 = vadd.f32 %v1948, %v1975
        %v1977 = vpop.f32.mrf.mxu0
        %1978 = vdwg.mxu0
        %v1979 = vld [vmem:[%s6] sm:$0x1]
        %v1981 = vperm.slane %v1979, 0
        %v1983 = vadd.f32 %v1976, %v1981
        %v1984 = vtanh.pop %v1983
        %1985 = vst.msk [vmem:[#allocation2] sm:$0xff] %vm330, %v1984
        %v1986 = vpack.c.bf16 %v1984, %v1984
        %v1987 = vld [vmem:[%s383] sm:$0xff]
        %v1988 = vpack.c.bf16 %v1987, %v1987
        %v1989 = vld [vmem:[%s386] sm:$0xf]
        %v1990 = vld [vmem:[%s386 + $0x4] sm:$0xf]
        %v1991 = vld [vmem:[%s386 + $0x8] sm:$0xf]
        %v1992 = vld [vmem:[%s386 + $0xc] sm:$0xf]
        %v1993 = vld [vmem:[%s391] sm:$0xf]
        %v1994 = vld [vmem:[%s391 + $0x4] sm:$0xf]
        %v1995 = vld [vmem:[%s391 + $0x8] sm:$0xf]
        %v1996 = vld [vmem:[%s391 + $0xc] sm:$0xf]
        %v2001 = vunpack.c.l.b16 %v1993
        %v2002 = vunpack.c.l.b16 %v1994
        %v2003 = vunpack.c.l.b16 %v1995
        %v2004 = vunpack.c.l.b16 %v1996
        %v2005 = vpack.c.b16 %v2002, %v2001
        %v2006 = vpack.c.b16 %v2004, %v2003
        %v2010 = vsel %vm330, %v1988, 0
        %2012 = vmatpush.bf16.msra.mxu0 0
        %2013 = vmatpush.bf16.msra.mxu0 0
        %2014 = vmatpush.bf16.msra.mxu0 0
        %2015 = vmatpush.bf16.msra.mxu0 0
        %2016 = vmatpush.bf16.msra.mxu0 0
        %2017 = vmatpush.bf16.msra.mxu0 0
        %2018 = vmatpush.bf16.msra.mxu0 %v2006
        %2019 = vmatpush.bf16.msra.mxu0 %v2005
        %2020 = vmatmul.bf16.gmra.mxu0 %v2010
        %v2021 = vpop.f32.mrf.mxu0
        %v2022 = vadd.f32 0.0, %v2021
        %v2023 = vpop.f32.mrf.mxu0
        %2024 = vdwg.mxu0
        %v2029 = vunpack.c.l.b16 %v1989
        %v2030 = vunpack.c.l.b16 %v1990
        %v2031 = vunpack.c.l.b16 %v1991
        %v2032 = vunpack.c.l.b16 %v1992
        %v2033 = vpack.c.b16 %v2030, %v2029
        %v2034 = vpack.c.b16 %v2032, %v2031
        %v2038 = vsel %vm330, %v1986, 0
        %2040 = vmatpush.bf16.msra.mxu0 0
        %2041 = vmatpush.bf16.msra.mxu0 0
        %2042 = vmatpush.bf16.msra.mxu0 0
        %2043 = vmatpush.bf16.msra.mxu0 0
        %2044 = vmatpush.bf16.msra.mxu0 0
        %2045 = vmatpush.bf16.msra.mxu0 0
        %2046 = vmatpush.bf16.msra.mxu0 %v2034
        %2047 = vmatpush.bf16.msra.mxu0 %v2033
        %2048 = vmatmul.bf16.gmra.mxu0 %v2038
        %v2049 = vpop.f32.mrf.mxu0
        %v2050 = vadd.f32 %v2022, %v2049
        %v2051 = vpop.f32.mrf.mxu0
        %2052 = vdwg.mxu0
        %v2053 = vld [vmem:[%s452] sm:$0x1]
        %v2055 = vperm.slane %v2053, 0
        %v2057 = vadd.f32 %v2050, %v2055
        %v2058 = vtanh.pop %v2057
        %2059 = vst.msk [vmem:[%s383] sm:$0xff] %vm330, %v2058
        %v2060 = vpack.c.bf16 %v2058, %v2058
        %v2061 = vld [vmem:[%s3] sm:$0xf]
        %v2062 = vld [vmem:[%s3 + $0x4] sm:$0xf]
        %v2063 = vld [vmem:[%s3 + $0x8] sm:$0xf]
        %v2064 = vld [vmem:[%s3 + $0xc] sm:$0xf]
        %v2069 = vunpack.c.l.b16 %v2061
        %v2070 = vunpack.c.l.b16 %v2062
        %v2071 = vunpack.c.l.b16 %v2063
        %v2072 = vunpack.c.l.b16 %v2064
        %v2073 = vpack.c.b16 %v2070, %v2069
        %v2074 = vpack.c.b16 %v2072, %v2071
        %v2078 = vsel %vm330, %v2060, 0
        %2080 = vmatpush.bf16.msra.mxu0 0
        %2081 = vmatpush.bf16.msra.mxu0 0
        %2082 = vmatpush.bf16.msra.mxu0 0
        %2083 = vmatpush.bf16.msra.mxu0 0
        %2084 = vmatpush.bf16.msra.mxu0 0
        %2085 = vmatpush.bf16.msra.mxu0 0
        %2086 = vmatpush.bf16.msra.mxu0 %v2074
        %2087 = vmatpush.bf16.msra.mxu0 %v2073
        %2088 = vmatmul.bf16.gmra.mxu0 %v2078
        %v2089 = vpop.f32.mrf.mxu0
        %v2090 = vadd.f32 0.0, %v2089
        %v2091 = vpop.f32.mrf.mxu0
        %2092 = vdwg.mxu0
        %v2094 = vrot.slane %v2090, 1
        %v2095 = vrot.slane %v2090, 2
        %v2096 = vrot.slane %v2090, 3
        %v2097 = vrot.slane %v2090, 4
        %v2098 = vrot.slane %v2090, 5
        %v2099 = vrot.slane %v2090, 6
        %v2100 = vrot.slane %v2090, 7
        %2108 = vst [vmem:[%s244 + $0x5] sm:$0x1] %v2090
        %2109 = vst [vmem:[%s244 + $0xd] sm:$0x1] %v2094
        %2110 = vst [vmem:[%s244 + $0x15] sm:$0x1] %v2095
        %2111 = vst [vmem:[%s244 + $0x1d] sm:$0x1] %v2096
        %2112 = vst [vmem:[%s244 + $0x25] sm:$0x1] %v2097
        %2113 = vst [vmem:[%s244 + $0x2d] sm:$0x1] %v2098
        %2114 = vst [vmem:[%s244 + $0x35] sm:$0x1] %v2099
        %2115 = vst [vmem:[%s244 + $0x3d] sm:$0x1] %v2100
        %s2116 = sadd.s32 %s259, 6
        %p2117 = scmp.lt.s32.totalorder %s2116, 15
        %s2118 = scalar_select %p2117, %s2116, 15
        %p2119 = scmp.lt.s32.totalorder %s2116, 16
        %s2120 = sld [smem:[#allocation5 + %s2118]]
        %p2121 = scmp.eq.s32.totalorder %s2120, 0
        %p2122 = pnand %p2119, %p2121
        %p2123 = pneg %p2122
        // Predicated region
        $region93: #{tpu_custom_call.1} parent=43 // pred_check
          _
        $region94: #{tpu_custom_call.1} parent=43 // pred_check_branch
          %2125 = sbr.rel (%p2122) target = $region96
        $region95: #{tpu_custom_call.1} parent=43 // pred_region
          %v2126 = vsel %vm258, %v2090, -1e+30
          %2127 = vmax.xlane.f32.xlu0 %v2126
          %v2128 = vpop.xlane.xlu0 %2127
          %vm2129 = vcmp.eq.f32.partialorder %v2126, %v2128
          %v2130 = vsel %vm2129, %v257, 128
          %v2131 = vand.u32 %v2130, 65535
          %v2132 = vshra.s32 %v2130, 16
          %v2133 = vcvt.s32.f32 %v2131
          %v2134 = vcvt.s32.f32 %v2132
          %2135 = vmin.xlane.f32.xlu0 %v2134
          %v2136 = vpop.xlane.xlu0 %2135
          %vm2137 = vcmp.eq.f32.partialorder %v2134, %v2136
          %v2138 = vsel %vm2137, %v2133, inf
          %2139 = vmin.xlane.f32.xlu0 %v2138
          %v2140 = vpop.xlane.xlu0 %2139
          %v2141 = vcvt.f32.s32 %v2140
          %v2142 = vcvt.f32.s32 %v2136
          %v2143 = vshll.u32 %v2142, 16
          %v2144 = vadd.s32 %v2143, %v2141
          %vm2145 = vcmp.eq.s32.totalorder %v257, %v2144
          %v2146 = vsel %vm2145, 1, 0
          %v2147 = vcvt.s32.f32 %v2146
          %v2148 = vld [vmem:[%s2] sm:$0xff]
          %v2149 = vld [vmem:[%s2 + $0x8] sm:$0xff]
          %v2150 = vld [vmem:[%s2 + $0x10] sm:$0xff]
          %v2151 = vld [vmem:[%s2 + $0x18] sm:$0xff]
          %v2152 = vld [vmem:[%s2 + $0x20] sm:$0xff]
          %v2153 = vld [vmem:[%s2 + $0x28] sm:$0xff]
          %v2154 = vld [vmem:[%s2 + $0x30] sm:$0xff]
          %v2155 = vld [vmem:[%s2 + $0x38] sm:$0xff]
          %v2156 = vld [vmem:[%s2 + $0x40] sm:$0xff]
          %v2157 = vld [vmem:[%s2 + $0x48] sm:$0xff]
          %v2158 = vld [vmem:[%s2 + $0x50] sm:$0xff]
          %v2159 = vld [vmem:[%s2 + $0x58] sm:$0xff]
          %v2160 = vld [vmem:[%s2 + $0x60] sm:$0xff]
          %v2161 = vld [vmem:[%s2 + $0x68] sm:$0xff]
          %v2162 = vld [vmem:[%s2 + $0x70] sm:$0xff]
          %v2163 = vld [vmem:[%s2 + $0x78] sm:$0xff]
          %2164 = vmatpush.msra.mxu0 %v2163
          %2165 = vmatpush.msra.mxu0 %v2162
          %2166 = vmatpush.msra.mxu0 %v2161
          %2167 = vmatpush.msra.mxu0 %v2160
          %2168 = vmatpush.msra.mxu0 %v2159
          %2169 = vmatpush.msra.mxu0 %v2158
          %2170 = vmatpush.msra.mxu0 %v2157
          %2171 = vmatpush.msra.mxu0 %v2156
          %2172 = vmatpush.msra.mxu0 %v2155
          %2173 = vmatpush.msra.mxu0 %v2154
          %2174 = vmatpush.msra.mxu0 %v2153
          %2175 = vmatpush.msra.mxu0 %v2152
          %2176 = vmatpush.msra.mxu0 %v2151
          %2177 = vmatpush.msra.mxu0 %v2150
          %2178 = vmatpush.msra.mxu0 %v2149
          %2179 = vmatpush.msra.mxu0 %v2148
          %2180 = vmatmul.f32.gmra.mxu0 %v2147
          %v2181 = vpop.f32.mrf.mxu0
          %v2182 = vadd.f32 0.0, %v2181
          %2183 = vdwg.mxu0
          %2184 = vst.msk [vmem:[#allocation3] sm:$0xff] %vm330, %v2182
        $region96: #{tpu_custom_call.1} parent=43 // pred_fallthru
          _
        %s2185 = sld [smem:[#allocation5 + %s2116]]
        %p2186 = scmp.eq.s32.totalorder %s2185, 1
        // Predicated region
        $region97: #{tpu_custom_call.1} parent=43 // pred_check
          %p2187 = pneg %p2186
        $region98: #{tpu_custom_call.1} parent=43 // pred_check_branch
          %2189 = sbr.rel (%p2187) target = $region100
        $region99: #{tpu_custom_call.1} parent=43 // pred_region
          %s2190 = smul.u32 %s2116, 8
          %s2191 = sld [smem:[#allocation6 + %s2190]]
          %s2192 = scalar_lea.vmem %s2, %s2191
          %v2193 = vld [vmem:[%s2192] sm:$0x1]
          %vm2194 = vcmask 253952
          %2195 = vst.msk [vmem:[#allocation3] sm:$0x1] %vm2194, %v2193
          %s2196 = sadd.s32 %s2190, 1
          %s2197 = sld [smem:[#allocation6 + %s2196]]
          %s2198 = scalar_lea.vmem %s2, %s2197
          %v2199 = vld [vmem:[%s2198] sm:$0x1]
          %2200 = vst.msk [vmem:[#allocation3 + $0x1] sm:$0x1] %vm2194, %v2199
          %s2201 = sadd.s32 %s2190, 2
          %s2202 = sld [smem:[#allocation6 + %s2201]]
          %s2203 = scalar_lea.vmem %s2, %s2202
          %v2204 = vld [vmem:[%s2203] sm:$0x1]
          %2205 = vst.msk [vmem:[#allocation3 + $0x2] sm:$0x1] %vm2194, %v2204
          %s2206 = sadd.s32 %s2190, 3
          %s2207 = sld [smem:[#allocation6 + %s2206]]
          %s2208 = scalar_lea.vmem %s2, %s2207
          %v2209 = vld [vmem:[%s2208] sm:$0x1]
          %2210 = vst.msk [vmem:[#allocation3 + $0x3] sm:$0x1] %vm2194, %v2209
          %s2211 = sadd.s32 %s2190, 4
          %s2212 = sld [smem:[#allocation6 + %s2211]]
          %s2213 = scalar_lea.vmem %s2, %s2212
          %v2214 = vld [vmem:[%s2213] sm:$0x1]
          %2215 = vst.msk [vmem:[#allocation3 + $0x4] sm:$0x1] %vm2194, %v2214
          %s2216 = sadd.s32 %s2190, 5
          %s2217 = sld [smem:[#allocation6 + %s2216]]
          %s2218 = scalar_lea.vmem %s2, %s2217
          %v2219 = vld [vmem:[%s2218] sm:$0x1]
          %2220 = vst.msk [vmem:[#allocation3 + $0x5] sm:$0x1] %vm2194, %v2219
          %s2221 = sadd.s32 %s2190, 6
          %s2222 = sld [smem:[#allocation6 + %s2221]]
          %s2223 = scalar_lea.vmem %s2, %s2222
          %v2224 = vld [vmem:[%s2223] sm:$0x1]
          %2225 = vst.msk [vmem:[#allocation3 + $0x6] sm:$0x1] %vm2194, %v2224
          %s2226 = sadd.s32 %s2190, 7
          %s2227 = sld [smem:[#allocation6 + %s2226]]
          %s2228 = scalar_lea.vmem %s2, %s2227
          %v2229 = vld [vmem:[%s2228] sm:$0x1]
          %2230 = vst.msk [vmem:[#allocation3 + $0x7] sm:$0x1] %vm2194, %v2229
        $region100: #{tpu_custom_call.1} parent=43 // pred_fallthru
          _
        %v2231 = vld [vmem:[#allocation3] sm:$0xff]
        %v2232 = vpack.c.bf16 %v2231, %v2231
        %v2233 = vld [vmem:[#allocation2] sm:$0xff]
        %v2234 = vpack.c.bf16 %v2233, %v2233
        %v2235 = vld [vmem:[%s4] sm:$0xf]
        %v2236 = vld [vmem:[%s4 + $0x4] sm:$0xf]
        %v2237 = vld [vmem:[%s4 + $0x8] sm:$0xf]
        %v2238 = vld [vmem:[%s4 + $0xc] sm:$0xf]
        %v2239 = vld [vmem:[%s5] sm:$0xf]
        %v2240 = vld [vmem:[%s5 + $0x4] sm:$0xf]
        %v2241 = vld [vmem:[%s5 + $0x8] sm:$0xf]
        %v2242 = vld [vmem:[%s5 + $0xc] sm:$0xf]
        %v2247 = vunpack.c.l.b16 %v2239
        %v2248 = vunpack.c.l.b16 %v2240
        %v2249 = vunpack.c.l.b16 %v2241
        %v2250 = vunpack.c.l.b16 %v2242
        %v2251 = vpack.c.b16 %v2248, %v2247
        %v2252 = vpack.c.b16 %v2250, %v2249
        %v2256 = vsel %vm330, %v2234, 0
        %2258 = vmatpush.bf16.msra.mxu0 0
        %2259 = vmatpush.bf16.msra.mxu0 0
        %2260 = vmatpush.bf16.msra.mxu0 0
        %2261 = vmatpush.bf16.msra.mxu0 0
        %2262 = vmatpush.bf16.msra.mxu0 0
        %2263 = vmatpush.bf16.msra.mxu0 0
        %2264 = vmatpush.bf16.msra.mxu0 %v2252
        %2265 = vmatpush.bf16.msra.mxu0 %v2251
        %2266 = vmatmul.bf16.gmra.mxu0 %v2256
        %v2267 = vpop.f32.mrf.mxu0
        %v2268 = vadd.f32 0.0, %v2267
        %v2269 = vpop.f32.mrf.mxu0
        %2270 = vdwg.mxu0
        %v2275 = vunpack.c.l.b16 %v2235
        %v2276 = vunpack.c.l.b16 %v2236
        %v2277 = vunpack.c.l.b16 %v2237
        %v2278 = vunpack.c.l.b16 %v2238
        %v2279 = vpack.c.b16 %v2276, %v2275
        %v2280 = vpack.c.b16 %v2278, %v2277
        %v2284 = vsel %vm330, %v2232, 0
        %2286 = vmatpush.bf16.msra.mxu0 0
        %2287 = vmatpush.bf16.msra.mxu0 0
        %2288 = vmatpush.bf16.msra.mxu0 0
        %2289 = vmatpush.bf16.msra.mxu0 0
        %2290 = vmatpush.bf16.msra.mxu0 0
        %2291 = vmatpush.bf16.msra.mxu0 0
        %2292 = vmatpush.bf16.msra.mxu0 %v2280
        %2293 = vmatpush.bf16.msra.mxu0 %v2279
        %2294 = vmatmul.bf16.gmra.mxu0 %v2284
        %v2295 = vpop.f32.mrf.mxu0
        %v2296 = vadd.f32 %v2268, %v2295
        %v2297 = vpop.f32.mrf.mxu0
        %2298 = vdwg.mxu0
        %v2299 = vld [vmem:[%s6] sm:$0x1]
        %v2301 = vperm.slane %v2299, 0
        %v2303 = vadd.f32 %v2296, %v2301
        %v2304 = vtanh.pop %v2303
        %2305 = vst.msk [vmem:[#allocation2] sm:$0xff] %vm330, %v2304
        %v2306 = vpack.c.bf16 %v2304, %v2304
        %v2307 = vld [vmem:[%s383] sm:$0xff]
        %v2308 = vpack.c.bf16 %v2307, %v2307
        %v2309 = vld [vmem:[%s386] sm:$0xf]
        %v2310 = vld [vmem:[%s386 + $0x4] sm:$0xf]
        %v2311 = vld [vmem:[%s386 + $0x8] sm:$0xf]
        %v2312 = vld [vmem:[%s386 + $0xc] sm:$0xf]
        %v2313 = vld [vmem:[%s391] sm:$0xf]
        %v2314 = vld [vmem:[%s391 + $0x4] sm:$0xf]
        %v2315 = vld [vmem:[%s391 + $0x8] sm:$0xf]
        %v2316 = vld [vmem:[%s391 + $0xc] sm:$0xf]
        %v2321 = vunpack.c.l.b16 %v2313
        %v2322 = vunpack.c.l.b16 %v2314
        %v2323 = vunpack.c.l.b16 %v2315
        %v2324 = vunpack.c.l.b16 %v2316
        %v2325 = vpack.c.b16 %v2322, %v2321
        %v2326 = vpack.c.b16 %v2324, %v2323
        %v2330 = vsel %vm330, %v2308, 0
        %2332 = vmatpush.bf16.msra.mxu0 0
        %2333 = vmatpush.bf16.msra.mxu0 0
        %2334 = vmatpush.bf16.msra.mxu0 0
        %2335 = vmatpush.bf16.msra.mxu0 0
        %2336 = vmatpush.bf16.msra.mxu0 0
        %2337 = vmatpush.bf16.msra.mxu0 0
        %2338 = vmatpush.bf16.msra.mxu0 %v2326
        %2339 = vmatpush.bf16.msra.mxu0 %v2325
        %2340 = vmatmul.bf16.gmra.mxu0 %v2330
        %v2341 = vpop.f32.mrf.mxu0
        %v2342 = vadd.f32 0.0, %v2341
        %v2343 = vpop.f32.mrf.mxu0
        %2344 = vdwg.mxu0
        %v2349 = vunpack.c.l.b16 %v2309
        %v2350 = vunpack.c.l.b16 %v2310
        %v2351 = vunpack.c.l.b16 %v2311
        %v2352 = vunpack.c.l.b16 %v2312
        %v2353 = vpack.c.b16 %v2350, %v2349
        %v2354 = vpack.c.b16 %v2352, %v2351
        %v2358 = vsel %vm330, %v2306, 0
        %2360 = vmatpush.bf16.msra.mxu0 0
        %2361 = vmatpush.bf16.msra.mxu0 0
        %2362 = vmatpush.bf16.msra.mxu0 0
        %2363 = vmatpush.bf16.msra.mxu0 0
        %2364 = vmatpush.bf16.msra.mxu0 0
        %2365 = vmatpush.bf16.msra.mxu0 0
        %2366 = vmatpush.bf16.msra.mxu0 %v2354
        %2367 = vmatpush.bf16.msra.mxu0 %v2353
        %2368 = vmatmul.bf16.gmra.mxu0 %v2358
        %v2369 = vpop.f32.mrf.mxu0
        %v2370 = vadd.f32 %v2342, %v2369
        %v2371 = vpop.f32.mrf.mxu0
        %2372 = vdwg.mxu0
        %v2373 = vld [vmem:[%s452] sm:$0x1]
        %v2375 = vperm.slane %v2373, 0
        %v2377 = vadd.f32 %v2370, %v2375
        %v2378 = vtanh.pop %v2377
        %2379 = vst.msk [vmem:[%s383] sm:$0xff] %vm330, %v2378
        %v2380 = vpack.c.bf16 %v2378, %v2378
        %v2381 = vld [vmem:[%s3] sm:$0xf]
        %v2382 = vld [vmem:[%s3 + $0x4] sm:$0xf]
        %v2383 = vld [vmem:[%s3 + $0x8] sm:$0xf]
        %v2384 = vld [vmem:[%s3 + $0xc] sm:$0xf]
        %v2389 = vunpack.c.l.b16 %v2381
        %v2390 = vunpack.c.l.b16 %v2382
        %v2391 = vunpack.c.l.b16 %v2383
        %v2392 = vunpack.c.l.b16 %v2384
        %v2393 = vpack.c.b16 %v2390, %v2389
        %v2394 = vpack.c.b16 %v2392, %v2391
        %v2398 = vsel %vm330, %v2380, 0
        %2400 = vmatpush.bf16.msra.mxu0 0
        %2401 = vmatpush.bf16.msra.mxu0 0
        %2402 = vmatpush.bf16.msra.mxu0 0
        %2403 = vmatpush.bf16.msra.mxu0 0
        %2404 = vmatpush.bf16.msra.mxu0 0
        %2405 = vmatpush.bf16.msra.mxu0 0
        %2406 = vmatpush.bf16.msra.mxu0 %v2394
        %2407 = vmatpush.bf16.msra.mxu0 %v2393
        %2408 = vmatmul.bf16.gmra.mxu0 %v2398
        %v2409 = vpop.f32.mrf.mxu0
        %v2410 = vadd.f32 0.0, %v2409
        %v2411 = vpop.f32.mrf.mxu0
        %2412 = vdwg.mxu0
        %v2414 = vrot.slane %v2410, 1
        %v2415 = vrot.slane %v2410, 2
        %v2416 = vrot.slane %v2410, 3
        %v2417 = vrot.slane %v2410, 4
        %v2418 = vrot.slane %v2410, 5
        %v2419 = vrot.slane %v2410, 6
        %v2420 = vrot.slane %v2410, 7
        %2428 = vst [vmem:[%s244 + $0x6] sm:$0x1] %v2410
        %2429 = vst [vmem:[%s244 + $0xe] sm:$0x1] %v2414
        %2430 = vst [vmem:[%s244 + $0x16] sm:$0x1] %v2415
        %2431 = vst [vmem:[%s244 + $0x1e] sm:$0x1] %v2416
        %2432 = vst [vmem:[%s244 + $0x26] sm:$0x1] %v2417
        %2433 = vst [vmem:[%s244 + $0x2e] sm:$0x1] %v2418
        %2434 = vst [vmem:[%s244 + $0x36] sm:$0x1] %v2419
        %2435 = vst [vmem:[%s244 + $0x3e] sm:$0x1] %v2420
        %s2436 = sadd.s32 %s259, 7
        %p2437 = scmp.lt.s32.totalorder %s2436, 15
        %s2438 = scalar_select %p2437, %s2436, 15
        %p2439 = scmp.lt.s32.totalorder %s2436, 16
        %s2440 = sld [smem:[#allocation5 + %s2438]]
        %p2441 = scmp.eq.s32.totalorder %s2440, 0
        %p2442 = pnand %p2439, %p2441
        %p2443 = pneg %p2442
        // Predicated region
        $region101: #{tpu_custom_call.1} parent=43 // pred_check
          _
        $region102: #{tpu_custom_call.1} parent=43 // pred_check_branch
          %2445 = sbr.rel (%p2442) target = $region104
        $region103: #{tpu_custom_call.1} parent=43 // pred_region
          %v2446 = vsel %vm258, %v2410, -1e+30
          %2447 = vmax.xlane.f32.xlu0 %v2446
          %v2448 = vpop.xlane.xlu0 %2447
          %vm2449 = vcmp.eq.f32.partialorder %v2446, %v2448
          %v2450 = vsel %vm2449, %v257, 128
          %v2451 = vand.u32 %v2450, 65535
          %v2452 = vshra.s32 %v2450, 16
          %v2453 = vcvt.s32.f32 %v2451
          %v2454 = vcvt.s32.f32 %v2452
          %2455 = vmin.xlane.f32.xlu0 %v2454
          %v2456 = vpop.xlane.xlu0 %2455
          %vm2457 = vcmp.eq.f32.partialorder %v2454, %v2456
          %v2458 = vsel %vm2457, %v2453, inf
          %2459 = vmin.xlane.f32.xlu0 %v2458
          %v2460 = vpop.xlane.xlu0 %2459
          %v2461 = vcvt.f32.s32 %v2460
          %v2462 = vcvt.f32.s32 %v2456
          %v2463 = vshll.u32 %v2462, 16
          %v2464 = vadd.s32 %v2463, %v2461
          %vm2465 = vcmp.eq.s32.totalorder %v257, %v2464
          %v2466 = vsel %vm2465, 1, 0
          %v2467 = vcvt.s32.f32 %v2466
          %v2468 = vld [vmem:[%s2] sm:$0xff]
          %v2469 = vld [vmem:[%s2 + $0x8] sm:$0xff]
          %v2470 = vld [vmem:[%s2 + $0x10] sm:$0xff]
          %v2471 = vld [vmem:[%s2 + $0x18] sm:$0xff]
          %v2472 = vld [vmem:[%s2 + $0x20] sm:$0xff]
          %v2473 = vld [vmem:[%s2 + $0x28] sm:$0xff]
          %v2474 = vld [vmem:[%s2 + $0x30] sm:$0xff]
          %v2475 = vld [vmem:[%s2 + $0x38] sm:$0xff]
          %v2476 = vld [vmem:[%s2 + $0x40] sm:$0xff]
          %v2477 = vld [vmem:[%s2 + $0x48] sm:$0xff]
          %v2478 = vld [vmem:[%s2 + $0x50] sm:$0xff]
          %v2479 = vld [vmem:[%s2 + $0x58] sm:$0xff]
          %v2480 = vld [vmem:[%s2 + $0x60] sm:$0xff]
          %v2481 = vld [vmem:[%s2 + $0x68] sm:$0xff]
          %v2482 = vld [vmem:[%s2 + $0x70] sm:$0xff]
          %v2483 = vld [vmem:[%s2 + $0x78] sm:$0xff]
          %2484 = vmatpush.msra.mxu0 %v2483
          %2485 = vmatpush.msra.mxu0 %v2482
          %2486 = vmatpush.msra.mxu0 %v2481
          %2487 = vmatpush.msra.mxu0 %v2480
          %2488 = vmatpush.msra.mxu0 %v2479
          %2489 = vmatpush.msra.mxu0 %v2478
          %2490 = vmatpush.msra.mxu0 %v2477
          %2491 = vmatpush.msra.mxu0 %v2476
          %2492 = vmatpush.msra.mxu0 %v2475
          %2493 = vmatpush.msra.mxu0 %v2474
          %2494 = vmatpush.msra.mxu0 %v2473
          %2495 = vmatpush.msra.mxu0 %v2472
          %2496 = vmatpush.msra.mxu0 %v2471
          %2497 = vmatpush.msra.mxu0 %v2470
          %2498 = vmatpush.msra.mxu0 %v2469
          %2499 = vmatpush.msra.mxu0 %v2468
          %2500 = vmatmul.f32.gmra.mxu0 %v2467
          %v2501 = vpop.f32.mrf.mxu0
          %v2502 = vadd.f32 0.0, %v2501
          %2503 = vdwg.mxu0
          %2504 = vst.msk [vmem:[#allocation3] sm:$0xff] %vm330, %v2502
        $region104: #{tpu_custom_call.1} parent=43 // pred_fallthru
          _
        %s2505 = sld [smem:[#allocation5 + %s2436]]
        %p2506 = scmp.eq.s32.totalorder %s2505, 1
        // Predicated region
        $region105: #{tpu_custom_call.1} parent=43 // pred_check
          %p2507 = pneg %p2506
        $region106: #{tpu_custom_call.1} parent=43 // pred_check_branch
          %2509 = sbr.rel (%p2507) target = $region108
        $region107: #{tpu_custom_call.1} parent=43 // pred_region
          %s2510 = smul.u32 %s2436, 8
          %s2511 = sld [smem:[#allocation6 + %s2510]]
          %s2512 = scalar_lea.vmem %s2, %s2511
          %v2513 = vld [vmem:[%s2512] sm:$0x1]
          %vm2514 = vcmask 253952
          %2515 = vst.msk [vmem:[#allocation3] sm:$0x1] %vm2514, %v2513
          %s2516 = sadd.s32 %s2510, 1
          %s2517 = sld [smem:[#allocation6 + %s2516]]
          %s2518 = scalar_lea.vmem %s2, %s2517
          %v2519 = vld [vmem:[%s2518] sm:$0x1]
          %2520 = vst.msk [vmem:[#allocation3 + $0x1] sm:$0x1] %vm2514, %v2519
          %s2521 = sadd.s32 %s2510, 2
          %s2522 = sld [smem:[#allocation6 + %s2521]]
          %s2523 = scalar_lea.vmem %s2, %s2522
          %v2524 = vld [vmem:[%s2523] sm:$0x1]
          %2525 = vst.msk [vmem:[#allocation3 + $0x2] sm:$0x1] %vm2514, %v2524
          %s2526 = sadd.s32 %s2510, 3
          %s2527 = sld [smem:[#allocation6 + %s2526]]
          %s2528 = scalar_lea.vmem %s2, %s2527
          %v2529 = vld [vmem:[%s2528] sm:$0x1]
          %2530 = vst.msk [vmem:[#allocation3 + $0x3] sm:$0x1] %vm2514, %v2529
          %s2531 = sadd.s32 %s2510, 4
          %s2532 = sld [smem:[#allocation6 + %s2531]]
          %s2533 = scalar_lea.vmem %s2, %s2532
          %v2534 = vld [vmem:[%s2533] sm:$0x1]
          %2535 = vst.msk [vmem:[#allocation3 + $0x4] sm:$0x1] %vm2514, %v2534
          %s2536 = sadd.s32 %s2510, 5
          %s2537 = sld [smem:[#allocation6 + %s2536]]
          %s2538 = scalar_lea.vmem %s2, %s2537
          %v2539 = vld [vmem:[%s2538] sm:$0x1]
          %2540 = vst.msk [vmem:[#allocation3 + $0x5] sm:$0x1] %vm2514, %v2539
          %s2541 = sadd.s32 %s2510, 6
          %s2542 = sld [smem:[#allocation6 + %s2541]]
          %s2543 = scalar_lea.vmem %s2, %s2542
          %v2544 = vld [vmem:[%s2543] sm:$0x1]
          %2545 = vst.msk [vmem:[#allocation3 + $0x6] sm:$0x1] %vm2514, %v2544
          %s2546 = sadd.s32 %s2510, 7
          %s2547 = sld [smem:[#allocation6 + %s2546]]
          %s2548 = scalar_lea.vmem %s2, %s2547
          %v2549 = vld [vmem:[%s2548] sm:$0x1]
          %2550 = vst.msk [vmem:[#allocation3 + $0x7] sm:$0x1] %vm2514, %v2549
        $region108: #{tpu_custom_call.1} parent=43 // pred_fallthru
          _
        %v2551 = vld [vmem:[#allocation3] sm:$0xff]
        %v2552 = vpack.c.bf16 %v2551, %v2551
        %v2553 = vld [vmem:[#allocation2] sm:$0xff]
        %v2554 = vpack.c.bf16 %v2553, %v2553
        %v2555 = vld [vmem:[%s4] sm:$0xf]
        %v2556 = vld [vmem:[%s4 + $0x4] sm:$0xf]
        %v2557 = vld [vmem:[%s4 + $0x8] sm:$0xf]
        %v2558 = vld [vmem:[%s4 + $0xc] sm:$0xf]
        %v2559 = vld [vmem:[%s5] sm:$0xf]
        %v2560 = vld [vmem:[%s5 + $0x4] sm:$0xf]
        %v2561 = vld [vmem:[%s5 + $0x8] sm:$0xf]
        %v2562 = vld [vmem:[%s5 + $0xc] sm:$0xf]
        %v2567 = vunpack.c.l.b16 %v2559
        %v2568 = vunpack.c.l.b16 %v2560
        %v2569 = vunpack.c.l.b16 %v2561
        %v2570 = vunpack.c.l.b16 %v2562
        %v2571 = vpack.c.b16 %v2568, %v2567
        %v2572 = vpack.c.b16 %v2570, %v2569
        %v2576 = vsel %vm330, %v2554, 0
        %2578 = vmatpush.bf16.msra.mxu0 0
        %2579 = vmatpush.bf16.msra.mxu0 0
        %2580 = vmatpush.bf16.msra.mxu0 0
        %2581 = vmatpush.bf16.msra.mxu0 0
        %2582 = vmatpush.bf16.msra.mxu0 0
        %2583 = vmatpush.bf16.msra.mxu0 0
        %2584 = vmatpush.bf16.msra.mxu0 %v2572
        %2585 = vmatpush.bf16.msra.mxu0 %v2571
        %2586 = vmatmul.bf16.gmra.mxu0 %v2576
        %v2587 = vpop.f32.mrf.mxu0
        %v2588 = vadd.f32 0.0, %v2587
        %v2589 = vpop.f32.mrf.mxu0
        %2590 = vdwg.mxu0
        %v2595 = vunpack.c.l.b16 %v2555
        %v2596 = vunpack.c.l.b16 %v2556
        %v2597 = vunpack.c.l.b16 %v2557
        %v2598 = vunpack.c.l.b16 %v2558
        %v2599 = vpack.c.b16 %v2596, %v2595
        %v2600 = vpack.c.b16 %v2598, %v2597
        %v2604 = vsel %vm330, %v2552, 0
        %2606 = vmatpush.bf16.msra.mxu0 0
        %2607 = vmatpush.bf16.msra.mxu0 0
        %2608 = vmatpush.bf16.msra.mxu0 0
        %2609 = vmatpush.bf16.msra.mxu0 0
        %2610 = vmatpush.bf16.msra.mxu0 0
        %2611 = vmatpush.bf16.msra.mxu0 0
        %2612 = vmatpush.bf16.msra.mxu0 %v2600
        %2613 = vmatpush.bf16.msra.mxu0 %v2599
        %2614 = vmatmul.bf16.gmra.mxu0 %v2604
        %v2615 = vpop.f32.mrf.mxu0
        %v2616 = vadd.f32 %v2588, %v2615
        %v2617 = vpop.f32.mrf.mxu0
        %2618 = vdwg.mxu0
        %v2619 = vld [vmem:[%s6] sm:$0x1]
        %v2621 = vperm.slane %v2619, 0
        %v2623 = vadd.f32 %v2616, %v2621
        %v2624 = vtanh.pop %v2623
        %2625 = vst.msk [vmem:[#allocation2] sm:$0xff] %vm330, %v2624
        %v2626 = vpack.c.bf16 %v2624, %v2624
        %v2627 = vld [vmem:[%s383] sm:$0xff]
        %v2628 = vpack.c.bf16 %v2627, %v2627
        %v2629 = vld [vmem:[%s386] sm:$0xf]
        %v2630 = vld [vmem:[%s386 + $0x4] sm:$0xf]
        %v2631 = vld [vmem:[%s386 + $0x8] sm:$0xf]
        %v2632 = vld [vmem:[%s386 + $0xc] sm:$0xf]
        %v2633 = vld [vmem:[%s391] sm:$0xf]
        %v2634 = vld [vmem:[%s391 + $0x4] sm:$0xf]
        %v2635 = vld [vmem:[%s391 + $0x8] sm:$0xf]
        %v2636 = vld [vmem:[%s391 + $0xc] sm:$0xf]
        %v2641 = vunpack.c.l.b16 %v2633
        %v2642 = vunpack.c.l.b16 %v2634
        %v2643 = vunpack.c.l.b16 %v2635
        %v2644 = vunpack.c.l.b16 %v2636
        %v2645 = vpack.c.b16 %v2642, %v2641
        %v2646 = vpack.c.b16 %v2644, %v2643
        %v2650 = vsel %vm330, %v2628, 0
        %2652 = vmatpush.bf16.msra.mxu0 0
        %2653 = vmatpush.bf16.msra.mxu0 0
        %2654 = vmatpush.bf16.msra.mxu0 0
        %2655 = vmatpush.bf16.msra.mxu0 0
        %2656 = vmatpush.bf16.msra.mxu0 0
        %2657 = vmatpush.bf16.msra.mxu0 0
        %2658 = vmatpush.bf16.msra.mxu0 %v2646
        %2659 = vmatpush.bf16.msra.mxu0 %v2645
        %2660 = vmatmul.bf16.gmra.mxu0 %v2650
        %v2661 = vpop.f32.mrf.mxu0
        %v2662 = vadd.f32 0.0, %v2661
        %v2663 = vpop.f32.mrf.mxu0
        %2664 = vdwg.mxu0
        %v2669 = vunpack.c.l.b16 %v2629
        %v2670 = vunpack.c.l.b16 %v2630
        %v2671 = vunpack.c.l.b16 %v2631
        %v2672 = vunpack.c.l.b16 %v2632
        %v2673 = vpack.c.b16 %v2670, %v2669
        %v2674 = vpack.c.b16 %v2672, %v2671
        %v2678 = vsel %vm330, %v2626, 0
        %2680 = vmatpush.bf16.msra.mxu0 0
        %2681 = vmatpush.bf16.msra.mxu0 0
        %2682 = vmatpush.bf16.msra.mxu0 0
        %2683 = vmatpush.bf16.msra.mxu0 0
        %2684 = vmatpush.bf16.msra.mxu0 0
        %2685 = vmatpush.bf16.msra.mxu0 0
        %2686 = vmatpush.bf16.msra.mxu0 %v2674
        %2687 = vmatpush.bf16.msra.mxu0 %v2673
        %2688 = vmatmul.bf16.gmra.mxu0 %v2678
        %v2689 = vpop.f32.mrf.mxu0
        %v2690 = vadd.f32 %v2662, %v2689
        %v2691 = vpop.f32.mrf.mxu0
        %2692 = vdwg.mxu0
        %v2693 = vld [vmem:[%s452] sm:$0x1]
        %v2695 = vperm.slane %v2693, 0
        %v2697 = vadd.f32 %v2690, %v2695
        %v2698 = vtanh.pop %v2697
        %2699 = vst.msk [vmem:[%s383] sm:$0xff] %vm330, %v2698
        %v2700 = vpack.c.bf16 %v2698, %v2698
        %v2701 = vld [vmem:[%s3] sm:$0xf]
        %v2702 = vld [vmem:[%s3 + $0x4] sm:$0xf]
        %v2703 = vld [vmem:[%s3 + $0x8] sm:$0xf]
        %v2704 = vld [vmem:[%s3 + $0xc] sm:$0xf]
        %v2709 = vunpack.c.l.b16 %v2701
        %v2710 = vunpack.c.l.b16 %v2702
        %v2711 = vunpack.c.l.b16 %v2703
        %v2712 = vunpack.c.l.b16 %v2704
        %v2713 = vpack.c.b16 %v2710, %v2709
        %v2714 = vpack.c.b16 %v2712, %v2711
        %v2718 = vsel %vm330, %v2700, 0
        %2720 = vmatpush.bf16.msra.mxu0 0
        %2721 = vmatpush.bf16.msra.mxu0 0
        %2722 = vmatpush.bf16.msra.mxu0 0
        %2723 = vmatpush.bf16.msra.mxu0 0
        %2724 = vmatpush.bf16.msra.mxu0 0
        %2725 = vmatpush.bf16.msra.mxu0 0
        %2726 = vmatpush.bf16.msra.mxu0 %v2714
        %2727 = vmatpush.bf16.msra.mxu0 %v2713
        %2728 = vmatmul.bf16.gmra.mxu0 %v2718
        %v2729 = vpop.f32.mrf.mxu0
        %v2730 = vadd.f32 0.0, %v2729
        %v2731 = vpop.f32.mrf.mxu0
        %2732 = vdwg.mxu0
        %v2734 = vrot.slane %v2730, 1
        %v2735 = vrot.slane %v2730, 2
        %v2736 = vrot.slane %v2730, 3
        %v2737 = vrot.slane %v2730, 4
        %v2738 = vrot.slane %v2730, 5
        %v2739 = vrot.slane %v2730, 6
        %v2740 = vrot.slane %v2730, 7
        %2748 = vst [vmem:[%s244 + $0x7] sm:$0x1] %v2730
        %2749 = vst [vmem:[%s244 + $0xf] sm:$0x1] %v2734
        %2750 = vst [vmem:[%s244 + $0x17] sm:$0x1] %v2735
        %2751 = vst [vmem:[%s244 + $0x1f] sm:$0x1] %v2736
        %2752 = vst [vmem:[%s244 + $0x27] sm:$0x1] %v2737
        %2753 = vst [vmem:[%s244 + $0x2f] sm:$0x1] %v2738
        %2754 = vst [vmem:[%s244 + $0x37] sm:$0x1] %v2739
        %2755 = vst [vmem:[%s244 + $0x3f] sm:$0x1] %v2740
        %s2756 = sadd.s32 %s259, 8
        %p2757 = scmp.lt.s32.totalorder %s2756, 15
        %s2758 = scalar_select %p2757, %s2756, 15
        %p2759 = scmp.lt.s32.totalorder %s2756, 16
        %s2760 = sld [smem:[#allocation5 + %s2758]]
        %p2761 = scmp.eq.s32.totalorder %s2760, 0
        %p2762 = pnand %p2759, %p2761
        %p2763 = pneg %p2762
        // Predicated region
        $region109: #{tpu_custom_call.1} parent=43 // pred_check
          _
        $region110: #{tpu_custom_call.1} parent=43 // pred_check_branch
          %2765 = sbr.rel (%p2762) target = $region112
        $region111: #{tpu_custom_call.1} parent=43 // pred_region
          %v2766 = vsel %vm258, %v2730, -1e+30
          %2767 = vmax.xlane.f32.xlu0 %v2766
          %v2768 = vpop.xlane.xlu0 %2767
          %vm2769 = vcmp.eq.f32.partialorder %v2766, %v2768
          %v2770 = vsel %vm2769, %v257, 128
          %v2771 = vand.u32 %v2770, 65535
          %v2772 = vshra.s32 %v2770, 16
          %v2773 = vcvt.s32.f32 %v2771
          %v2774 = vcvt.s32.f32 %v2772
          %2775 = vmin.xlane.f32.xlu0 %v2774
          %v2776 = vpop.xlane.xlu0 %2775
          %vm2777 = vcmp.eq.f32.partialorder %v2774, %v2776
          %v2778 = vsel %vm2777, %v2773, inf
          %2779 = vmin.xlane.f32.xlu0 %v2778
          %v2780 = vpop.xlane.xlu0 %2779
          %v2781 = vcvt.f32.s32 %v2780
          %v2782 = vcvt.f32.s32 %v2776
          %v2783 = vshll.u32 %v2782, 16
          %v2784 = vadd.s32 %v2783, %v2781
          %vm2785 = vcmp.eq.s32.totalorder %v257, %v2784
          %v2786 = vsel %vm2785, 1, 0
          %v2787 = vcvt.s32.f32 %v2786
          %v2788 = vld [vmem:[%s2] sm:$0xff]
          %v2789 = vld [vmem:[%s2 + $0x8] sm:$0xff]
          %v2790 = vld [vmem:[%s2 + $0x10] sm:$0xff]
          %v2791 = vld [vmem:[%s2 + $0x18] sm:$0xff]
          %v2792 = vld [vmem:[%s2 + $0x20] sm:$0xff]
          %v2793 = vld [vmem:[%s2 + $0x28] sm:$0xff]
          %v2794 = vld [vmem:[%s2 + $0x30] sm:$0xff]
          %v2795 = vld [vmem:[%s2 + $0x38] sm:$0xff]
          %v2796 = vld [vmem:[%s2 + $0x40] sm:$0xff]
          %v2797 = vld [vmem:[%s2 + $0x48] sm:$0xff]
          %v2798 = vld [vmem:[%s2 + $0x50] sm:$0xff]
          %v2799 = vld [vmem:[%s2 + $0x58] sm:$0xff]
          %v2800 = vld [vmem:[%s2 + $0x60] sm:$0xff]
          %v2801 = vld [vmem:[%s2 + $0x68] sm:$0xff]
          %v2802 = vld [vmem:[%s2 + $0x70] sm:$0xff]
          %v2803 = vld [vmem:[%s2 + $0x78] sm:$0xff]
          %2804 = vmatpush.msra.mxu0 %v2803
          %2805 = vmatpush.msra.mxu0 %v2802
          %2806 = vmatpush.msra.mxu0 %v2801
          %2807 = vmatpush.msra.mxu0 %v2800
          %2808 = vmatpush.msra.mxu0 %v2799
          %2809 = vmatpush.msra.mxu0 %v2798
          %2810 = vmatpush.msra.mxu0 %v2797
          %2811 = vmatpush.msra.mxu0 %v2796
          %2812 = vmatpush.msra.mxu0 %v2795
          %2813 = vmatpush.msra.mxu0 %v2794
          %2814 = vmatpush.msra.mxu0 %v2793
          %2815 = vmatpush.msra.mxu0 %v2792
          %2816 = vmatpush.msra.mxu0 %v2791
          %2817 = vmatpush.msra.mxu0 %v2790
          %2818 = vmatpush.msra.mxu0 %v2789
          %2819 = vmatpush.msra.mxu0 %v2788
          %2820 = vmatmul.f32.gmra.mxu0 %v2787
          %v2821 = vpop.f32.mrf.mxu0
          %v2822 = vadd.f32 0.0, %v2821
          %2823 = vdwg.mxu0
          %2824 = vst.msk [vmem:[#allocation3] sm:$0xff] %vm330, %v2822
        $region112: #{tpu_custom_call.1} parent=43 // pred_fallthru
          _
        %s2825 = sand.u32 %s169, 1
        %s2826 = scalar_lea.sflag [#allocation8], %s2825
        %s2827 = sand.u32 %s169, 1
        %s2828 = smul.addr %s2827, 64
        %s2829 = scalar_lea.vmem [#allocation7], %s2828
        // Predicated region
        $region113: #{tpu_custom_call.1} parent=43 // pred_check
          %p2830 = pneg %p179
        $region114: #{tpu_custom_call.1} parent=43 // pred_check_branch
          %2832 = sbr.rel (%p2830) target = $region116
        $region115: #{tpu_custom_call.1} parent=43 // pred_region
          %2834 = vsyncadd %s2826, 0
          %s2835 = smul.addr %s35, 8
          %s2836 = scalar_lea.hbm %s8, %s2835
          %s2837 = sshll.u32 %s2829, 4
          %s2838 = int_to_ptr.vmem [resolvable:$true] %s2837
          %s2839 = sshll.u32 %s2836, 4
          %s2840 = int_to_ptr.hbm [resolvable:$true] %s2839
          %2845 = dma.vmem_to_hbm [thread:$0]  %s2838, 1024, %s2840, %s2826, 128, 256, 8
        $region116: #{tpu_custom_call.1} parent=43 // pred_fallthru
          _
      $region44: #{tpu_custom_call.1} parent=5 // pred_fallthru
        _
      %p2846 = scmp.le.s32.totalorder 2, %s30
      // Predicated region
      $region117: #{tpu_custom_call.1} parent=5 // pred_check
        %p2847 = pneg %p2846
      $region118: #{tpu_custom_call.1} parent=5 // pred_check_branch
        %2849 = sbr.rel (%p2847) target = $region120
      $region119: #{tpu_custom_call.1} parent=5 // pred_region
        %s2850 = ssub.s32 %s30, 2
        // Predicated region
        $region121: #{tpu_custom_call.1} parent=119 // pred_check
          %p2851 = pneg %p185
        $region122: #{tpu_custom_call.1} parent=119 // pred_check_branch
          %2853 = sbr.rel (%p2851) target = $region124
        $region123: #{tpu_custom_call.1} parent=119 // pred_region
          %s2854 = sand.u32 %s170, 1
          %s2855 = scalar_lea.sflag [#allocation8], %s2854
          %s2856 = sand.u32 %s170, 1
          %s2857 = smul.addr %s2856, 64
          %s2858 = scalar_lea.vmem [#allocation7], %s2857
          %2860 = dma.done %s2855, 1024
        $region124: #{tpu_custom_call.1} parent=119 // pred_fallthru
          _
      $region120: #{tpu_custom_call.1} parent=5 // pred_fallthru
        _
    $region6: #{tpu_custom_call.1} parent=1 // loop_footer
      %s34 = sadd.s32 1, %s30
    $region7: #{tpu_custom_call.1} parent=1 // loop_footer_branch
      %29 = sbr.rel target = $region3
    $region8: #{tpu_custom_call.1} parent=1 // loop_exit
      _
    %2861 = vsyncpa [#allocation8], 1
    %s2862 = scalar_lea.sflag [#allocation8], 1
    %2863 = vsyncpa %s2862, 1

</llo_original>
